<compile_context>
chip_gen: v7x
topology: tpu7x:2x2x1
jax: 0.10.0
libtpu: 0.0.40
codegen_flags: <defaults>
</compile_context>

<pallas_src>
import functools

import jax
import jax.numpy as jnp
from jax.experimental import pallas as pl
from jax.experimental.pallas import tpu as pltpu

BN_EPS = 1e-5


# --------------------------------------------------------------------------------------
# compiler-parameter helpers
# --------------------------------------------------------------------------------------
def _vmem_limit_bytes():
    """Generation-aware scoped-VMEM cap: headroom below physical (64 MiB v7x, 128 MiB v5e/v6e)."""
    try:
        cap = int(pltpu.get_tpu_info().vmem_capacity_bytes)
    except Exception:
        cap = 128 * 1024 * 1024
    return int(min(cap * 3 // 4, 100 * 1024 * 1024))


def _compiler_params(vmem_limit, *sem):
    return pltpu.CompilerParams(dimension_semantics=sem, vmem_limit_bytes=vmem_limit)


# --------------------------------------------------------------------------------------
# 3x3 conv of one [H, W, C] image via a shared VMEM pad scratch
# --------------------------------------------------------------------------------------
def _conv3x3(act, pad_ref, pad, stride, w_ref, ho, wo):
    """act: [H, W, C]; pad_ref: VMEM scratch at least (H+2*pad, W+2*pad, C); w_ref: [9*C, Cout]
    bf16 with rows ordered (ky, kx, cin).  Returns [ho*wo, Cout] f32 (bias not included)."""
    h, w, c = act.shape
    cout = w_ref.shape[-1]
    hp, wp = h + 2 * pad, w + 2 * pad
    zdt = pad_ref.dtype

    # Zero only the border strips (not the whole buffer) and write the interior once.
    if pad > 0:
        pad_ref[0:pad, 0:wp, :] = jnp.zeros((pad, wp, c), zdt)            # top
        pad_ref[pad + h:hp, 0:wp, :] = jnp.zeros((pad, wp, c), zdt)       # bottom
        pad_ref[0:hp, 0:pad, :] = jnp.zeros((hp, pad, c), zdt)            # left
        pad_ref[0:hp, pad + w:wp, :] = jnp.zeros((hp, pad, c), zdt)       # right
    pad_ref[pad:pad + h, pad:pad + w, :] = act.astype(zdt)

    def tap(ky, kx):
        # Slice straight off the Ref (fresh vld, no long-lived padded copy in vregs).
        if stride == 1:
            t = pad_ref[pl.ds(ky, ho), pl.ds(kx, wo), :]
        else:
            t = pad_ref[pl.ds(ky, ho, stride=stride), pl.ds(kx, wo, stride=stride), :]
        return t.reshape(ho * wo, c).astype(jnp.bfloat16)

    if c < 128:                                            # im2col: one MXU pass, K = 9*C
        patches = jnp.concatenate([tap(ky, kx) for ky in range(3) for kx in range(3)],
                                  axis=-1)                 # [ho*wo, 9*C]
        return jnp.dot(patches, w_ref[...], preferred_element_type=jnp.float32)

    # C >= 128: pair taps along K so each MXU pass has K = 2*C (fills 256-deep v6e/v7x MXU).
    idx = [(ky, kx) for ky in range(3) for kx in range(3)]
    acc = jnp.zeros((ho * wo, cout), jnp.float32)
    for i in range(0, 8, 2):
        (ky0, kx0), (ky1, kx1) = idx[i], idx[i + 1]
        lhs = jnp.concatenate([tap(ky0, kx0), tap(ky1, kx1)], axis=-1)    # [M, 2*C]
        acc = acc + jnp.dot(lhs, w_ref[i * c:(i + 2) * c, :],
                            preferred_element_type=jnp.float32)
    ky8, kx8 = idx[8]
    acc = acc + jnp.dot(tap(ky8, kx8), w_ref[8 * c:9 * c, :],
                        preferred_element_type=jnp.float32)
    return acc


# --------------------------------------------------------------------------------------
# pass A: BN1+ReLU -> conv1 (stride, padding) and conv_skip (stride, pad=1);
#         per-image (mean, M2) partial statistics for BN2 / BN_skip (no serial accumulator).
# --------------------------------------------------------------------------------------
def _stage1_kernel(x_ref, bn1_ref, w1_ref, b1_ref, ws_ref, bs_ref,
                   y1_ref, ys_ref, stats_ref, pad_ref, *, stride, padding):
    _, h, w, cin = x_ref.shape
    _, ho, wo, cout = y1_ref.shape

    x = x_ref[0]                                           # [H, W, Cin] f32
    scale1 = bn1_ref[0:1, :].reshape(1, 1, cin)
    shift1 = bn1_ref[1:2, :].reshape(1, 1, cin)
    a1 = jnp.maximum(x * scale1 + shift1, 0.0)

    y1 = _conv3x3(a1, pad_ref, padding, stride, w1_ref, ho, wo) + b1_ref[...]
    ys = _conv3x3(x, pad_ref, 1, stride, ws_ref, ho, wo) + bs_ref[...]

    # Per-image (mean, M2) partials; merged Chan-style in the wrapper (no E[x^2]-E[x]^2).
    inv_cnt = 1.0 / float(ho * wo)

    def moments(v):
        m = jnp.sum(v, axis=0, keepdims=True) * inv_cnt
        m2 = jnp.sum(jnp.square(v - m), axis=0, keepdims=True)
        return m, m2

    m_y1, s_y1 = moments(y1)
    m_ys, s_ys = moments(ys)
    stats_ref[0] = jnp.concatenate([m_y1, s_y1, m_ys, s_ys], axis=0)     # [4, Cout]

    # channels-last (channels on lanes); Cout>=128 keeps these stores lane-dense.
    y1_ref[0] = y1.reshape(ho, wo, cout)
    ys_ref[0] = ys.reshape(ho, wo, cout)


# --------------------------------------------------------------------------------------
# pass B: BN2+ReLU -> conv2 (pad=1), added to BN_skip(skip branch).
# --------------------------------------------------------------------------------------
def _stage2_kernel(y1_ref, ys_ref, bn2_ref, w2_ref, b2_ref, out_ref, pad_ref):
    _, ho, wo, cout = y1_ref.shape

    scale2 = bn2_ref[0:1, :].reshape(1, 1, cout)
    shift2 = bn2_ref[1:2, :].reshape(1, 1, cout)
    scales = bn2_ref[2:3, :].reshape(1, 1, cout)
    shifts = bn2_ref[3:4, :].reshape(1, 1, cout)

    a2 = jnp.maximum(y1_ref[0] * scale2 + shift2, 0.0)

    blk = _conv3x3(a2, pad_ref, 1, 1, w2_ref, ho, wo)      # [Ho*Wo, Cout]
    blk = blk.reshape(ho, wo, cout) + b2_ref[...].reshape(1, 1, cout)

    skip = ys_ref[0] * scales + shifts
    out_ref[0] = blk + skip


# --------------------------------------------------------------------------------------
# wrapper
# --------------------------------------------------------------------------------------
def _merge_bn(mean_i, m2_i, cnt_per):
    """Chan-style merge of per-group (mean, M2) with equal group counts -> (scale, shift)."""
    n_groups = mean_i.shape[0]
    mean = jnp.mean(mean_i, axis=0)
    m2 = jnp.sum(m2_i, axis=0) + cnt_per * jnp.sum(jnp.square(mean_i - mean), axis=0)
    var = jnp.maximum(m2 / (cnt_per * n_groups), 0.0)      # biased batch variance
    inv = jax.lax.rsqrt(var + BN_EPS)
    return inv, -mean * inv


def residual_conv_forward(x_nchw, params, *, stride=1, padding=1):
    """x_nchw: [N, Cin, H, W] -> [N, Cout, H', W'], matching the PyTorch module."""
    x = jnp.transpose(x_nchw, (0, 2, 3, 1)).astype(jnp.float32)   # NHWC, channels on lanes
    n, h, w, cin = x.shape
    cout = params["b1"].shape[-1]

    ho = (h + 2 * padding - 3) // stride + 1
    wo = (w + 2 * padding - 3) // stride + 1
    # conv_skip uses padding=1; its output must line up with conv_block's for the residual add.
    assert ho == (h + 2 - 3) // stride + 1 and wo == (w + 2 - 3) // stride + 1, \
        "conv_block / conv_skip spatial shapes differ for this (stride, padding)"

    vmem_limit = _vmem_limit_bytes()

    # im2col weight layout (rows ordered [ky, kx, cin]), bf16 for the MXU; biases as [1, Cout].
    w1 = params["w1"].reshape(9 * cin, cout).astype(jnp.bfloat16)
    ws = params["ws"].reshape(9 * cin, cout).astype(jnp.bfloat16)
    w2 = params["w2"].reshape(9 * cout, cout).astype(jnp.bfloat16)
    b1 = params["b1"].reshape(1, cout).astype(jnp.float32)
    bs = params["bs"].reshape(1, cout).astype(jnp.float32)
    b2 = params["b2"].reshape(1, cout).astype(jnp.float32)

    # ---- BN1 statistics in plain jnp (tiny channel reduction; saves a kernel launch) ----
    mean1 = jnp.mean(x, axis=(0, 1, 2))
    var1 = jnp.mean(jnp.square(x - mean1), axis=(0, 1, 2))
    inv1 = jax.lax.rsqrt(var1 + BN_EPS)
    bn1 = jnp.stack([inv1, -mean1 * inv1], axis=0)                # [2, Cin]: scale, shift

    # Shared pad scratch for conv1 / conv_skip; bf16 when channels fill the 128 lanes.
    pmax = max(padding, 1)
    pad_a_dtype = jnp.bfloat16 if cin >= 128 else jnp.float32
    pad_b_dtype = jnp.bfloat16 if cout >= 128 else jnp.float32

    # ---- pass A: BN1+ReLU -> conv1 & conv_skip, per-image BN2/BN_skip partial stats -----
    y1, ys, stats = pl.pallas_call(
        functools.partial(_stage1_kernel, stride=stride, padding=padding),
        out_shape=(jax.ShapeDtypeStruct((n, ho, wo, cout), jnp.float32),
                   jax.ShapeDtypeStruct((n, ho, wo, cout), jnp.float32),
                   jax.ShapeDtypeStruct((n, 4, cout), jnp.float32)),
        grid=(n,),
        in_specs=[
            pl.BlockSpec((1, h, w, cin), lambda i: (i, 0, 0, 0)),
            pl.BlockSpec((2, cin), lambda i: (0, 0)),             # resident BN1 scale/shift
            pl.BlockSpec((9 * cin, cout), lambda i: (0, 0)),      # resident weights
            pl.BlockSpec((1, cout), lambda i: (0, 0)),
            pl.BlockSpec((9 * cin, cout), lambda i: (0, 0)),
            pl.BlockSpec((1, cout), lambda i: (0, 0)),
        ],
        out_specs=(
            pl.BlockSpec((1, ho, wo, cout), lambda i: (i, 0, 0, 0)),
            pl.BlockSpec((1, ho, wo, cout), lambda i: (i, 0, 0, 0)),
            pl.BlockSpec((1, 4, cout), lambda i: (i, 0, 0)),      # per-image partial stats
        ),
        scratch_shapes=[
            pltpu.VMEM((h + 2 * pmax, w + 2 * pmax, cin), pad_a_dtype),
        ],
        compiler_params=_compiler_params(vmem_limit, "parallel"),
    )(x, bn1, w1, b1, ws, bs)

    # ---- merge per-image partials -> BN2 / BN_skip (scale, shift) -----------------------
    cnt_per = float(ho * wo)
    inv2, shift2 = _merge_bn(stats[:, 0, :], stats[:, 1, :], cnt_per)
    invs, shifts = _merge_bn(stats[:, 2, :], stats[:, 3, :], cnt_per)
    bn2 = jnp.stack([inv2, shift2, invs, shifts], axis=0)          # [4, Cout]

    # ---- pass B: BN2+ReLU -> conv2, add BN_skip(skip) ------------------------------------
    out = pl.pallas_call(
        _stage2_kernel,
        out_shape=jax.ShapeDtypeStruct((n, ho, wo, cout), jnp.float32),
        grid=(n,),
        in_specs=[
            pl.BlockSpec((1, ho, wo, cout), lambda i: (i, 0, 0, 0)),
            pl.BlockSpec((1, ho, wo, cout), lambda i: (i, 0, 0, 0)),
            pl.BlockSpec((4, cout), lambda i: (0, 0)),
            pl.BlockSpec((9 * cout, cout), lambda i: (0, 0)),
            pl.BlockSpec((1, cout), lambda i: (0, 0)),
        ],
        out_specs=pl.BlockSpec((1, ho, wo, cout), lambda i: (i, 0, 0, 0)),
        scratch_shapes=[pltpu.VMEM((ho + 2, wo + 2, cout), pad_b_dtype)],
        compiler_params=_compiler_params(vmem_limit, "parallel"),
    )(y1, ys, bn2, w2, b2)

    return jnp.transpose(out, (0, 3, 1, 2))                # back to NCHW


# --------------------------------------------------------------------------------------
# parameters & pure-JAX reference
# --------------------------------------------------------------------------------------
def init_params(key, in_dim, out_dim):
    """Synthetic parameters with the module's shapes (conv weights stored HWIO)."""
    ks = jax.random.split(key, 6)

    def w_init(k, shape, fan_in):
        return jax.random.normal(k, shape, jnp.float32) * jnp.sqrt(2.0 / fan_in)

    def b_init(k, shape, fan_in):
        bound = 1.0 / jnp.sqrt(jnp.float32(fan_in))
        return jax.random.uniform(k, shape, jnp.float32, -bound, bound)

    fan1 = in_dim * 9
    fan2 = out_dim * 9
    return {
        "w1": w_init(ks[0], (3, 3, in_dim, out_dim), fan1),
        "b1": b_init(ks[1], (out_dim,), fan1),
        "w2": w_init(ks[2], (3, 3, out_dim, out_dim), fan2),
        "b2": b_init(ks[3], (out_dim,), fan2),
        "ws": w_init(ks[4], (3, 3, in_dim, out_dim), fan1),
        "bs": b_init(ks[5], (out_dim,), fan1),
    }


def residual_conv_reference(x_nchw, params, *, stride=1, padding=1):
    """Pure-JAX reference. Convolutions use the same bf16-operand / f32-accumulate numerics
    as the kernel's MXU path, so the comparison tolerance can stay tight."""
    x = jnp.transpose(x_nchw, (0, 2, 3, 1)).astype(jnp.float32)

    def bn(t):  # training-mode BatchNorm2d, gamma=1, beta=0, biased variance
        mean = jnp.mean(t, axis=(0, 1, 2), keepdims=True)
        var = jnp.mean((t - mean) ** 2, axis=(0, 1, 2), keepdims=True)
        return (t - mean) * jax.lax.rsqrt(var + BN_EPS)

    def conv(t, wname, bname, s, p):
        y = jax.lax.conv_general_dilated(
            t.astype(jnp.bfloat16), params[wname].astype(jnp.bfloat16),
            window_strides=(s, s), padding=[(p, p), (p, p)],
            dimension_numbers=("NHWC", "HWIO", "NHWC"),
            preferred_element_type=jnp.float32)
        return y + params[bname]

    a1 = jnp.maximum(bn(x), 0.0)
    y1 = conv(a1, "w1", "b1", stride, padding)
    a2 = jnp.maximum(bn(y1), 0.0)
    block = conv(a2, "w2", "b2", 1, 1)
    skip = bn(conv(x, "ws", "bs", stride, 1))
    return jnp.transpose(block + skip, (0, 3, 1, 2))


if __name__ == "__main__":
    key = jax.random.PRNGKey(0)
    k_x, k_p = jax.random.split(key)

    # Small demo shapes. Cout=128 keeps channels-last stores/loads lane-dense (full 128 lanes).
    N, CIN, COUT, H, W = 2, 4, 128, 16, 16
    STRIDE, PADDING = 1, 1

    x = jax.random.normal(k_x, (N, CIN, H, W), jnp.float32)
    params = init_params(k_p, CIN, COUT)

    out = jax.block_until_ready(
        residual_conv_forward(x, params, stride=STRIDE, padding=PADDING))
    ref = jax.block_until_ready(
        residual_conv_reference(x, params, stride=STRIDE, padding=PADDING))

    assert out.shape == (N, COUT, H, W), out.shape
    max_err = float(jnp.max(jnp.abs(out - ref)))
    assert max_err < 2e-3, max_err
    print("KERNEL_OK")
</pallas_src>

<mosaic_0001>
module attributes {stable_mosaic.version = 11 : i64} {
  func.func @_stage1_kernel(%arg0: i32, %arg1: memref<1x16x16x4xf32, #tpu.memory_space<vmem>>, %arg2: memref<2x4xf32, #tpu.memory_space<vmem>>, %arg3: memref<36x128xbf16, #tpu.memory_space<vmem>>, %arg4: memref<1x128xf32, #tpu.memory_space<vmem>>, %arg5: memref<36x128xbf16, #tpu.memory_space<vmem>>, %arg6: memref<1x128xf32, #tpu.memory_space<vmem>>, %arg7: memref<1x16x16x128xf32, #tpu.memory_space<vmem>>, %arg8: memref<1x16x16x128xf32, #tpu.memory_space<vmem>>, %arg9: memref<1x4x128xf32, #tpu.memory_space<vmem>>, %arg10: memref<18x18x4xf32, #tpu.memory_space<vmem>>) attributes {dimension_semantics = [#tpu.dimension_semantics<parallel>], iteration_bounds = array<i64: 2>, scalar_prefetch = 0 : i64, scratch_operands = 1 : i64, tpu.core_type = #tpu.core_type<tc>, window_params = [{transform_indices = @transform_0, window_bounds = array<i64: 1, 16, 16, 4>}, {pipeline_mode = #tpu.pipeline_mode<synchronous>, transform_indices = @transform_1, window_bounds = array<i64: 2, 4>}, {pipeline_mode = #tpu.pipeline_mode<synchronous>, transform_indices = @transform_2, window_bounds = array<i64: 36, 128>}, {pipeline_mode = #tpu.pipeline_mode<synchronous>, transform_indices = @transform_3, window_bounds = array<i64: 1, 128>}, {pipeline_mode = #tpu.pipeline_mode<synchronous>, transform_indices = @transform_4, window_bounds = array<i64: 36, 128>}, {pipeline_mode = #tpu.pipeline_mode<synchronous>, transform_indices = @transform_5, window_bounds = array<i64: 1, 128>}, {transform_indices = @transform_6, window_bounds = array<i64: 1, 16, 16, 128>}, {transform_indices = @transform_7, window_bounds = array<i64: 1, 16, 16, 128>}, {transform_indices = @transform_8, window_bounds = array<i64: 1, 4, 128>}]} {
    %c0 = arith.constant 0 : index
    %c0_0 = arith.constant 0 : index
    %c0_1 = arith.constant 0 : index
    %c0_2 = arith.constant 0 : index
    %0 = vector.load %arg1[%c0, %c0_0, %c0_1, %c0_2] : memref<1x16x16x4xf32, #tpu.memory_space<vmem>>, vector<1x16x16x4xf32>
    %1 = vector.shape_cast %0 : vector<1x16x16x4xf32> to vector<16x16x4xf32>
    %c0_3 = arith.constant 0 : index
    %c0_4 = arith.constant 0 : index
    %2 = vector.load %arg2[%c0_3, %c0_4] : memref<2x4xf32, #tpu.memory_space<vmem>>, vector<1x4xf32>
    %3 = vector.shape_cast %2 : vector<1x4xf32> to vector<1x1x4xf32>
    %c1 = arith.constant 1 : index
    %c0_5 = arith.constant 0 : index
    %4 = vector.load %arg2[%c1, %c0_5] : memref<2x4xf32, #tpu.memory_space<vmem>>, vector<1x4xf32>
    %5 = vector.shape_cast %4 : vector<1x4xf32> to vector<1x1x4xf32>
    %6 = vector.broadcast %3 : vector<1x1x4xf32> to vector<16x16x4xf32>
    %7 = arith.mulf %1, %6 : vector<16x16x4xf32>
    %8 = vector.broadcast %5 : vector<1x1x4xf32> to vector<16x16x4xf32>
    %9 = arith.addf %7, %8 : vector<16x16x4xf32>
    %cst = arith.constant 0.000000e+00 : f32
    %10 = vector.broadcast %cst : f32 to vector<16x16x4xf32>
    %11 = arith.maximumf %9, %10 : vector<16x16x4xf32>
    %cst_6 = arith.constant 0.000000e+00 : f32
    %12 = vector.broadcast %cst_6 : f32 to vector<1x18x4xf32>
    %c0_7 = arith.constant 0 : index
    %c0_8 = arith.constant 0 : index
    %c0_9 = arith.constant 0 : index
    %13 = vector.load %arg10[%c0_7, %c0_8, %c0_9] : memref<18x18x4xf32, #tpu.memory_space<vmem>>, vector<1x18x4xf32>
    tpu.vector_store %arg10[%c0_7, %c0_8, %c0_9], %12 {strides = array<i32>} : memref<18x18x4xf32, #tpu.memory_space<vmem>>, vector<1x18x4xf32>,
    %cst_10 = arith.constant 0.000000e+00 : f32
    %14 = vector.broadcast %cst_10 : f32 to vector<1x18x4xf32>
    %c17 = arith.constant 17 : index
    %c0_11 = arith.constant 0 : index
    %c0_12 = arith.constant 0 : index
    %15 = vector.load %arg10[%c17, %c0_11, %c0_12] : memref<18x18x4xf32, #tpu.memory_space<vmem>>, vector<1x18x4xf32>
    tpu.vector_store %arg10[%c17, %c0_11, %c0_12], %14 {strides = array<i32>} : memref<18x18x4xf32, #tpu.memory_space<vmem>>, vector<1x18x4xf32>,
    %cst_13 = arith.constant 0.000000e+00 : f32
    %16 = vector.broadcast %cst_13 : f32 to vector<18x1x4xf32>
    %c0_14 = arith.constant 0 : index
    %c0_15 = arith.constant 0 : index
    %c0_16 = arith.constant 0 : index
    %17 = vector.load %arg10[%c0_14, %c0_15, %c0_16] : memref<18x18x4xf32, #tpu.memory_space<vmem>>, vector<18x1x4xf32>
    tpu.vector_store %arg10[%c0_14, %c0_15, %c0_16], %16 {strides = array<i32>} : memref<18x18x4xf32, #tpu.memory_space<vmem>>, vector<18x1x4xf32>,
    %cst_17 = arith.constant 0.000000e+00 : f32
    %18 = vector.broadcast %cst_17 : f32 to vector<18x1x4xf32>
    %c0_18 = arith.constant 0 : index
    %c17_19 = arith.constant 17 : index
    %c0_20 = arith.constant 0 : index
    %19 = vector.load %arg10[%c0_18, %c17_19, %c0_20] : memref<18x18x4xf32, #tpu.memory_space<vmem>>, vector<18x1x4xf32>
    tpu.vector_store %arg10[%c0_18, %c17_19, %c0_20], %18 {strides = array<i32>} : memref<18x18x4xf32, #tpu.memory_space<vmem>>, vector<18x1x4xf32>,
    %c1_21 = arith.constant 1 : index
    %c1_22 = arith.constant 1 : index
    %c0_23 = arith.constant 0 : index
    %20 = vector.load %arg10[%c1_21, %c1_22, %c0_23] : memref<18x18x4xf32, #tpu.memory_space<vmem>>, vector<16x16x4xf32>
    tpu.vector_store %arg10[%c1_21, %c1_22, %c0_23], %11 {strides = array<i32>} : memref<18x18x4xf32, #tpu.memory_space<vmem>>, vector<16x16x4xf32>,
    %c0_24 = arith.constant 0 : index
    %c0_25 = arith.constant 0 : index
    %c0_26 = arith.constant 0 : index
    %21 = vector.load %arg10[%c0_24, %c0_25, %c0_26] : memref<18x18x4xf32, #tpu.memory_space<vmem>>, vector<16x16x4xf32>
    %22 = vector.shape_cast %21 : vector<16x16x4xf32> to vector<256x4xf32>
    %23 = arith.truncf %22 : vector<256x4xf32> to vector<256x4xbf16>
    %c0_27 = arith.constant 0 : index
    %c1_28 = arith.constant 1 : index
    %c0_29 = arith.constant 0 : index
    %24 = vector.load %arg10[%c0_27, %c1_28, %c0_29] : memref<18x18x4xf32, #tpu.memory_space<vmem>>, vector<16x16x4xf32>
    %25 = vector.shape_cast %24 : vector<16x16x4xf32> to vector<256x4xf32>
    %26 = arith.truncf %25 : vector<256x4xf32> to vector<256x4xbf16>
    %c0_30 = arith.constant 0 : index
    %c2 = arith.constant 2 : index
    %c0_31 = arith.constant 0 : index
    %27 = vector.load %arg10[%c0_30, %c2, %c0_31] : memref<18x18x4xf32, #tpu.memory_space<vmem>>, vector<16x16x4xf32>
    %28 = vector.shape_cast %27 : vector<16x16x4xf32> to vector<256x4xf32>
    %29 = arith.truncf %28 : vector<256x4xf32> to vector<256x4xbf16>
    %c1_32 = arith.constant 1 : index
    %c0_33 = arith.constant 0 : index
    %c0_34 = arith.constant 0 : index
    %30 = vector.load %arg10[%c1_32, %c0_33, %c0_34] : memref<18x18x4xf32, #tpu.memory_space<vmem>>, vector<16x16x4xf32>
    %31 = vector.shape_cast %30 : vector<16x16x4xf32> to vector<256x4xf32>
    %32 = arith.truncf %31 : vector<256x4xf32> to vector<256x4xbf16>
    %c1_35 = arith.constant 1 : index
    %c1_36 = arith.constant 1 : index
    %c0_37 = arith.constant 0 : index
    %33 = vector.load %arg10[%c1_35, %c1_36, %c0_37] : memref<18x18x4xf32, #tpu.memory_space<vmem>>, vector<16x16x4xf32>
    %34 = vector.shape_cast %33 : vector<16x16x4xf32> to vector<256x4xf32>
    %35 = arith.truncf %34 : vector<256x4xf32> to vector<256x4xbf16>
    %c1_38 = arith.constant 1 : index
    %c2_39 = arith.constant 2 : index
    %c0_40 = arith.constant 0 : index
    %36 = vector.load %arg10[%c1_38, %c2_39, %c0_40] : memref<18x18x4xf32, #tpu.memory_space<vmem>>, vector<16x16x4xf32>
    %37 = vector.shape_cast %36 : vector<16x16x4xf32> to vector<256x4xf32>
    %38 = arith.truncf %37 : vector<256x4xf32> to vector<256x4xbf16>
    %c2_41 = arith.constant 2 : index
    %c0_42 = arith.constant 0 : index
    %c0_43 = arith.constant 0 : index
    %39 = vector.load %arg10[%c2_41, %c0_42, %c0_43] : memref<18x18x4xf32, #tpu.memory_space<vmem>>, vector<16x16x4xf32>
    %40 = vector.shape_cast %39 : vector<16x16x4xf32> to vector<256x4xf32>
    %41 = arith.truncf %40 : vector<256x4xf32> to vector<256x4xbf16>
    %c2_44 = arith.constant 2 : index
    %c1_45 = arith.constant 1 : index
    %c0_46 = arith.constant 0 : index
    %42 = vector.load %arg10[%c2_44, %c1_45, %c0_46] : memref<18x18x4xf32, #tpu.memory_space<vmem>>, vector<16x16x4xf32>
    %43 = vector.shape_cast %42 : vector<16x16x4xf32> to vector<256x4xf32>
    %44 = arith.truncf %43 : vector<256x4xf32> to vector<256x4xbf16>
    %c2_47 = arith.constant 2 : index
    %c2_48 = arith.constant 2 : index
    %c0_49 = arith.constant 0 : index
    %45 = vector.load %arg10[%c2_47, %c2_48, %c0_49] : memref<18x18x4xf32, #tpu.memory_space<vmem>>, vector<16x16x4xf32>
    %46 = vector.shape_cast %45 : vector<16x16x4xf32> to vector<256x4xf32>
    %47 = arith.truncf %46 : vector<256x4xf32> to vector<256x4xbf16>
    %48 = tpu.concatenate %23, %26, %29, %32, %35, %38, %41, %44, %47 in 1 : vector<256x4xbf16>, vector<256x4xbf16>, vector<256x4xbf16>, vector<256x4xbf16>, vector<256x4xbf16>, vector<256x4xbf16>, vector<256x4xbf16>, vector<256x4xbf16>, vector<256x4xbf16> -> vector<256x36xbf16>
    %c0_50 = arith.constant 0 : index
    %c0_51 = arith.constant 0 : index
    %49 = vector.load %arg3[%c0_50, %c0_51] : memref<36x128xbf16, #tpu.memory_space<vmem>>, vector<36x128xbf16>
    %cst_52 = arith.constant dense<0.000000e+00> : vector<256x128xf32>
    %50 = tpu.matmul %48, %49, %cst_52 {dimension_numbers = #tpu.dot_dimension_numbers<[1], [0], [0], [1], [0, 0, 1, 1], [], []>} : vector<256x36xbf16>, vector<36x128xbf16>, vector<256x128xf32> -> vector<256x128xf32>
    %c0_53 = arith.constant 0 : index
    %c0_54 = arith.constant 0 : index
    %51 = vector.load %arg4[%c0_53, %c0_54] : memref<1x128xf32, #tpu.memory_space<vmem>>, vector<1x128xf32>
    %52 = vector.broadcast %51 : vector<1x128xf32> to vector<256x128xf32>
    %53 = arith.addf %50, %52 : vector<256x128xf32>
    %cst_55 = arith.constant 0.000000e+00 : f32
    %54 = vector.broadcast %cst_55 : f32 to vector<1x18x4xf32>
    %c0_56 = arith.constant 0 : index
    %c0_57 = arith.constant 0 : index
    %c0_58 = arith.constant 0 : index
    %55 = vector.load %arg10[%c0_56, %c0_57, %c0_58] : memref<18x18x4xf32, #tpu.memory_space<vmem>>, vector<1x18x4xf32>
    tpu.vector_store %arg10[%c0_56, %c0_57, %c0_58], %54 {strides = array<i32>} : memref<18x18x4xf32, #tpu.memory_space<vmem>>, vector<1x18x4xf32>,
    %cst_59 = arith.constant 0.000000e+00 : f32
    %56 = vector.broadcast %cst_59 : f32 to vector<1x18x4xf32>
    %c17_60 = arith.constant 17 : index
    %c0_61 = arith.constant 0 : index
    %c0_62 = arith.constant 0 : index
    %57 = vector.load %arg10[%c17_60, %c0_61, %c0_62] : memref<18x18x4xf32, #tpu.memory_space<vmem>>, vector<1x18x4xf32>
    tpu.vector_store %arg10[%c17_60, %c0_61, %c0_62], %56 {strides = array<i32>} : memref<18x18x4xf32, #tpu.memory_space<vmem>>, vector<1x18x4xf32>,
    %cst_63 = arith.constant 0.000000e+00 : f32
    %58 = vector.broadcast %cst_63 : f32 to vector<18x1x4xf32>
    %c0_64 = arith.constant 0 : index
    %c0_65 = arith.constant 0 : index
    %c0_66 = arith.constant 0 : index
    %59 = vector.load %arg10[%c0_64, %c0_65, %c0_66] : memref<18x18x4xf32, #tpu.memory_space<vmem>>, vector<18x1x4xf32>
    tpu.vector_store %arg10[%c0_64, %c0_65, %c0_66], %58 {strides = array<i32>} : memref<18x18x4xf32, #tpu.memory_space<vmem>>, vector<18x1x4xf32>,
    %cst_67 = arith.constant 0.000000e+00 : f32
    %60 = vector.broadcast %cst_67 : f32 to vector<18x1x4xf32>
    %c0_68 = arith.constant 0 : index
    %c17_69 = arith.constant 17 : index
    %c0_70 = arith.constant 0 : index
    %61 = vector.load %arg10[%c0_68, %c17_69, %c0_70] : memref<18x18x4xf32, #tpu.memory_space<vmem>>, vector<18x1x4xf32>
    tpu.vector_store %arg10[%c0_68, %c17_69, %c0_70], %60 {strides = array<i32>} : memref<18x18x4xf32, #tpu.memory_space<vmem>>, vector<18x1x4xf32>,
    %c1_71 = arith.constant 1 : index
    %c1_72 = arith.constant 1 : index
    %c0_73 = arith.constant 0 : index
    %62 = vector.load %arg10[%c1_71, %c1_72, %c0_73] : memref<18x18x4xf32, #tpu.memory_space<vmem>>, vector<16x16x4xf32>
    tpu.vector_store %arg10[%c1_71, %c1_72, %c0_73], %1 {strides = array<i32>} : memref<18x18x4xf32, #tpu.memory_space<vmem>>, vector<16x16x4xf32>,
    %c0_74 = arith.constant 0 : index
    %c0_75 = arith.constant 0 : index
    %c0_76 = arith.constant 0 : index
    %63 = vector.load %arg10[%c0_74, %c0_75, %c0_76] : memref<18x18x4xf32, #tpu.memory_space<vmem>>, vector<16x16x4xf32>
    %64 = vector.shape_cast %63 : vector<16x16x4xf32> to vector<256x4xf32>
    %65 = arith.truncf %64 : vector<256x4xf32> to vector<256x4xbf16>
    %c0_77 = arith.constant 0 : index
    %c1_78 = arith.constant 1 : index
    %c0_79 = arith.constant 0 : index
    %66 = vector.load %arg10[%c0_77, %c1_78, %c0_79] : memref<18x18x4xf32, #tpu.memory_space<vmem>>, vector<16x16x4xf32>
    %67 = vector.shape_cast %66 : vector<16x16x4xf32> to vector<256x4xf32>
    %68 = arith.truncf %67 : vector<256x4xf32> to vector<256x4xbf16>
    %c0_80 = arith.constant 0 : index
    %c2_81 = arith.constant 2 : index
    %c0_82 = arith.constant 0 : index
    %69 = vector.load %arg10[%c0_80, %c2_81, %c0_82] : memref<18x18x4xf32, #tpu.memory_space<vmem>>, vector<16x16x4xf32>
    %70 = vector.shape_cast %69 : vector<16x16x4xf32> to vector<256x4xf32>
    %71 = arith.truncf %70 : vector<256x4xf32> to vector<256x4xbf16>
    %c1_83 = arith.constant 1 : index
    %c0_84 = arith.constant 0 : index
    %c0_85 = arith.constant 0 : index
    %72 = vector.load %arg10[%c1_83, %c0_84, %c0_85] : memref<18x18x4xf32, #tpu.memory_space<vmem>>, vector<16x16x4xf32>
    %73 = vector.shape_cast %72 : vector<16x16x4xf32> to vector<256x4xf32>
    %74 = arith.truncf %73 : vector<256x4xf32> to vector<256x4xbf16>
    %c1_86 = arith.constant 1 : index
    %c1_87 = arith.constant 1 : index
    %c0_88 = arith.constant 0 : index
    %75 = vector.load %arg10[%c1_86, %c1_87, %c0_88] : memref<18x18x4xf32, #tpu.memory_space<vmem>>, vector<16x16x4xf32>
    %76 = vector.shape_cast %75 : vector<16x16x4xf32> to vector<256x4xf32>
    %77 = arith.truncf %76 : vector<256x4xf32> to vector<256x4xbf16>
    %c1_89 = arith.constant 1 : index
    %c2_90 = arith.constant 2 : index
    %c0_91 = arith.constant 0 : index
    %78 = vector.load %arg10[%c1_89, %c2_90, %c0_91] : memref<18x18x4xf32, #tpu.memory_space<vmem>>, vector<16x16x4xf32>
    %79 = vector.shape_cast %78 : vector<16x16x4xf32> to vector<256x4xf32>
    %80 = arith.truncf %79 : vector<256x4xf32> to vector<256x4xbf16>
    %c2_92 = arith.constant 2 : index
    %c0_93 = arith.constant 0 : index
    %c0_94 = arith.constant 0 : index
    %81 = vector.load %arg10[%c2_92, %c0_93, %c0_94] : memref<18x18x4xf32, #tpu.memory_space<vmem>>, vector<16x16x4xf32>
    %82 = vector.shape_cast %81 : vector<16x16x4xf32> to vector<256x4xf32>
    %83 = arith.truncf %82 : vector<256x4xf32> to vector<256x4xbf16>
    %c2_95 = arith.constant 2 : index
    %c1_96 = arith.constant 1 : index
    %c0_97 = arith.constant 0 : index
    %84 = vector.load %arg10[%c2_95, %c1_96, %c0_97] : memref<18x18x4xf32, #tpu.memory_space<vmem>>, vector<16x16x4xf32>
    %85 = vector.shape_cast %84 : vector<16x16x4xf32> to vector<256x4xf32>
    %86 = arith.truncf %85 : vector<256x4xf32> to vector<256x4xbf16>
    %c2_98 = arith.constant 2 : index
    %c2_99 = arith.constant 2 : index
    %c0_100 = arith.constant 0 : index
    %87 = vector.load %arg10[%c2_98, %c2_99, %c0_100] : memref<18x18x4xf32, #tpu.memory_space<vmem>>, vector<16x16x4xf32>
    %88 = vector.shape_cast %87 : vector<16x16x4xf32> to vector<256x4xf32>
    %89 = arith.truncf %88 : vector<256x4xf32> to vector<256x4xbf16>
    %90 = tpu.concatenate %65, %68, %71, %74, %77, %80, %83, %86, %89 in 1 : vector<256x4xbf16>, vector<256x4xbf16>, vector<256x4xbf16>, vector<256x4xbf16>, vector<256x4xbf16>, vector<256x4xbf16>, vector<256x4xbf16>, vector<256x4xbf16>, vector<256x4xbf16> -> vector<256x36xbf16>
    %c0_101 = arith.constant 0 : index
    %c0_102 = arith.constant 0 : index
    %91 = vector.load %arg5[%c0_101, %c0_102] : memref<36x128xbf16, #tpu.memory_space<vmem>>, vector<36x128xbf16>
    %cst_103 = arith.constant dense<0.000000e+00> : vector<256x128xf32>
    %92 = tpu.matmul %90, %91, %cst_103 {dimension_numbers = #tpu.dot_dimension_numbers<[1], [0], [0], [1], [0, 0, 1, 1], [], []>} : vector<256x36xbf16>, vector<36x128xbf16>, vector<256x128xf32> -> vector<256x128xf32>
    %c0_104 = arith.constant 0 : index
    %c0_105 = arith.constant 0 : index
    %93 = vector.load %arg6[%c0_104, %c0_105] : memref<1x128xf32, #tpu.memory_space<vmem>>, vector<1x128xf32>
    %94 = vector.broadcast %93 : vector<1x128xf32> to vector<256x128xf32>
    %95 = arith.addf %92, %94 : vector<256x128xf32>
    %cst_106 = arith.constant dense<0.000000e+00> : vector<128xf32>
    %96 = vector.multi_reduction <add>, %53, %cst_106 [0] : vector<256x128xf32> to vector<128xf32>
    %97 = vector.shape_cast %96 : vector<128xf32> to vector<1x128xf32>
    %cst_107 = arith.constant 3.906250e-03 : f32
    %98 = vector.broadcast %cst_107 : f32 to vector<1x128xf32>
    %99 = arith.mulf %97, %98 : vector<1x128xf32>
    %100 = vector.broadcast %99 : vector<1x128xf32> to vector<256x128xf32>
    %101 = arith.subf %53, %100 : vector<256x128xf32>
    %102 = arith.mulf %101, %101 : vector<256x128xf32>
    %cst_108 = arith.constant dense<0.000000e+00> : vector<128xf32>
    %103 = vector.multi_reduction <add>, %102, %cst_108 [0] : vector<256x128xf32> to vector<128xf32>
    %104 = vector.shape_cast %103 : vector<128xf32> to vector<1x128xf32>
    %cst_109 = arith.constant dense<0.000000e+00> : vector<128xf32>
    %105 = vector.multi_reduction <add>, %95, %cst_109 [0] : vector<256x128xf32> to vector<128xf32>
    %106 = vector.shape_cast %105 : vector<128xf32> to vector<1x128xf32>
    %cst_110 = arith.constant 3.906250e-03 : f32
    %107 = vector.broadcast %cst_110 : f32 to vector<1x128xf32>
    %108 = arith.mulf %106, %107 : vector<1x128xf32>
    %109 = vector.broadcast %108 : vector<1x128xf32> to vector<256x128xf32>
    %110 = arith.subf %95, %109 : vector<256x128xf32>
    %111 = arith.mulf %110, %110 : vector<256x128xf32>
    %cst_111 = arith.constant dense<0.000000e+00> : vector<128xf32>
    %112 = vector.multi_reduction <add>, %111, %cst_111 [0] : vector<256x128xf32> to vector<128xf32>
    %113 = vector.shape_cast %112 : vector<128xf32> to vector<1x128xf32>
    %114 = tpu.concatenate %99, %104, %108, %113 in 0 : vector<1x128xf32>, vector<1x128xf32>, vector<1x128xf32>, vector<1x128xf32> -> vector<4x128xf32>
    %c0_112 = arith.constant 0 : index
    %c0_113 = arith.constant 0 : index
    %c0_114 = arith.constant 0 : index
    %115 = vector.load %arg9[%c0_112, %c0_113, %c0_114] : memref<1x4x128xf32, #tpu.memory_space<vmem>>, vector<1x4x128xf32>
    %116 = vector.shape_cast %115 : vector<1x4x128xf32> to vector<4x128xf32>
    %117 = vector.shape_cast %114 : vector<4x128xf32> to vector<1x4x128xf32>
    tpu.vector_store %arg9[%c0_112, %c0_113, %c0_114], %117 {strides = array<i32>} : memref<1x4x128xf32, #tpu.memory_space<vmem>>, vector<1x4x128xf32>,
    %118 = vector.shape_cast %53 : vector<256x128xf32> to vector<16x16x128xf32>
    %c0_115 = arith.constant 0 : index
    %c0_116 = arith.constant 0 : index
    %c0_117 = arith.constant 0 : index
    %c0_118 = arith.constant 0 : index
    %119 = vector.load %arg7[%c0_115, %c0_116, %c0_117, %c0_118] : memref<1x16x16x128xf32, #tpu.memory_space<vmem>>, vector<1x16x16x128xf32>
    %120 = vector.shape_cast %119 : vector<1x16x16x128xf32> to vector<16x16x128xf32>
    %121 = vector.shape_cast %118 : vector<16x16x128xf32> to vector<1x16x16x128xf32>
    tpu.vector_store %arg7[%c0_115, %c0_116, %c0_117, %c0_118], %121 {strides = array<i32>} : memref<1x16x16x128xf32, #tpu.memory_space<vmem>>, vector<1x16x16x128xf32>,
    %122 = vector.shape_cast %95 : vector<256x128xf32> to vector<16x16x128xf32>
    %c0_119 = arith.constant 0 : index
    %c0_120 = arith.constant 0 : index
    %c0_121 = arith.constant 0 : index
    %c0_122 = arith.constant 0 : index
    %123 = vector.load %arg8[%c0_119, %c0_120, %c0_121, %c0_122] : memref<1x16x16x128xf32, #tpu.memory_space<vmem>>, vector<1x16x16x128xf32>
    %124 = vector.shape_cast %123 : vector<1x16x16x128xf32> to vector<16x16x128xf32>
    %125 = vector.shape_cast %122 : vector<16x16x128xf32> to vector<1x16x16x128xf32>
    tpu.vector_store %arg8[%c0_119, %c0_120, %c0_121, %c0_122], %125 {strides = array<i32>} : memref<1x16x16x128xf32, #tpu.memory_space<vmem>>, vector<1x16x16x128xf32>,
    return
  }
  func.func @transform_0(%arg0: i32) -> (i32, i32, i32, i32) {
    %c0_i32 = arith.constant 0 : i32
    %c0_i32_0 = arith.constant 0 : i32
    %c0_i32_1 = arith.constant 0 : i32
    %c0_i32_2 = arith.constant 0 : i32
    return %arg0, %c0_i32, %c0_i32_0, %c0_i32_1 : i32, i32, i32, i32
  }
  func.func @transform_1(%arg0: i32) -> (i32, i32) {
    %c0_i32 = arith.constant 0 : i32
    %c0_i32_0 = arith.constant 0 : i32
    %c0_i32_1 = arith.constant 0 : i32
    return %c0_i32, %c0_i32_0 : i32, i32
  }
  func.func @transform_2(%arg0: i32) -> (i32, i32) {
    %c0_i32 = arith.constant 0 : i32
    %c0_i32_0 = arith.constant 0 : i32
    %c0_i32_1 = arith.constant 0 : i32
    return %c0_i32, %c0_i32_0 : i32, i32
  }
  func.func @transform_3(%arg0: i32) -> (i32, i32) {
    %c0_i32 = arith.constant 0 : i32
    %c0_i32_0 = arith.constant 0 : i32
    %c0_i32_1 = arith.constant 0 : i32
    return %c0_i32, %c0_i32_0 : i32, i32
  }
  func.func @transform_4(%arg0: i32) -> (i32, i32) {
    %c0_i32 = arith.constant 0 : i32
    %c0_i32_0 = arith.constant 0 : i32
    %c0_i32_1 = arith.constant 0 : i32
    return %c0_i32, %c0_i32_0 : i32, i32
  }
  func.func @transform_5(%arg0: i32) -> (i32, i32) {
    %c0_i32 = arith.constant 0 : i32
    %c0_i32_0 = arith.constant 0 : i32
    %c0_i32_1 = arith.constant 0 : i32
    return %c0_i32, %c0_i32_0 : i32, i32
  }
  func.func @transform_6(%arg0: i32) -> (i32, i32, i32, i32) {
    %c0_i32 = arith.constant 0 : i32
    %c0_i32_0 = arith.constant 0 : i32
    %c0_i32_1 = arith.constant 0 : i32
    %c0_i32_2 = arith.constant 0 : i32
    return %arg0, %c0_i32, %c0_i32_0, %c0_i32_1 : i32, i32, i32, i32
  }
  func.func @transform_7(%arg0: i32) -> (i32, i32, i32, i32) {
    %c0_i32 = arith.constant 0 : i32
    %c0_i32_0 = arith.constant 0 : i32
    %c0_i32_1 = arith.constant 0 : i32
    %c0_i32_2 = arith.constant 0 : i32
    return %arg0, %c0_i32, %c0_i32_0, %c0_i32_1 : i32, i32, i32, i32
  }
  func.func @transform_8(%arg0: i32) -> (i32, i32, i32) {
    %c0_i32 = arith.constant 0 : i32
    %c0_i32_0 = arith.constant 0 : i32
    %c0_i32_1 = arith.constant 0 : i32
    return %arg0, %c0_i32, %c0_i32_0 : i32, i32, i32
  }
}

</mosaic_0001>

<llo_original>
// kernel: tpu_custom_call.1
$region0: #{tpu_custom_call.1}
  #allocation0 [shape = 'u32[]', space=smem, size = 0x4, offset = 0x4, fixed_abs, tag = 'smem constant byte address 0x4 - core index']
  #allocation1 [shape = 'u32[144,128]{1,0:T(1,128)}', space=vmem, size = 0x12000, scoped, tag = 'internal scratch']
  #allocation2 [shape = 'f32[18,18,4]{2,1,0:T(8,128)}', space=vmem, size = 0x36000, scoped, tag = 'scratch operand']
  %s0 = inlined_call_operand.hbm [shape: f32[2,16,16,4], index: 0, kind: input, shape index: {}]
  %s1 = inlined_call_operand.hbm [shape: f32[2,4], index: 1, kind: input, shape index: {}]
  %s2 = inlined_call_operand.hbm [shape: bf16[36,128], index: 2, kind: input, shape index: {}]
  %s3 = inlined_call_operand.hbm [shape: f32[1,128], index: 3, kind: input, shape index: {}]
  %s4 = inlined_call_operand.hbm [shape: bf16[36,128], index: 4, kind: input, shape index: {}]
  %s5 = inlined_call_operand.hbm [shape: f32[1,128], index: 5, kind: input, shape index: {}]
  %s6 = inlined_call_operand.hbm [shape: f32[2,16,16,128], index: 6, kind: output, shape index: {0}]
  %s7 = inlined_call_operand.hbm [shape: f32[2,16,16,128], index: 7, kind: output, shape index: {1}]
  %s8 = inlined_call_operand.hbm [shape: f32[2,4,128], index: 8, kind: output, shape index: {2}]
  %9 = xla_tuple %s6, %s7, %s8
  %s10 = sld [smem:[#allocation0]]
  $region97: #{tpu_custom_call.1} parent=0
    _
  %s12 = ssub.s32 1, %s10
  %s13 = scalar_select 0, %s12, %s10
  $region1: #{tpu_custom_call.1} parent=0
    #allocation3 [shape = 'u8[262144]{0}', space=vmem, size = 0x40000, scoped, tag = 'input window, operand 0']
    #allocation4 [shape = 's32[2]{0}', space=sflag, size = 0x8, scoped, tag = 'scoped memory for tpu_custom_call.1']
    #allocation5 [shape = 's32[2]{0}', space=sflag, size = 0x8, scoped, tag = 'scoped memory for tpu_custom_call.1']
    #allocation6 [shape = 'u8[1024]{0}', space=vmem, size = 0x400, scoped, tag = 'input window, operand 1, single buffered']
    #allocation7 [shape = 's32[1]{0}', space=sflag, size = 0x4, scoped, tag = 'scoped memory for tpu_custom_call.1']
    #allocation8 [shape = 'u8[10240]{0}', space=vmem, size = 0x2800, scoped, tag = 'input window, operand 2, single buffered']
    #allocation9 [shape = 'u8[512]{0}', space=vmem, size = 0x400, scoped, tag = 'input window, operand 3, single buffered']
    #allocation10 [shape = 's32[1]{0}', space=sflag, size = 0x4, scoped, tag = 'scoped memory for tpu_custom_call.1']
    #allocation11 [shape = 'u8[10240]{0}', space=vmem, size = 0x2800, scoped, tag = 'input window, operand 4, single buffered']
    #allocation12 [shape = 'u8[512]{0}', space=vmem, size = 0x400, scoped, tag = 'input window, operand 5, single buffered']
    #allocation13 [shape = 's32[1]{0}', space=sflag, size = 0x4, scoped, tag = 'scoped memory for tpu_custom_call.1']
    #allocation14 [shape = 'u8[262144]{0}', space=vmem, size = 0x40000, scoped, tag = 'output window, operand 0']
    #allocation15 [shape = 'u8[262144]{0}', space=vmem, size = 0x40000, scoped, tag = 'output window, operand 1']
    #allocation16 [shape = 's32[2]{0}', space=sflag, size = 0x8, scoped, tag = 'scoped memory for tpu_custom_call.1']
    #allocation17 [shape = 'u8[4096]{0}', space=vmem, size = 0x1000, scoped, tag = 'output window, operand 2']
    %14 = vsyncpa [#allocation4], 0
    %s15 = scalar_lea.sflag [#allocation4], 1
    %16 = vsyncpa %s15, 0
    %17 = vsyncpa [#allocation7], 0
    %18 = vsyncpa [#allocation10], 0
    %19 = vsyncpa [#allocation13], 0
    %20 = vsyncpa [#allocation5], 0
    %s21 = scalar_lea.sflag [#allocation5], 1
    %22 = vsyncpa %s21, 0
    %23 = vsyncpa [#allocation16], 0
    %s24 = scalar_lea.sflag [#allocation16], 1
    %25 = vsyncpa %s24, 0
    loop: start=0, step=1, limit=4
    $region2: #{tpu_custom_call.1} parent=1 // loop_pre_header
      _
    $region3: #{tpu_custom_call.1} parent=1 // loop_header
      %s27 = sphi 0, %s31
      %p28 = scmp.ge.s32.totalorder %s27, 4
      %s37 = sphi 0, %s39
      %s40 = sphi 0, %s37
      %s41 = sphi 0, %s40
      %s57 = sphi 0, %s41
      %s61 = sphi 0, %s61
      %s63 = sphi 0, %s61
      %s64 = sphi 0, %s63
      %s78 = sphi 0, %s64
      %s82 = sphi 0, %s82
      %s84 = sphi 0, %s82
      %s85 = sphi 0, %s84
      %s99 = sphi 0, %s85
      %s103 = sphi 0, %s103
      %s105 = sphi 0, %s103
      %s106 = sphi 0, %s105
      %s120 = sphi 0, %s106
      %s124 = sphi 0, %s124
      %s126 = sphi 0, %s124
      %s127 = sphi 0, %s126
      %s141 = sphi 0, %s127
      %s145 = sphi 0, %s145
      %s147 = sphi 0, %s145
      %s148 = sphi 0, %s147
      %s162 = sphi 0, %s148
      %s168 = sphi 0, %s170
      %s171 = sphi 0, %s168
      %s172 = sphi 0, %s171
      %s188 = sphi 0, %s172
      %s194 = sphi 0, %s196
      %s197 = sphi 0, %s194
      %s198 = sphi 0, %s197
      %s214 = sphi 0, %s198
      %s220 = sphi 0, %s222
      %s223 = sphi 0, %s220
      %s224 = sphi 0, %s223
      %s240 = sphi 0, %s224
    $region4: #{tpu_custom_call.1} parent=1 // loop_header_branch
      %30 = sbr.rel (%p28) target = $region8
    $region5: #{tpu_custom_call.1} parent=1 // loop_body
      %s32 = ssub.s32 %s27, 1
      %s33 = ssub.s32 %s27, 2
      %s34 = sadd.s32 %s27, 1
      %s35 = ssub.s32 %s27, %s34
      %p36 = scmp.eq.s32.totalorder %s35, 0
      %s38 = sadd.s32 %s37, 1
      %s39 = scalar_select %p36, %s37, %s38
      %p42 = pneg %p36
      %p43 = scmp.eq.s32.totalorder %s27, 1
      %p44 = por %p42, %p43
      %p45 = scmp.ne.s32.totalorder %s37, %s40
      %p46 = scmp.eq.s32.totalorder %s27, 0
      %p47 = por %p45, %p46
      %p48 = scmp.ne.s32.totalorder %s37, %s40
      %p49 = scmp.eq.s32.totalorder %s32, 1
      %p50 = por %p48, %p49
      %p51 = scmp.ne.s32.totalorder %s40, %s41
      %p52 = scmp.eq.s32.totalorder %s32, 0
      %p53 = por %p51, %p52
      %p54 = scmp.ne.s32.totalorder %s40, %s41
      %p55 = scmp.eq.s32.totalorder %s33, 1
      %p56 = por %p54, %p55
      %p58 = scmp.ne.s32.totalorder %s41, %s57
      %p59 = scmp.eq.s32.totalorder %s33, 0
      %p60 = por %p58, %p59
      %s62 = sadd.s32 %s61, 1
      %p65 = scmp.eq.s32.totalorder %s27, 1
      %p66 = scmp.ne.s32.totalorder %s61, %s63
      %p67 = scmp.eq.s32.totalorder %s27, 0
      %p68 = por %p66, %p67
      %p69 = scmp.ne.s32.totalorder %s61, %s63
      %p70 = scmp.eq.s32.totalorder %s32, 1
      %p71 = por %p69, %p70
      %p72 = scmp.ne.s32.totalorder %s63, %s64
      %p73 = scmp.eq.s32.totalorder %s32, 0
      %p74 = por %p72, %p73
      %p75 = scmp.ne.s32.totalorder %s63, %s64
      %p76 = scmp.eq.s32.totalorder %s33, 1
      %p77 = por %p75, %p76
      %p79 = scmp.ne.s32.totalorder %s64, %s78
      %p80 = scmp.eq.s32.totalorder %s33, 0
      %p81 = por %p79, %p80
      %s83 = sadd.s32 %s82, 1
      %p86 = scmp.eq.s32.totalorder %s27, 1
      %p87 = scmp.ne.s32.totalorder %s82, %s84
      %p88 = scmp.eq.s32.totalorder %s27, 0
      %p89 = por %p87, %p88
      %p90 = scmp.ne.s32.totalorder %s82, %s84
      %p91 = scmp.eq.s32.totalorder %s32, 1
      %p92 = por %p90, %p91
      %p93 = scmp.ne.s32.totalorder %s84, %s85
      %p94 = scmp.eq.s32.totalorder %s32, 0
      %p95 = por %p93, %p94
      %p96 = scmp.ne.s32.totalorder %s84, %s85
      %p97 = scmp.eq.s32.totalorder %s33, 1
      %p98 = por %p96, %p97
      %p100 = scmp.ne.s32.totalorder %s85, %s99
      %p101 = scmp.eq.s32.totalorder %s33, 0
      %p102 = por %p100, %p101
      %s104 = sadd.s32 %s103, 1
      %p107 = scmp.eq.s32.totalorder %s27, 1
      %p108 = scmp.ne.s32.totalorder %s103, %s105
      %p109 = scmp.eq.s32.totalorder %s27, 0
      %p110 = por %p108, %p109
      %p111 = scmp.ne.s32.totalorder %s103, %s105
      %p112 = scmp.eq.s32.totalorder %s32, 1
      %p113 = por %p111, %p112
      %p114 = scmp.ne.s32.totalorder %s105, %s106
      %p115 = scmp.eq.s32.totalorder %s32, 0
      %p116 = por %p114, %p115
      %p117 = scmp.ne.s32.totalorder %s105, %s106
      %p118 = scmp.eq.s32.totalorder %s33, 1
      %p119 = por %p117, %p118
      %p121 = scmp.ne.s32.totalorder %s106, %s120
      %p122 = scmp.eq.s32.totalorder %s33, 0
      %p123 = por %p121, %p122
      %s125 = sadd.s32 %s124, 1
      %p128 = scmp.eq.s32.totalorder %s27, 1
      %p129 = scmp.ne.s32.totalorder %s124, %s126
      %p130 = scmp.eq.s32.totalorder %s27, 0
      %p131 = por %p129, %p130
      %p132 = scmp.ne.s32.totalorder %s124, %s126
      %p133 = scmp.eq.s32.totalorder %s32, 1
      %p134 = por %p132, %p133
      %p135 = scmp.ne.s32.totalorder %s126, %s127
      %p136 = scmp.eq.s32.totalorder %s32, 0
      %p137 = por %p135, %p136
      %p138 = scmp.ne.s32.totalorder %s126, %s127
      %p139 = scmp.eq.s32.totalorder %s33, 1
      %p140 = por %p138, %p139
      %p142 = scmp.ne.s32.totalorder %s127, %s141
      %p143 = scmp.eq.s32.totalorder %s33, 0
      %p144 = por %p142, %p143
      %s146 = sadd.s32 %s145, 1
      %p149 = scmp.eq.s32.totalorder %s27, 1
      %p150 = scmp.ne.s32.totalorder %s145, %s147
      %p151 = scmp.eq.s32.totalorder %s27, 0
      %p152 = por %p150, %p151
      %p153 = scmp.ne.s32.totalorder %s145, %s147
      %p154 = scmp.eq.s32.totalorder %s32, 1
      %p155 = por %p153, %p154
      %p156 = scmp.ne.s32.totalorder %s147, %s148
      %p157 = scmp.eq.s32.totalorder %s32, 0
      %p158 = por %p156, %p157
      %p159 = scmp.ne.s32.totalorder %s147, %s148
      %p160 = scmp.eq.s32.totalorder %s33, 1
      %p161 = por %p159, %p160
      %p163 = scmp.ne.s32.totalorder %s148, %s162
      %p164 = scmp.eq.s32.totalorder %s33, 0
      %p165 = por %p163, %p164
      %s166 = ssub.s32 %s27, %s34
      %p167 = scmp.eq.s32.totalorder %s166, 0
      %s169 = sadd.s32 %s168, 1
      %s170 = scalar_select %p167, %s168, %s169
      %p173 = pneg %p167
      %p174 = scmp.eq.s32.totalorder %s27, 1
      %p175 = por %p173, %p174
      %p176 = scmp.ne.s32.totalorder %s168, %s171
      %p177 = scmp.eq.s32.totalorder %s27, 0
      %p178 = por %p176, %p177
      %p179 = scmp.ne.s32.totalorder %s168, %s171
      %p180 = scmp.eq.s32.totalorder %s32, 1
      %p181 = por %p179, %p180
      %p182 = scmp.ne.s32.totalorder %s171, %s172
      %p183 = scmp.eq.s32.totalorder %s32, 0
      %p184 = por %p182, %p183
      %p185 = scmp.ne.s32.totalorder %s171, %s172
      %p186 = scmp.eq.s32.totalorder %s33, 1
      %p187 = por %p185, %p186
      %p189 = scmp.ne.s32.totalorder %s172, %s188
      %p190 = scmp.eq.s32.totalorder %s33, 0
      %p191 = por %p189, %p190
      %s192 = ssub.s32 %s27, %s34
      %p193 = scmp.eq.s32.totalorder %s192, 0
      %s195 = sadd.s32 %s194, 1
      %s196 = scalar_select %p193, %s194, %s195
      %p199 = pneg %p193
      %p200 = scmp.eq.s32.totalorder %s27, 1
      %p201 = por %p199, %p200
      %p202 = scmp.ne.s32.totalorder %s194, %s197
      %p203 = scmp.eq.s32.totalorder %s27, 0
      %p204 = por %p202, %p203
      %p205 = scmp.ne.s32.totalorder %s194, %s197
      %p206 = scmp.eq.s32.totalorder %s32, 1
      %p207 = por %p205, %p206
      %p208 = scmp.ne.s32.totalorder %s197, %s198
      %p209 = scmp.eq.s32.totalorder %s32, 0
      %p210 = por %p208, %p209
      %p211 = scmp.ne.s32.totalorder %s197, %s198
      %p212 = scmp.eq.s32.totalorder %s33, 1
      %p213 = por %p211, %p212
      %p215 = scmp.ne.s32.totalorder %s198, %s214
      %p216 = scmp.eq.s32.totalorder %s33, 0
      %p217 = por %p215, %p216
      %s218 = ssub.s32 %s27, %s34
      %p219 = scmp.eq.s32.totalorder %s218, 0
      %s221 = sadd.s32 %s220, 1
      %s222 = scalar_select %p219, %s220, %s221
      %p225 = pneg %p219
      %p226 = scmp.eq.s32.totalorder %s27, 1
      %p227 = por %p225, %p226
      %p228 = scmp.ne.s32.totalorder %s220, %s223
      %p229 = scmp.eq.s32.totalorder %s27, 0
      %p230 = por %p228, %p229
      %p231 = scmp.ne.s32.totalorder %s220, %s223
      %p232 = scmp.eq.s32.totalorder %s32, 1
      %p233 = por %p231, %p232
      %p234 = scmp.ne.s32.totalorder %s223, %s224
      %p235 = scmp.eq.s32.totalorder %s32, 0
      %p236 = por %p234, %p235
      %p237 = scmp.ne.s32.totalorder %s223, %s224
      %p238 = scmp.eq.s32.totalorder %s33, 1
      %p239 = por %p237, %p238
      %p241 = scmp.ne.s32.totalorder %s224, %s240
      %p242 = scmp.eq.s32.totalorder %s33, 0
      %p243 = por %p241, %p242
      %p244 = scmp.le.s32.totalorder 1, %s27
      %p245 = scmp.lt.s32.totalorder %s27, 3
      %p246 = pnand %p244, %p245
      %p247 = pneg %p246
      // Predicated region
      $region9: #{tpu_custom_call.1} parent=5 // pred_check
        _
      $region10: #{tpu_custom_call.1} parent=5 // pred_check_branch
        %249 = sbr.rel (%p246) target = $region12
      $region11: #{tpu_custom_call.1} parent=5 // pred_region
        %s250 = ssub.s32 %s27, 1
        // Predicated region
        $region13: #{tpu_custom_call.1} parent=11 // pred_check
          %p251 = pneg %p74
        $region14: #{tpu_custom_call.1} parent=11 // pred_check_branch
          %253 = sbr.rel (%p251) target = $region16
        $region15: #{tpu_custom_call.1} parent=11 // pred_region
          %s255 = ssub.s32 32, 32
          %256 = vsyncadd [#allocation7], %s255
          %s258 = sshll.u32 [#allocation6], 4
          %s259 = int_to_ptr.vmem [resolvable:$true] %s258
          %261 = dma.hbm_to_vmem [thread:$0]  %s1, 32, %s259, [#allocation7]
        $region16: #{tpu_custom_call.1} parent=11 // pred_fallthru
          _
        // Predicated region
        $region17: #{tpu_custom_call.1} parent=11 // pred_check
          %p262 = pneg %p95
        $region18: #{tpu_custom_call.1} parent=11 // pred_check_branch
          %264 = sbr.rel (%p262) target = $region20
        $region19: #{tpu_custom_call.1} parent=11 // pred_region
          %s266 = ssub.s32 320, 320
          %267 = vsyncadd [#allocation7], %s266
          %s268 = sshll.u32 [#allocation8], 4
          %s269 = int_to_ptr.vmem [resolvable:$true] %s268
          %274 = dma.hbm_to_vmem [thread:$0]  %s2, 320, %s269, [#allocation7], 64, 64, 4
        $region20: #{tpu_custom_call.1} parent=11 // pred_fallthru
          _
        // Predicated region
        $region21: #{tpu_custom_call.1} parent=11 // pred_check
          %p275 = pneg %p116
        $region22: #{tpu_custom_call.1} parent=11 // pred_check_branch
          %277 = sbr.rel (%p275) target = $region24
        $region23: #{tpu_custom_call.1} parent=11 // pred_region
          %s279 = ssub.s32 16, 16
          %280 = vsyncadd [#allocation10], %s279
          %s282 = sshll.u32 [#allocation9], 4
          %s283 = int_to_ptr.vmem [resolvable:$true] %s282
          %285 = dma.hbm_to_vmem [thread:$0]  %s3, 16, %s283, [#allocation10]
        $region24: #{tpu_custom_call.1} parent=11 // pred_fallthru
          _
        // Predicated region
        $region25: #{tpu_custom_call.1} parent=11 // pred_check
          %p286 = pneg %p137
        $region26: #{tpu_custom_call.1} parent=11 // pred_check_branch
          %288 = sbr.rel (%p286) target = $region28
        $region27: #{tpu_custom_call.1} parent=11 // pred_region
          %s290 = ssub.s32 320, 320
          %291 = vsyncadd [#allocation10], %s290
          %s292 = sshll.u32 [#allocation11], 4
          %s293 = int_to_ptr.vmem [resolvable:$true] %s292
          %298 = dma.hbm_to_vmem [thread:$0]  %s4, 320, %s293, [#allocation10], 64, 64, 4
        $region28: #{tpu_custom_call.1} parent=11 // pred_fallthru
          _
        // Predicated region
        $region29: #{tpu_custom_call.1} parent=11 // pred_check
          %p299 = pneg %p158
        $region30: #{tpu_custom_call.1} parent=11 // pred_check_branch
          %301 = sbr.rel (%p299) target = $region32
        $region31: #{tpu_custom_call.1} parent=11 // pred_region
          %s303 = ssub.s32 16, 16
          %304 = vsyncadd [#allocation13], %s303
          %s306 = sshll.u32 [#allocation12], 4
          %s307 = int_to_ptr.vmem [resolvable:$true] %s306
          %309 = dma.hbm_to_vmem [thread:$0]  %s5, 16, %s307, [#allocation13]
        $region32: #{tpu_custom_call.1} parent=11 // pred_fallthru
          _
      $region12: #{tpu_custom_call.1} parent=5 // pred_fallthru
        _
      %p310 = scmp.lt.s32.totalorder %s27, 2
      // Predicated region
      $region33: #{tpu_custom_call.1} parent=5 // pred_check
        %p311 = pneg %p310
      $region34: #{tpu_custom_call.1} parent=5 // pred_check_branch
        %313 = sbr.rel (%p311) target = $region36
      $region35: #{tpu_custom_call.1} parent=5 // pred_region
        // Predicated region
        $region37: #{tpu_custom_call.1} parent=35 // pred_check
          %p314 = pneg %p47
        $region38: #{tpu_custom_call.1} parent=35 // pred_check_branch
          %316 = sbr.rel (%p314) target = $region40
        $region39: #{tpu_custom_call.1} parent=35 // pred_region
          %s317 = sand.u32 %s37, 1
          %s318 = scalar_lea.sflag [#allocation4], %s317
          %s319 = sand.u32 %s37, 1
          %s320 = smul.addr %s319, 256
          %s321 = scalar_lea.vmem [#allocation3], %s320
          %s323 = ssub.s32 4096, 4096
          %324 = vsyncadd %s318, %s323
          %s325 = smul.addr %s27, 32
          %s326 = smul.addr %s325, 128
          %s327 = scalar_lea.hbm %s0, %s326
          %s328 = sshll.u32 %s321, 4
          %s329 = int_to_ptr.vmem [resolvable:$true] %s328
          %334 = dma.hbm_to_vmem [thread:$0]  %s327, 4096, %s329, %s318, 128, 128, 8
        $region40: #{tpu_custom_call.1} parent=35 // pred_fallthru
          _
      $region36: #{tpu_custom_call.1} parent=5 // pred_fallthru
        _
      %p335 = scmp.le.s32.totalorder 1, %s27
      %p336 = scmp.lt.s32.totalorder %s27, 3
      %p337 = pnand %p335, %p336
      %p338 = pneg %p337
      // Predicated region
      $region41: #{tpu_custom_call.1} parent=5 // pred_check
        _
      $region42: #{tpu_custom_call.1} parent=5 // pred_check_branch
        %340 = sbr.rel (%p337) target = $region44
      $region43: #{tpu_custom_call.1} parent=5 // pred_region
        %s341 = ssub.s32 %s27, 1
        %s342 = sand.u32 %s40, 1
        %s343 = scalar_lea.sflag [#allocation4], %s342
        %s344 = sand.u32 %s40, 1
        %s345 = smul.addr %s344, 256
        %s346 = scalar_lea.vmem [#allocation3], %s345
        // Predicated region
        $region45: #{tpu_custom_call.1} parent=43 // pred_check
          %p347 = pneg %p53
        $region46: #{tpu_custom_call.1} parent=43 // pred_check_branch
          %349 = sbr.rel (%p347) target = $region48
        $region47: #{tpu_custom_call.1} parent=43 // pred_region
          %350 = dma.done %s343, 4096
        $region48: #{tpu_custom_call.1} parent=43 // pred_fallthru
          _
        // Predicated region
        $region49: #{tpu_custom_call.1} parent=43 // pred_check
          %p351 = pneg %p74
        $region50: #{tpu_custom_call.1} parent=43 // pred_check_branch
          %353 = sbr.rel (%p351) target = $region52
        $region51: #{tpu_custom_call.1} parent=43 // pred_region
          %354 = dma.done [#allocation7], 32
        $region52: #{tpu_custom_call.1} parent=43 // pred_fallthru
          _
        // Predicated region
        $region53: #{tpu_custom_call.1} parent=43 // pred_check
          %p355 = pneg %p95
        $region54: #{tpu_custom_call.1} parent=43 // pred_check_branch
          %357 = sbr.rel (%p355) target = $region56
        $region55: #{tpu_custom_call.1} parent=43 // pred_region
          %358 = dma.done [#allocation7], 320
        $region56: #{tpu_custom_call.1} parent=43 // pred_fallthru
          _
        // Predicated region
        $region57: #{tpu_custom_call.1} parent=43 // pred_check
          %p359 = pneg %p116
        $region58: #{tpu_custom_call.1} parent=43 // pred_check_branch
          %361 = sbr.rel (%p359) target = $region60
        $region59: #{tpu_custom_call.1} parent=43 // pred_region
          %362 = dma.done [#allocation10], 16
        $region60: #{tpu_custom_call.1} parent=43 // pred_fallthru
          _
        // Predicated region
        $region61: #{tpu_custom_call.1} parent=43 // pred_check
          %p363 = pneg %p137
        $region62: #{tpu_custom_call.1} parent=43 // pred_check_branch
          %365 = sbr.rel (%p363) target = $region64
        $region63: #{tpu_custom_call.1} parent=43 // pred_region
          %366 = dma.done [#allocation10], 320
        $region64: #{tpu_custom_call.1} parent=43 // pred_fallthru
          _
        // Predicated region
        $region65: #{tpu_custom_call.1} parent=43 // pred_check
          %p367 = pneg %p158
        $region66: #{tpu_custom_call.1} parent=43 // pred_check_branch
          %369 = sbr.rel (%p367) target = $region68
        $region67: #{tpu_custom_call.1} parent=43 // pred_region
          %370 = dma.done [#allocation13], 16
        $region68: #{tpu_custom_call.1} parent=43 // pred_fallthru
          _
        %s371 = sand.u32 %s40, 1
        %s372 = scalar_lea.sflag [#allocation4], %s371
        %s373 = sand.u32 %s40, 1
        %s374 = smul.addr %s373, 256
        %s375 = scalar_lea.vmem [#allocation3], %s374
        %p376 = pneg %p53
        %p377 = pneg %p50
        %p378 = pneg %p74
        %p379 = pneg %p71
        %p380 = pneg %p95
        %p381 = pneg %p92
        %p382 = pneg %p116
        %p383 = pneg %p113
        %p384 = pneg %p137
        %p385 = pneg %p134
        %p386 = pneg %p158
        %p387 = pneg %p155
        %p388 = pneg %p184
        %p389 = pneg %p181
        %s390 = sand.u32 %s171, 1
        %s391 = scalar_lea.sflag [#allocation5], %s390
        %s392 = sand.u32 %s171, 1
        %s393 = smul.addr %s392, 256
        %s394 = scalar_lea.vmem [#allocation14], %s393
        %p395 = pneg %p210
        %p396 = pneg %p207
        %s397 = sand.u32 %s32, 1
        %s398 = scalar_lea.sflag [#allocation16], %s397
        %s399 = sand.u32 %s197, 1
        %s400 = smul.addr %s399, 256
        %s401 = scalar_lea.vmem [#allocation15], %s400
        %p402 = pneg %p236
        %p403 = pneg %p233
        %s404 = sand.u32 %s32, 1
        %s405 = scalar_lea.sflag [#allocation16], %s404
        %s406 = sand.u32 %s223, 1
        %s407 = smul.addr %s406, 4
        %s408 = scalar_lea.vmem [#allocation17], %s407
        %v410 = vld [vmem:[%s346] sm:$0xff]
        %v411 = vld [vmem:[%s346 + $0x8] sm:$0xff]
        %v412 = vld [vmem:[%s346 + $0x10] sm:$0xff]
        %v413 = vld [vmem:[%s346 + $0x18] sm:$0xff]
        %v414 = vld [vmem:[%s346 + $0x20] sm:$0xff]
        %v415 = vld [vmem:[%s346 + $0x28] sm:$0xff]
        %v416 = vld [vmem:[%s346 + $0x30] sm:$0xff]
        %v417 = vld [vmem:[%s346 + $0x38] sm:$0xff]
        %v418 = vld [vmem:[%s346 + $0x40] sm:$0xff]
        %v419 = vld [vmem:[%s346 + $0x48] sm:$0xff]
        %v420 = vld [vmem:[%s346 + $0x50] sm:$0xff]
        %v421 = vld [vmem:[%s346 + $0x58] sm:$0xff]
        %v422 = vld [vmem:[%s346 + $0x60] sm:$0xff]
        %v423 = vld [vmem:[%s346 + $0x68] sm:$0xff]
        %v424 = vld [vmem:[%s346 + $0x70] sm:$0xff]
        %v425 = vld [vmem:[%s346 + $0x78] sm:$0xff]
        %v426 = vld [vmem:[%s346 + $0x80] sm:$0xff]
        %v427 = vld [vmem:[%s346 + $0x88] sm:$0xff]
        %v428 = vld [vmem:[%s346 + $0x90] sm:$0xff]
        %v429 = vld [vmem:[%s346 + $0x98] sm:$0xff]
        %v430 = vld [vmem:[%s346 + $0xa0] sm:$0xff]
        %v431 = vld [vmem:[%s346 + $0xa8] sm:$0xff]
        %v432 = vld [vmem:[%s346 + $0xb0] sm:$0xff]
        %v433 = vld [vmem:[%s346 + $0xb8] sm:$0xff]
        %v434 = vld [vmem:[%s346 + $0xc0] sm:$0xff]
        %v435 = vld [vmem:[%s346 + $0xc8] sm:$0xff]
        %v436 = vld [vmem:[%s346 + $0xd0] sm:$0xff]
        %v437 = vld [vmem:[%s346 + $0xd8] sm:$0xff]
        %v438 = vld [vmem:[%s346 + $0xe0] sm:$0xff]
        %v439 = vld [vmem:[%s346 + $0xe8] sm:$0xff]
        %v440 = vld [vmem:[%s346 + $0xf0] sm:$0xff]
        %v441 = vld [vmem:[%s346 + $0xf8] sm:$0xff]
        %v442 = vld [vmem:[#allocation6] sm:$0x1]
        %v443 = vld [vmem:[#allocation6 + $0x1] sm:$0x1]
        %v444 = vlaneseq
        %v445 = vshrl.u32 %v444, 7
        %v446 = vsub.s32 0, %v445
        %v447 = vrot.slane %v442, %v446
        %v448 = vmul.f32 %v410, %v447
        %v449 = vmul.f32 %v411, %v447
        %v450 = vmul.f32 %v412, %v447
        %v451 = vmul.f32 %v413, %v447
        %v452 = vmul.f32 %v414, %v447
        %v453 = vmul.f32 %v415, %v447
        %v454 = vmul.f32 %v416, %v447
        %v455 = vmul.f32 %v417, %v447
        %v456 = vmul.f32 %v418, %v447
        %v457 = vmul.f32 %v419, %v447
        %v458 = vmul.f32 %v420, %v447
        %v459 = vmul.f32 %v421, %v447
        %v460 = vmul.f32 %v422, %v447
        %v461 = vmul.f32 %v423, %v447
        %v462 = vmul.f32 %v424, %v447
        %v463 = vmul.f32 %v425, %v447
        %v464 = vmul.f32 %v426, %v447
        %v465 = vmul.f32 %v427, %v447
        %v466 = vmul.f32 %v428, %v447
        %v467 = vmul.f32 %v429, %v447
        %v468 = vmul.f32 %v430, %v447
        %v469 = vmul.f32 %v431, %v447
        %v470 = vmul.f32 %v432, %v447
        %v471 = vmul.f32 %v433, %v447
        %v472 = vmul.f32 %v434, %v447
        %v473 = vmul.f32 %v435, %v447
        %v474 = vmul.f32 %v436, %v447
        %v475 = vmul.f32 %v437, %v447
        %v476 = vmul.f32 %v438, %v447
        %v477 = vmul.f32 %v439, %v447
        %v478 = vmul.f32 %v440, %v447
        %v479 = vmul.f32 %v441, %v447
        %v480 = vlaneseq
        %v481 = vshrl.u32 %v480, 7
        %v482 = vsub.s32 0, %v481
        %v483 = vrot.slane %v443, %v482
        %v484 = vadd.f32 %v448, %v483
        %v485 = vadd.f32 %v449, %v483
        %v486 = vadd.f32 %v450, %v483
        %v487 = vadd.f32 %v451, %v483
        %v488 = vadd.f32 %v452, %v483
        %v489 = vadd.f32 %v453, %v483
        %v490 = vadd.f32 %v454, %v483
        %v491 = vadd.f32 %v455, %v483
        %v492 = vadd.f32 %v456, %v483
        %v493 = vadd.f32 %v457, %v483
        %v494 = vadd.f32 %v458, %v483
        %v495 = vadd.f32 %v459, %v483
        %v496 = vadd.f32 %v460, %v483
        %v497 = vadd.f32 %v461, %v483
        %v498 = vadd.f32 %v462, %v483
        %v499 = vadd.f32 %v463, %v483
        %v500 = vadd.f32 %v464, %v483
        %v501 = vadd.f32 %v465, %v483
        %v502 = vadd.f32 %v466, %v483
        %v503 = vadd.f32 %v467, %v483
        %v504 = vadd.f32 %v468, %v483
        %v505 = vadd.f32 %v469, %v483
        %v506 = vadd.f32 %v470, %v483
        %v507 = vadd.f32 %v471, %v483
        %v508 = vadd.f32 %v472, %v483
        %v509 = vadd.f32 %v473, %v483
        %v510 = vadd.f32 %v474, %v483
        %v511 = vadd.f32 %v475, %v483
        %v512 = vadd.f32 %v476, %v483
        %v513 = vadd.f32 %v477, %v483
        %v514 = vadd.f32 %v478, %v483
        %v515 = vadd.f32 %v479, %v483
        %v516 = vmax.f32 %v484, 0.0
        %v517 = vmax.f32 %v485, 0.0
        %v518 = vmax.f32 %v486, 0.0
        %v519 = vmax.f32 %v487, 0.0
        %v520 = vmax.f32 %v488, 0.0
        %v521 = vmax.f32 %v489, 0.0
        %v522 = vmax.f32 %v490, 0.0
        %v523 = vmax.f32 %v491, 0.0
        %v524 = vmax.f32 %v492, 0.0
        %v525 = vmax.f32 %v493, 0.0
        %v526 = vmax.f32 %v494, 0.0
        %v527 = vmax.f32 %v495, 0.0
        %v528 = vmax.f32 %v496, 0.0
        %v529 = vmax.f32 %v497, 0.0
        %v530 = vmax.f32 %v498, 0.0
        %v531 = vmax.f32 %v499, 0.0
        %v532 = vmax.f32 %v500, 0.0
        %v533 = vmax.f32 %v501, 0.0
        %v534 = vmax.f32 %v502, 0.0
        %v535 = vmax.f32 %v503, 0.0
        %v536 = vmax.f32 %v504, 0.0
        %v537 = vmax.f32 %v505, 0.0
        %v538 = vmax.f32 %v506, 0.0
        %v539 = vmax.f32 %v507, 0.0
        %v540 = vmax.f32 %v508, 0.0
        %v541 = vmax.f32 %v509, 0.0
        %v542 = vmax.f32 %v510, 0.0
        %v543 = vmax.f32 %v511, 0.0
        %v544 = vmax.f32 %v512, 0.0
        %v545 = vmax.f32 %v513, 0.0
        %v546 = vmax.f32 %v514, 0.0
        %v547 = vmax.f32 %v515, 0.0
        %vm548 = vcmask 31744
        %549 = vst.msk [vmem:[#allocation2] sm:$0xff] %vm548, 0.0
        %550 = vst.msk [vmem:[#allocation2 + $0x8] sm:$0xff] %vm548, 0.0
        %vm551 = vcmask 25600
        %552 = vst.msk [vmem:[#allocation2 + $0x10] sm:$0x3] %vm551, 0.0
        %s553 = scalar_lea.vmem [#allocation2], 408
        %554 = vst.msk [vmem:[%s553] sm:$0xff] %vm548, 0.0
        %555 = vst.msk [vmem:[%s553 + $0x8] sm:$0xff] %vm548, 0.0
        %556 = vst.msk [vmem:[%s553 + $0x10] sm:$0x3] %vm551, 0.0
        %vm557 = vcmask 24576
        %558 = vst.msk [vmem:[#allocation2] sm:$0x1] %vm557, 0.0
        %559 = vst.msk [vmem:[#allocation2 + $0x18] sm:$0x1] %vm557, 0.0
        %560 = vst.msk [vmem:[#allocation2 + $0x30] sm:$0x1] %vm557, 0.0
        %561 = vst.msk [vmem:[#allocation2 + $0x48] sm:$0x1] %vm557, 0.0
        %562 = vst.msk [vmem:[#allocation2 + $0x60] sm:$0x1] %vm557, 0.0
        %563 = vst.msk [vmem:[#allocation2 + $0x78] sm:$0x1] %vm557, 0.0
        %564 = vst.msk [vmem:[#allocation2 + $0x90] sm:$0x1] %vm557, 0.0
        %565 = vst.msk [vmem:[#allocation2 + $0xa8] sm:$0x1] %vm557, 0.0
        %566 = vst.msk [vmem:[#allocation2 + $0xc0] sm:$0x1] %vm557, 0.0
        %567 = vst.msk [vmem:[#allocation2 + $0xd8] sm:$0x1] %vm557, 0.0
        %568 = vst.msk [vmem:[#allocation2 + $0xf0] sm:$0x1] %vm557, 0.0
        %569 = vst.msk [vmem:[#allocation2 + $0x108] sm:$0x1] %vm557, 0.0
        %570 = vst.msk [vmem:[#allocation2 + $0x120] sm:$0x1] %vm557, 0.0
        %571 = vst.msk [vmem:[#allocation2 + $0x138] sm:$0x1] %vm557, 0.0
        %572 = vst.msk [vmem:[#allocation2 + $0x150] sm:$0x1] %vm557, 0.0
        %573 = vst.msk [vmem:[#allocation2 + $0x168] sm:$0x1] %vm557, 0.0
        %574 = vst.msk [vmem:[#allocation2 + $0x180] sm:$0x1] %vm557, 0.0
        %575 = vst.msk [vmem:[#allocation2 + $0x198] sm:$0x1] %vm557, 0.0
        %576 = vst.msk [vmem:[#allocation2 + $0x11] sm:$0x1] %vm557, 0.0
        %577 = vst.msk [vmem:[#allocation2 + $0x29] sm:$0x1] %vm557, 0.0
        %578 = vst.msk [vmem:[#allocation2 + $0x41] sm:$0x1] %vm557, 0.0
        %579 = vst.msk [vmem:[#allocation2 + $0x59] sm:$0x1] %vm557, 0.0
        %580 = vst.msk [vmem:[#allocation2 + $0x71] sm:$0x1] %vm557, 0.0
        %581 = vst.msk [vmem:[#allocation2 + $0x89] sm:$0x1] %vm557, 0.0
        %582 = vst.msk [vmem:[#allocation2 + $0xa1] sm:$0x1] %vm557, 0.0
        %583 = vst.msk [vmem:[#allocation2 + $0xb9] sm:$0x1] %vm557, 0.0
        %584 = vst.msk [vmem:[#allocation2 + $0xd1] sm:$0x1] %vm557, 0.0
        %585 = vst.msk [vmem:[#allocation2 + $0xe9] sm:$0x1] %vm557, 0.0
        %586 = vst.msk [vmem:[#allocation2 + $0x101] sm:$0x1] %vm557, 0.0
        %587 = vst.msk [vmem:[#allocation2 + $0x119] sm:$0x1] %vm557, 0.0
        %588 = vst.msk [vmem:[#allocation2 + $0x131] sm:$0x1] %vm557, 0.0
        %589 = vst.msk [vmem:[#allocation2 + $0x149] sm:$0x1] %vm557, 0.0
        %590 = vst.msk [vmem:[#allocation2 + $0x161] sm:$0x1] %vm557, 0.0
        %591 = vst.msk [vmem:[#allocation2 + $0x179] sm:$0x1] %vm557, 0.0
        %592 = vst.msk [vmem:[#allocation2 + $0x191] sm:$0x1] %vm557, 0.0
        %593 = vst.msk [vmem:[#allocation2 + $0x1a9] sm:$0x1] %vm557, 0.0
        %s594 = scalar_lea.vmem [#allocation2], 24
        %595 = vst.msk [vmem:[%s594 + $0x1] sm:$0xff] %vm548, %v516
        %596 = vst.msk [vmem:[%s594 + $0x9] sm:$0xff] %vm548, %v517
        %597 = vst.msk [vmem:[%s594 + $0x19] sm:$0xff] %vm548, %v518
        %598 = vst.msk [vmem:[%s594 + $0x21] sm:$0xff] %vm548, %v519
        %599 = vst.msk [vmem:[%s594 + $0x31] sm:$0xff] %vm548, %v520
        %600 = vst.msk [vmem:[%s594 + $0x39] sm:$0xff] %vm548, %v521
        %601 = vst.msk [vmem:[%s594 + $0x49] sm:$0xff] %vm548, %v522
        %602 = vst.msk [vmem:[%s594 + $0x51] sm:$0xff] %vm548, %v523
        %603 = vst.msk [vmem:[%s594 + $0x61] sm:$0xff] %vm548, %v524
        %604 = vst.msk [vmem:[%s594 + $0x69] sm:$0xff] %vm548, %v525
        %605 = vst.msk [vmem:[%s594 + $0x79] sm:$0xff] %vm548, %v526
        %606 = vst.msk [vmem:[%s594 + $0x81] sm:$0xff] %vm548, %v527
        %607 = vst.msk [vmem:[%s594 + $0x91] sm:$0xff] %vm548, %v528
        %608 = vst.msk [vmem:[%s594 + $0x99] sm:$0xff] %vm548, %v529
        %609 = vst.msk [vmem:[%s594 + $0xa9] sm:$0xff] %vm548, %v530
        %610 = vst.msk [vmem:[%s594 + $0xb1] sm:$0xff] %vm548, %v531
        %611 = vst.msk [vmem:[%s594 + $0xc1] sm:$0xff] %vm548, %v532
        %612 = vst.msk [vmem:[%s594 + $0xc9] sm:$0xff] %vm548, %v533
        %613 = vst.msk [vmem:[%s594 + $0xd9] sm:$0xff] %vm548, %v534
        %614 = vst.msk [vmem:[%s594 + $0xe1] sm:$0xff] %vm548, %v535
        %615 = vst.msk [vmem:[%s594 + $0xf1] sm:$0xff] %vm548, %v536
        %616 = vst.msk [vmem:[%s594 + $0xf9] sm:$0xff] %vm548, %v537
        %617 = vst.msk [vmem:[%s594 + $0x109] sm:$0xff] %vm548, %v538
        %618 = vst.msk [vmem:[%s594 + $0x111] sm:$0xff] %vm548, %v539
        %619 = vst.msk [vmem:[%s594 + $0x121] sm:$0xff] %vm548, %v540
        %620 = vst.msk [vmem:[%s594 + $0x129] sm:$0xff] %vm548, %v541
        %621 = vst.msk [vmem:[%s594 + $0x139] sm:$0xff] %vm548, %v542
        %622 = vst.msk [vmem:[%s594 + $0x141] sm:$0xff] %vm548, %v543
        %623 = vst.msk [vmem:[%s594 + $0x151] sm:$0xff] %vm548, %v544
        %624 = vst.msk [vmem:[%s594 + $0x159] sm:$0xff] %vm548, %v545
        %625 = vst.msk [vmem:[%s594 + $0x169] sm:$0xff] %vm548, %v546
        %626 = vst.msk [vmem:[%s594 + $0x171] sm:$0xff] %vm548, %v547
        %v627 = vld [vmem:[#allocation2] sm:$0xff]
        %v628 = vld [vmem:[#allocation2 + $0x8] sm:$0xff]
        %v629 = vld [vmem:[#allocation2 + $0x18] sm:$0xff]
        %v630 = vld [vmem:[#allocation2 + $0x20] sm:$0xff]
        %v631 = vld [vmem:[#allocation2 + $0x30] sm:$0xff]
        %v632 = vld [vmem:[#allocation2 + $0x38] sm:$0xff]
        %v633 = vld [vmem:[#allocation2 + $0x48] sm:$0xff]
        %v634 = vld [vmem:[#allocation2 + $0x50] sm:$0xff]
        %v635 = vld [vmem:[#allocation2 + $0x60] sm:$0xff]
        %v636 = vld [vmem:[#allocation2 + $0x68] sm:$0xff]
        %v637 = vld [vmem:[#allocation2 + $0x78] sm:$0xff]
        %v638 = vld [vmem:[#allocation2 + $0x80] sm:$0xff]
        %v639 = vld [vmem:[#allocation2 + $0x90] sm:$0xff]
        %v640 = vld [vmem:[#allocation2 + $0x98] sm:$0xff]
        %v641 = vld [vmem:[#allocation2 + $0xa8] sm:$0xff]
        %v642 = vld [vmem:[#allocation2 + $0xb0] sm:$0xff]
        %v643 = vld [vmem:[#allocation2 + $0xc0] sm:$0xff]
        %v644 = vld [vmem:[#allocation2 + $0xc8] sm:$0xff]
        %v645 = vld [vmem:[#allocation2 + $0xd8] sm:$0xff]
        %v646 = vld [vmem:[#allocation2 + $0xe0] sm:$0xff]
        %v647 = vld [vmem:[#allocation2 + $0xf0] sm:$0xff]
        %v648 = vld [vmem:[#allocation2 + $0xf8] sm:$0xff]
        %v649 = vld [vmem:[#allocation2 + $0x108] sm:$0xff]
        %v650 = vld [vmem:[#allocation2 + $0x110] sm:$0xff]
        %v651 = vld [vmem:[#allocation2 + $0x120] sm:$0xff]
        %v652 = vld [vmem:[#allocation2 + $0x128] sm:$0xff]
        %v653 = vld [vmem:[#allocation2 + $0x138] sm:$0xff]
        %v654 = vld [vmem:[#allocation2 + $0x140] sm:$0xff]
        %v655 = vld [vmem:[#allocation2 + $0x150] sm:$0xff]
        %v656 = vld [vmem:[#allocation2 + $0x158] sm:$0xff]
        %v657 = vld [vmem:[#allocation2 + $0x168] sm:$0xff]
        %v658 = vld [vmem:[#allocation2 + $0x170] sm:$0xff]
        %v659 = vpack.c.bf16 %v628, %v627
        %v660 = vpack.c.bf16 %v630, %v629
        %v661 = vpack.c.bf16 %v632, %v631
        %v662 = vpack.c.bf16 %v634, %v633
        %v663 = vpack.c.bf16 %v636, %v635
        %v664 = vpack.c.bf16 %v638, %v637
        %v665 = vpack.c.bf16 %v640, %v639
        %v666 = vpack.c.bf16 %v642, %v641
        %v667 = vpack.c.bf16 %v644, %v643
        %v668 = vpack.c.bf16 %v646, %v645
        %v669 = vpack.c.bf16 %v648, %v647
        %v670 = vpack.c.bf16 %v650, %v649
        %v671 = vpack.c.bf16 %v652, %v651
        %v672 = vpack.c.bf16 %v654, %v653
        %v673 = vpack.c.bf16 %v656, %v655
        %v674 = vpack.c.bf16 %v658, %v657
        %v675 = vld [vmem:[#allocation2 + $0x1] sm:$0xff]
        %v676 = vld [vmem:[#allocation2 + $0x9] sm:$0xff]
        %v677 = vld [vmem:[#allocation2 + $0x19] sm:$0xff]
        %v678 = vld [vmem:[#allocation2 + $0x21] sm:$0xff]
        %v679 = vld [vmem:[#allocation2 + $0x31] sm:$0xff]
        %v680 = vld [vmem:[#allocation2 + $0x39] sm:$0xff]
        %v681 = vld [vmem:[#allocation2 + $0x49] sm:$0xff]
        %v682 = vld [vmem:[#allocation2 + $0x51] sm:$0xff]
        %v683 = vld [vmem:[#allocation2 + $0x61] sm:$0xff]
        %v684 = vld [vmem:[#allocation2 + $0x69] sm:$0xff]
        %v685 = vld [vmem:[#allocation2 + $0x79] sm:$0xff]
        %v686 = vld [vmem:[#allocation2 + $0x81] sm:$0xff]
        %v687 = vld [vmem:[#allocation2 + $0x91] sm:$0xff]
        %v688 = vld [vmem:[#allocation2 + $0x99] sm:$0xff]
        %v689 = vld [vmem:[#allocation2 + $0xa9] sm:$0xff]
        %v690 = vld [vmem:[#allocation2 + $0xb1] sm:$0xff]
        %v691 = vld [vmem:[#allocation2 + $0xc1] sm:$0xff]
        %v692 = vld [vmem:[#allocation2 + $0xc9] sm:$0xff]
        %v693 = vld [vmem:[#allocation2 + $0xd9] sm:$0xff]
        %v694 = vld [vmem:[#allocation2 + $0xe1] sm:$0xff]
        %v695 = vld [vmem:[#allocation2 + $0xf1] sm:$0xff]
        %v696 = vld [vmem:[#allocation2 + $0xf9] sm:$0xff]
        %v697 = vld [vmem:[#allocation2 + $0x109] sm:$0xff]
        %v698 = vld [vmem:[#allocation2 + $0x111] sm:$0xff]
        %v699 = vld [vmem:[#allocation2 + $0x121] sm:$0xff]
        %v700 = vld [vmem:[#allocation2 + $0x129] sm:$0xff]
        %v701 = vld [vmem:[#allocation2 + $0x139] sm:$0xff]
        %v702 = vld [vmem:[#allocation2 + $0x141] sm:$0xff]
        %v703 = vld [vmem:[#allocation2 + $0x151] sm:$0xff]
        %v704 = vld [vmem:[#allocation2 + $0x159] sm:$0xff]
        %v705 = vld [vmem:[#allocation2 + $0x169] sm:$0xff]
        %v706 = vld [vmem:[#allocation2 + $0x171] sm:$0xff]
        %v707 = vpack.c.bf16 %v676, %v675
        %v708 = vpack.c.bf16 %v678, %v677
        %v709 = vpack.c.bf16 %v680, %v679
        %v710 = vpack.c.bf16 %v682, %v681
        %v711 = vpack.c.bf16 %v684, %v683
        %v712 = vpack.c.bf16 %v686, %v685
        %v713 = vpack.c.bf16 %v688, %v687
        %v714 = vpack.c.bf16 %v690, %v689
        %v715 = vpack.c.bf16 %v692, %v691
        %v716 = vpack.c.bf16 %v694, %v693
        %v717 = vpack.c.bf16 %v696, %v695
        %v718 = vpack.c.bf16 %v698, %v697
        %v719 = vpack.c.bf16 %v700, %v699
        %v720 = vpack.c.bf16 %v702, %v701
        %v721 = vpack.c.bf16 %v704, %v703
        %v722 = vpack.c.bf16 %v706, %v705
        %v723 = vld [vmem:[#allocation2 + $0x2] sm:$0xff]
        %v724 = vld [vmem:[#allocation2 + $0xa] sm:$0xff]
        %v725 = vld [vmem:[#allocation2 + $0x1a] sm:$0xff]
        %v726 = vld [vmem:[#allocation2 + $0x22] sm:$0xff]
        %v727 = vld [vmem:[#allocation2 + $0x32] sm:$0xff]
        %v728 = vld [vmem:[#allocation2 + $0x3a] sm:$0xff]
        %v729 = vld [vmem:[#allocation2 + $0x4a] sm:$0xff]
        %v730 = vld [vmem:[#allocation2 + $0x52] sm:$0xff]
        %v731 = vld [vmem:[#allocation2 + $0x62] sm:$0xff]
        %v732 = vld [vmem:[#allocation2 + $0x6a] sm:$0xff]
        %v733 = vld [vmem:[#allocation2 + $0x7a] sm:$0xff]
        %v734 = vld [vmem:[#allocation2 + $0x82] sm:$0xff]
        %v735 = vld [vmem:[#allocation2 + $0x92] sm:$0xff]
        %v736 = vld [vmem:[#allocation2 + $0x9a] sm:$0xff]
        %v737 = vld [vmem:[#allocation2 + $0xaa] sm:$0xff]
        %v738 = vld [vmem:[#allocation2 + $0xb2] sm:$0xff]
        %v739 = vld [vmem:[#allocation2 + $0xc2] sm:$0xff]
        %v740 = vld [vmem:[#allocation2 + $0xca] sm:$0xff]
        %v741 = vld [vmem:[#allocation2 + $0xda] sm:$0xff]
        %v742 = vld [vmem:[#allocation2 + $0xe2] sm:$0xff]
        %v743 = vld [vmem:[#allocation2 + $0xf2] sm:$0xff]
        %v744 = vld [vmem:[#allocation2 + $0xfa] sm:$0xff]
        %v745 = vld [vmem:[#allocation2 + $0x10a] sm:$0xff]
        %v746 = vld [vmem:[#allocation2 + $0x112] sm:$0xff]
        %v747 = vld [vmem:[#allocation2 + $0x122] sm:$0xff]
        %v748 = vld [vmem:[#allocation2 + $0x12a] sm:$0xff]
        %v749 = vld [vmem:[#allocation2 + $0x13a] sm:$0xff]
        %v750 = vld [vmem:[#allocation2 + $0x142] sm:$0xff]
        %v751 = vld [vmem:[#allocation2 + $0x152] sm:$0xff]
        %v752 = vld [vmem:[#allocation2 + $0x15a] sm:$0xff]
        %v753 = vld [vmem:[#allocation2 + $0x16a] sm:$0xff]
        %v754 = vld [vmem:[#allocation2 + $0x172] sm:$0xff]
        %v755 = vpack.c.bf16 %v724, %v723
        %v756 = vpack.c.bf16 %v726, %v725
        %v757 = vpack.c.bf16 %v728, %v727
        %v758 = vpack.c.bf16 %v730, %v729
        %v759 = vpack.c.bf16 %v732, %v731
        %v760 = vpack.c.bf16 %v734, %v733
        %v761 = vpack.c.bf16 %v736, %v735
        %v762 = vpack.c.bf16 %v738, %v737
        %v763 = vpack.c.bf16 %v740, %v739
        %v764 = vpack.c.bf16 %v742, %v741
        %v765 = vpack.c.bf16 %v744, %v743
        %v766 = vpack.c.bf16 %v746, %v745
        %v767 = vpack.c.bf16 %v748, %v747
        %v768 = vpack.c.bf16 %v750, %v749
        %v769 = vpack.c.bf16 %v752, %v751
        %v770 = vpack.c.bf16 %v754, %v753
        %v771 = vld [vmem:[%s594] sm:$0xff]
        %v772 = vld [vmem:[%s594 + $0x8] sm:$0xff]
        %v773 = vld [vmem:[%s594 + $0x18] sm:$0xff]
        %v774 = vld [vmem:[%s594 + $0x20] sm:$0xff]
        %v775 = vld [vmem:[%s594 + $0x30] sm:$0xff]
        %v776 = vld [vmem:[%s594 + $0x38] sm:$0xff]
        %v777 = vld [vmem:[%s594 + $0x48] sm:$0xff]
        %v778 = vld [vmem:[%s594 + $0x50] sm:$0xff]
        %v779 = vld [vmem:[%s594 + $0x60] sm:$0xff]
        %v780 = vld [vmem:[%s594 + $0x68] sm:$0xff]
        %v781 = vld [vmem:[%s594 + $0x78] sm:$0xff]
        %v782 = vld [vmem:[%s594 + $0x80] sm:$0xff]
        %v783 = vld [vmem:[%s594 + $0x90] sm:$0xff]
        %v784 = vld [vmem:[%s594 + $0x98] sm:$0xff]
        %v785 = vld [vmem:[%s594 + $0xa8] sm:$0xff]
        %v786 = vld [vmem:[%s594 + $0xb0] sm:$0xff]
        %v787 = vld [vmem:[%s594 + $0xc0] sm:$0xff]
        %v788 = vld [vmem:[%s594 + $0xc8] sm:$0xff]
        %v789 = vld [vmem:[%s594 + $0xd8] sm:$0xff]
        %v790 = vld [vmem:[%s594 + $0xe0] sm:$0xff]
        %v791 = vld [vmem:[%s594 + $0xf0] sm:$0xff]
        %v792 = vld [vmem:[%s594 + $0xf8] sm:$0xff]
        %v793 = vld [vmem:[%s594 + $0x108] sm:$0xff]
        %v794 = vld [vmem:[%s594 + $0x110] sm:$0xff]
        %v795 = vld [vmem:[%s594 + $0x120] sm:$0xff]
        %v796 = vld [vmem:[%s594 + $0x128] sm:$0xff]
        %v797 = vld [vmem:[%s594 + $0x138] sm:$0xff]
        %v798 = vld [vmem:[%s594 + $0x140] sm:$0xff]
        %v799 = vld [vmem:[%s594 + $0x150] sm:$0xff]
        %v800 = vld [vmem:[%s594 + $0x158] sm:$0xff]
        %v801 = vld [vmem:[%s594 + $0x168] sm:$0xff]
        %v802 = vld [vmem:[%s594 + $0x170] sm:$0xff]
        %v803 = vpack.c.bf16 %v772, %v771
        %v804 = vpack.c.bf16 %v774, %v773
        %v805 = vpack.c.bf16 %v776, %v775
        %v806 = vpack.c.bf16 %v778, %v777
        %v807 = vpack.c.bf16 %v780, %v779
        %v808 = vpack.c.bf16 %v782, %v781
        %v809 = vpack.c.bf16 %v784, %v783
        %v810 = vpack.c.bf16 %v786, %v785
        %v811 = vpack.c.bf16 %v788, %v787
        %v812 = vpack.c.bf16 %v790, %v789
        %v813 = vpack.c.bf16 %v792, %v791
        %v814 = vpack.c.bf16 %v794, %v793
        %v815 = vpack.c.bf16 %v796, %v795
        %v816 = vpack.c.bf16 %v798, %v797
        %v817 = vpack.c.bf16 %v800, %v799
        %v818 = vpack.c.bf16 %v802, %v801
        %v819 = vld [vmem:[%s594 + $0x1] sm:$0xff]
        %v820 = vld [vmem:[%s594 + $0x9] sm:$0xff]
        %v821 = vld [vmem:[%s594 + $0x19] sm:$0xff]
        %v822 = vld [vmem:[%s594 + $0x21] sm:$0xff]
        %v823 = vld [vmem:[%s594 + $0x31] sm:$0xff]
        %v824 = vld [vmem:[%s594 + $0x39] sm:$0xff]
        %v825 = vld [vmem:[%s594 + $0x49] sm:$0xff]
        %v826 = vld [vmem:[%s594 + $0x51] sm:$0xff]
        %v827 = vld [vmem:[%s594 + $0x61] sm:$0xff]
        %v828 = vld [vmem:[%s594 + $0x69] sm:$0xff]
        %v829 = vld [vmem:[%s594 + $0x79] sm:$0xff]
        %v830 = vld [vmem:[%s594 + $0x81] sm:$0xff]
        %v831 = vld [vmem:[%s594 + $0x91] sm:$0xff]
        %v832 = vld [vmem:[%s594 + $0x99] sm:$0xff]
        %v833 = vld [vmem:[%s594 + $0xa9] sm:$0xff]
        %v834 = vld [vmem:[%s594 + $0xb1] sm:$0xff]
        %v835 = vld [vmem:[%s594 + $0xc1] sm:$0xff]
        %v836 = vld [vmem:[%s594 + $0xc9] sm:$0xff]
        %v837 = vld [vmem:[%s594 + $0xd9] sm:$0xff]
        %v838 = vld [vmem:[%s594 + $0xe1] sm:$0xff]
        %v839 = vld [vmem:[%s594 + $0xf1] sm:$0xff]
        %v840 = vld [vmem:[%s594 + $0xf9] sm:$0xff]
        %v841 = vld [vmem:[%s594 + $0x109] sm:$0xff]
        %v842 = vld [vmem:[%s594 + $0x111] sm:$0xff]
        %v843 = vld [vmem:[%s594 + $0x121] sm:$0xff]
        %v844 = vld [vmem:[%s594 + $0x129] sm:$0xff]
        %v845 = vld [vmem:[%s594 + $0x139] sm:$0xff]
        %v846 = vld [vmem:[%s594 + $0x141] sm:$0xff]
        %v847 = vld [vmem:[%s594 + $0x151] sm:$0xff]
        %v848 = vld [vmem:[%s594 + $0x159] sm:$0xff]
        %v849 = vld [vmem:[%s594 + $0x169] sm:$0xff]
        %v850 = vld [vmem:[%s594 + $0x171] sm:$0xff]
        %v851 = vpack.c.bf16 %v820, %v819
        %v852 = vpack.c.bf16 %v822, %v821
        %v853 = vpack.c.bf16 %v824, %v823
        %v854 = vpack.c.bf16 %v826, %v825
        %v855 = vpack.c.bf16 %v828, %v827
        %v856 = vpack.c.bf16 %v830, %v829
        %v857 = vpack.c.bf16 %v832, %v831
        %v858 = vpack.c.bf16 %v834, %v833
        %v859 = vpack.c.bf16 %v836, %v835
        %v860 = vpack.c.bf16 %v838, %v837
        %v861 = vpack.c.bf16 %v840, %v839
        %v862 = vpack.c.bf16 %v842, %v841
        %v863 = vpack.c.bf16 %v844, %v843
        %v864 = vpack.c.bf16 %v846, %v845
        %v865 = vpack.c.bf16 %v848, %v847
        %v866 = vpack.c.bf16 %v850, %v849
        %v867 = vld [vmem:[%s594 + $0x2] sm:$0xff]
        %v868 = vld [vmem:[%s594 + $0xa] sm:$0xff]
        %v869 = vld [vmem:[%s594 + $0x1a] sm:$0xff]
        %v870 = vld [vmem:[%s594 + $0x22] sm:$0xff]
        %v871 = vld [vmem:[%s594 + $0x32] sm:$0xff]
        %v872 = vld [vmem:[%s594 + $0x3a] sm:$0xff]
        %v873 = vld [vmem:[%s594 + $0x4a] sm:$0xff]
        %v874 = vld [vmem:[%s594 + $0x52] sm:$0xff]
        %v875 = vld [vmem:[%s594 + $0x62] sm:$0xff]
        %v876 = vld [vmem:[%s594 + $0x6a] sm:$0xff]
        %v877 = vld [vmem:[%s594 + $0x7a] sm:$0xff]
        %v878 = vld [vmem:[%s594 + $0x82] sm:$0xff]
        %v879 = vld [vmem:[%s594 + $0x92] sm:$0xff]
        %v880 = vld [vmem:[%s594 + $0x9a] sm:$0xff]
        %v881 = vld [vmem:[%s594 + $0xaa] sm:$0xff]
        %v882 = vld [vmem:[%s594 + $0xb2] sm:$0xff]
        %v883 = vld [vmem:[%s594 + $0xc2] sm:$0xff]
        %v884 = vld [vmem:[%s594 + $0xca] sm:$0xff]
        %v885 = vld [vmem:[%s594 + $0xda] sm:$0xff]
        %v886 = vld [vmem:[%s594 + $0xe2] sm:$0xff]
        %v887 = vld [vmem:[%s594 + $0xf2] sm:$0xff]
        %v888 = vld [vmem:[%s594 + $0xfa] sm:$0xff]
        %v889 = vld [vmem:[%s594 + $0x10a] sm:$0xff]
        %v890 = vld [vmem:[%s594 + $0x112] sm:$0xff]
        %v891 = vld [vmem:[%s594 + $0x122] sm:$0xff]
        %v892 = vld [vmem:[%s594 + $0x12a] sm:$0xff]
        %v893 = vld [vmem:[%s594 + $0x13a] sm:$0xff]
        %v894 = vld [vmem:[%s594 + $0x142] sm:$0xff]
        %v895 = vld [vmem:[%s594 + $0x152] sm:$0xff]
        %v896 = vld [vmem:[%s594 + $0x15a] sm:$0xff]
        %v897 = vld [vmem:[%s594 + $0x16a] sm:$0xff]
        %v898 = vld [vmem:[%s594 + $0x172] sm:$0xff]
        %v899 = vpack.c.bf16 %v868, %v867
        %v900 = vpack.c.bf16 %v870, %v869
        %v901 = vpack.c.bf16 %v872, %v871
        %v902 = vpack.c.bf16 %v874, %v873
        %v903 = vpack.c.bf16 %v876, %v875
        %v904 = vpack.c.bf16 %v878, %v877
        %v905 = vpack.c.bf16 %v880, %v879
        %v906 = vpack.c.bf16 %v882, %v881
        %v907 = vpack.c.bf16 %v884, %v883
        %v908 = vpack.c.bf16 %v886, %v885
        %v909 = vpack.c.bf16 %v888, %v887
        %v910 = vpack.c.bf16 %v890, %v889
        %v911 = vpack.c.bf16 %v892, %v891
        %v912 = vpack.c.bf16 %v894, %v893
        %v913 = vpack.c.bf16 %v896, %v895
        %v914 = vpack.c.bf16 %v898, %v897
        %s915 = scalar_lea.vmem [#allocation2], 48
        %v916 = vld [vmem:[%s915] sm:$0xff]
        %v917 = vld [vmem:[%s915 + $0x8] sm:$0xff]
        %v918 = vld [vmem:[%s915 + $0x18] sm:$0xff]
        %v919 = vld [vmem:[%s915 + $0x20] sm:$0xff]
        %v920 = vld [vmem:[%s915 + $0x30] sm:$0xff]
        %v921 = vld [vmem:[%s915 + $0x38] sm:$0xff]
        %v922 = vld [vmem:[%s915 + $0x48] sm:$0xff]
        %v923 = vld [vmem:[%s915 + $0x50] sm:$0xff]
        %v924 = vld [vmem:[%s915 + $0x60] sm:$0xff]
        %v925 = vld [vmem:[%s915 + $0x68] sm:$0xff]
        %v926 = vld [vmem:[%s915 + $0x78] sm:$0xff]
        %v927 = vld [vmem:[%s915 + $0x80] sm:$0xff]
        %v928 = vld [vmem:[%s915 + $0x90] sm:$0xff]
        %v929 = vld [vmem:[%s915 + $0x98] sm:$0xff]
        %v930 = vld [vmem:[%s915 + $0xa8] sm:$0xff]
        %v931 = vld [vmem:[%s915 + $0xb0] sm:$0xff]
        %v932 = vld [vmem:[%s915 + $0xc0] sm:$0xff]
        %v933 = vld [vmem:[%s915 + $0xc8] sm:$0xff]
        %v934 = vld [vmem:[%s915 + $0xd8] sm:$0xff]
        %v935 = vld [vmem:[%s915 + $0xe0] sm:$0xff]
        %v936 = vld [vmem:[%s915 + $0xf0] sm:$0xff]
        %v937 = vld [vmem:[%s915 + $0xf8] sm:$0xff]
        %v938 = vld [vmem:[%s915 + $0x108] sm:$0xff]
        %v939 = vld [vmem:[%s915 + $0x110] sm:$0xff]
        %v940 = vld [vmem:[%s915 + $0x120] sm:$0xff]
        %v941 = vld [vmem:[%s915 + $0x128] sm:$0xff]
        %v942 = vld [vmem:[%s915 + $0x138] sm:$0xff]
        %v943 = vld [vmem:[%s915 + $0x140] sm:$0xff]
        %v944 = vld [vmem:[%s915 + $0x150] sm:$0xff]
        %v945 = vld [vmem:[%s915 + $0x158] sm:$0xff]
        %v946 = vld [vmem:[%s915 + $0x168] sm:$0xff]
        %v947 = vld [vmem:[%s915 + $0x170] sm:$0xff]
        %v948 = vpack.c.bf16 %v917, %v916
        %v949 = vpack.c.bf16 %v919, %v918
        %v950 = vpack.c.bf16 %v921, %v920
        %v951 = vpack.c.bf16 %v923, %v922
        %v952 = vpack.c.bf16 %v925, %v924
        %v953 = vpack.c.bf16 %v927, %v926
        %v954 = vpack.c.bf16 %v929, %v928
        %v955 = vpack.c.bf16 %v931, %v930
        %v956 = vpack.c.bf16 %v933, %v932
        %v957 = vpack.c.bf16 %v935, %v934
        %v958 = vpack.c.bf16 %v937, %v936
        %v959 = vpack.c.bf16 %v939, %v938
        %v960 = vpack.c.bf16 %v941, %v940
        %v961 = vpack.c.bf16 %v943, %v942
        %v962 = vpack.c.bf16 %v945, %v944
        %v963 = vpack.c.bf16 %v947, %v946
        %v964 = vld [vmem:[%s915 + $0x1] sm:$0xff]
        %v965 = vld [vmem:[%s915 + $0x9] sm:$0xff]
        %v966 = vld [vmem:[%s915 + $0x19] sm:$0xff]
        %v967 = vld [vmem:[%s915 + $0x21] sm:$0xff]
        %v968 = vld [vmem:[%s915 + $0x31] sm:$0xff]
        %v969 = vld [vmem:[%s915 + $0x39] sm:$0xff]
        %v970 = vld [vmem:[%s915 + $0x49] sm:$0xff]
        %v971 = vld [vmem:[%s915 + $0x51] sm:$0xff]
        %v972 = vld [vmem:[%s915 + $0x61] sm:$0xff]
        %v973 = vld [vmem:[%s915 + $0x69] sm:$0xff]
        %v974 = vld [vmem:[%s915 + $0x79] sm:$0xff]
        %v975 = vld [vmem:[%s915 + $0x81] sm:$0xff]
        %v976 = vld [vmem:[%s915 + $0x91] sm:$0xff]
        %v977 = vld [vmem:[%s915 + $0x99] sm:$0xff]
        %v978 = vld [vmem:[%s915 + $0xa9] sm:$0xff]
        %v979 = vld [vmem:[%s915 + $0xb1] sm:$0xff]
        %v980 = vld [vmem:[%s915 + $0xc1] sm:$0xff]
        %v981 = vld [vmem:[%s915 + $0xc9] sm:$0xff]
        %v982 = vld [vmem:[%s915 + $0xd9] sm:$0xff]
        %v983 = vld [vmem:[%s915 + $0xe1] sm:$0xff]
        %v984 = vld [vmem:[%s915 + $0xf1] sm:$0xff]
        %v985 = vld [vmem:[%s915 + $0xf9] sm:$0xff]
        %v986 = vld [vmem:[%s915 + $0x109] sm:$0xff]
        %v987 = vld [vmem:[%s915 + $0x111] sm:$0xff]
        %v988 = vld [vmem:[%s915 + $0x121] sm:$0xff]
        %v989 = vld [vmem:[%s915 + $0x129] sm:$0xff]
        %v990 = vld [vmem:[%s915 + $0x139] sm:$0xff]
        %v991 = vld [vmem:[%s915 + $0x141] sm:$0xff]
        %v992 = vld [vmem:[%s915 + $0x151] sm:$0xff]
        %v993 = vld [vmem:[%s915 + $0x159] sm:$0xff]
        %v994 = vld [vmem:[%s915 + $0x169] sm:$0xff]
        %v995 = vld [vmem:[%s915 + $0x171] sm:$0xff]
        %v996 = vpack.c.bf16 %v965, %v964
        %v997 = vpack.c.bf16 %v967, %v966
        %v998 = vpack.c.bf16 %v969, %v968
        %v999 = vpack.c.bf16 %v971, %v970
        %v1000 = vpack.c.bf16 %v973, %v972
        %v1001 = vpack.c.bf16 %v975, %v974
        %v1002 = vpack.c.bf16 %v977, %v976
        %v1003 = vpack.c.bf16 %v979, %v978
        %v1004 = vpack.c.bf16 %v981, %v980
        %v1005 = vpack.c.bf16 %v983, %v982
        %v1006 = vpack.c.bf16 %v985, %v984
        %v1007 = vpack.c.bf16 %v987, %v986
        %v1008 = vpack.c.bf16 %v989, %v988
        %v1009 = vpack.c.bf16 %v991, %v990
        %v1010 = vpack.c.bf16 %v993, %v992
        %v1011 = vpack.c.bf16 %v995, %v994
        %v1012 = vld [vmem:[%s915 + $0x2] sm:$0xff]
        %v1013 = vld [vmem:[%s915 + $0xa] sm:$0xff]
        %v1014 = vld [vmem:[%s915 + $0x1a] sm:$0xff]
        %v1015 = vld [vmem:[%s915 + $0x22] sm:$0xff]
        %v1016 = vld [vmem:[%s915 + $0x32] sm:$0xff]
        %v1017 = vld [vmem:[%s915 + $0x3a] sm:$0xff]
        %v1018 = vld [vmem:[%s915 + $0x4a] sm:$0xff]
        %v1019 = vld [vmem:[%s915 + $0x52] sm:$0xff]
        %v1020 = vld [vmem:[%s915 + $0x62] sm:$0xff]
        %v1021 = vld [vmem:[%s915 + $0x6a] sm:$0xff]
        %v1022 = vld [vmem:[%s915 + $0x7a] sm:$0xff]
        %v1023 = vld [vmem:[%s915 + $0x82] sm:$0xff]
        %v1024 = vld [vmem:[%s915 + $0x92] sm:$0xff]
        %v1025 = vld [vmem:[%s915 + $0x9a] sm:$0xff]
        %v1026 = vld [vmem:[%s915 + $0xaa] sm:$0xff]
        %v1027 = vld [vmem:[%s915 + $0xb2] sm:$0xff]
        %v1028 = vld [vmem:[%s915 + $0xc2] sm:$0xff]
        %v1029 = vld [vmem:[%s915 + $0xca] sm:$0xff]
        %v1030 = vld [vmem:[%s915 + $0xda] sm:$0xff]
        %v1031 = vld [vmem:[%s915 + $0xe2] sm:$0xff]
        %v1032 = vld [vmem:[%s915 + $0xf2] sm:$0xff]
        %v1033 = vld [vmem:[%s915 + $0xfa] sm:$0xff]
        %v1034 = vld [vmem:[%s915 + $0x10a] sm:$0xff]
        %v1035 = vld [vmem:[%s915 + $0x112] sm:$0xff]
        %v1036 = vld [vmem:[%s915 + $0x122] sm:$0xff]
        %v1037 = vld [vmem:[%s915 + $0x12a] sm:$0xff]
        %v1038 = vld [vmem:[%s915 + $0x13a] sm:$0xff]
        %v1039 = vld [vmem:[%s915 + $0x142] sm:$0xff]
        %v1040 = vld [vmem:[%s915 + $0x152] sm:$0xff]
        %v1041 = vld [vmem:[%s915 + $0x15a] sm:$0xff]
        %v1042 = vld [vmem:[%s915 + $0x16a] sm:$0xff]
        %v1043 = vld [vmem:[%s915 + $0x172] sm:$0xff]
        %v1044 = vpack.c.bf16 %v1013, %v1012
        %v1045 = vpack.c.bf16 %v1015, %v1014
        %v1046 = vpack.c.bf16 %v1017, %v1016
        %v1047 = vpack.c.bf16 %v1019, %v1018
        %v1048 = vpack.c.bf16 %v1021, %v1020
        %v1049 = vpack.c.bf16 %v1023, %v1022
        %v1050 = vpack.c.bf16 %v1025, %v1024
        %v1051 = vpack.c.bf16 %v1027, %v1026
        %v1052 = vpack.c.bf16 %v1029, %v1028
        %v1053 = vpack.c.bf16 %v1031, %v1030
        %v1054 = vpack.c.bf16 %v1033, %v1032
        %v1055 = vpack.c.bf16 %v1035, %v1034
        %v1056 = vpack.c.bf16 %v1037, %v1036
        %v1057 = vpack.c.bf16 %v1039, %v1038
        %v1058 = vpack.c.bf16 %v1041, %v1040
        %v1059 = vpack.c.bf16 %v1043, %v1042
        %1076 = vrot.lane.b32.xlu0 %v707, 4
        %v1077 = vpop.permute.xlu0 %1076
        %1078 = vrot.lane.b32.xlu0 %v708, 4
        %v1079 = vpop.permute.xlu0 %1078
        %1080 = vrot.lane.b32.xlu0 %v709, 4
        %v1081 = vpop.permute.xlu0 %1080
        %1082 = vrot.lane.b32.xlu0 %v710, 4
        %v1083 = vpop.permute.xlu0 %1082
        %1084 = vrot.lane.b32.xlu0 %v711, 4
        %v1085 = vpop.permute.xlu0 %1084
        %1086 = vrot.lane.b32.xlu0 %v712, 4
        %v1087 = vpop.permute.xlu0 %1086
        %1088 = vrot.lane.b32.xlu0 %v713, 4
        %v1089 = vpop.permute.xlu0 %1088
        %1090 = vrot.lane.b32.xlu0 %v714, 4
        %v1091 = vpop.permute.xlu0 %1090
        %1092 = vrot.lane.b32.xlu0 %v715, 4
        %v1093 = vpop.permute.xlu0 %1092
        %1094 = vrot.lane.b32.xlu0 %v716, 4
        %v1095 = vpop.permute.xlu0 %1094
        %1096 = vrot.lane.b32.xlu0 %v717, 4
        %v1097 = vpop.permute.xlu0 %1096
        %1098 = vrot.lane.b32.xlu0 %v718, 4
        %v1099 = vpop.permute.xlu0 %1098
        %1100 = vrot.lane.b32.xlu0 %v719, 4
        %v1101 = vpop.permute.xlu0 %1100
        %1102 = vrot.lane.b32.xlu0 %v720, 4
        %v1103 = vpop.permute.xlu0 %1102
        %1104 = vrot.lane.b32.xlu0 %v721, 4
        %v1105 = vpop.permute.xlu0 %1104
        %1106 = vrot.lane.b32.xlu0 %v722, 4
        %v1107 = vpop.permute.xlu0 %1106
        %1124 = vrot.lane.b32.xlu0 %v755, 8
        %v1125 = vpop.permute.xlu0 %1124
        %1126 = vrot.lane.b32.xlu0 %v756, 8
        %v1127 = vpop.permute.xlu0 %1126
        %1128 = vrot.lane.b32.xlu0 %v757, 8
        %v1129 = vpop.permute.xlu0 %1128
        %1130 = vrot.lane.b32.xlu0 %v758, 8
        %v1131 = vpop.permute.xlu0 %1130
        %1132 = vrot.lane.b32.xlu0 %v759, 8
        %v1133 = vpop.permute.xlu0 %1132
        %1134 = vrot.lane.b32.xlu0 %v760, 8
        %v1135 = vpop.permute.xlu0 %1134
        %1136 = vrot.lane.b32.xlu0 %v761, 8
        %v1137 = vpop.permute.xlu0 %1136
        %1138 = vrot.lane.b32.xlu0 %v762, 8
        %v1139 = vpop.permute.xlu0 %1138
        %1140 = vrot.lane.b32.xlu0 %v763, 8
        %v1141 = vpop.permute.xlu0 %1140
        %1142 = vrot.lane.b32.xlu0 %v764, 8
        %v1143 = vpop.permute.xlu0 %1142
        %1144 = vrot.lane.b32.xlu0 %v765, 8
        %v1145 = vpop.permute.xlu0 %1144
        %1146 = vrot.lane.b32.xlu0 %v766, 8
        %v1147 = vpop.permute.xlu0 %1146
        %1148 = vrot.lane.b32.xlu0 %v767, 8
        %v1149 = vpop.permute.xlu0 %1148
        %1150 = vrot.lane.b32.xlu0 %v768, 8
        %v1151 = vpop.permute.xlu0 %1150
        %1152 = vrot.lane.b32.xlu0 %v769, 8
        %v1153 = vpop.permute.xlu0 %1152
        %1154 = vrot.lane.b32.xlu0 %v770, 8
        %v1155 = vpop.permute.xlu0 %1154
        %1172 = vrot.lane.b32.xlu0 %v803, 12
        %v1173 = vpop.permute.xlu0 %1172
        %1174 = vrot.lane.b32.xlu0 %v804, 12
        %v1175 = vpop.permute.xlu0 %1174
        %1176 = vrot.lane.b32.xlu0 %v805, 12
        %v1177 = vpop.permute.xlu0 %1176
        %1178 = vrot.lane.b32.xlu0 %v806, 12
        %v1179 = vpop.permute.xlu0 %1178
        %1180 = vrot.lane.b32.xlu0 %v807, 12
        %v1181 = vpop.permute.xlu0 %1180
        %1182 = vrot.lane.b32.xlu0 %v808, 12
        %v1183 = vpop.permute.xlu0 %1182
        %1184 = vrot.lane.b32.xlu0 %v809, 12
        %v1185 = vpop.permute.xlu0 %1184
        %1186 = vrot.lane.b32.xlu0 %v810, 12
        %v1187 = vpop.permute.xlu0 %1186
        %1188 = vrot.lane.b32.xlu0 %v811, 12
        %v1189 = vpop.permute.xlu0 %1188
        %1190 = vrot.lane.b32.xlu0 %v812, 12
        %v1191 = vpop.permute.xlu0 %1190
        %1192 = vrot.lane.b32.xlu0 %v813, 12
        %v1193 = vpop.permute.xlu0 %1192
        %1194 = vrot.lane.b32.xlu0 %v814, 12
        %v1195 = vpop.permute.xlu0 %1194
        %1196 = vrot.lane.b32.xlu0 %v815, 12
        %v1197 = vpop.permute.xlu0 %1196
        %1198 = vrot.lane.b32.xlu0 %v816, 12
        %v1199 = vpop.permute.xlu0 %1198
        %1200 = vrot.lane.b32.xlu0 %v817, 12
        %v1201 = vpop.permute.xlu0 %1200
        %1202 = vrot.lane.b32.xlu0 %v818, 12
        %v1203 = vpop.permute.xlu0 %1202
        %1220 = vrot.lane.b32.xlu0 %v851, 16
        %v1221 = vpop.permute.xlu0 %1220
        %1222 = vrot.lane.b32.xlu0 %v852, 16
        %v1223 = vpop.permute.xlu0 %1222
        %1224 = vrot.lane.b32.xlu0 %v853, 16
        %v1225 = vpop.permute.xlu0 %1224
        %1226 = vrot.lane.b32.xlu0 %v854, 16
        %v1227 = vpop.permute.xlu0 %1226
        %1228 = vrot.lane.b32.xlu0 %v855, 16
        %v1229 = vpop.permute.xlu0 %1228
        %1230 = vrot.lane.b32.xlu0 %v856, 16
        %v1231 = vpop.permute.xlu0 %1230
        %1232 = vrot.lane.b32.xlu0 %v857, 16
        %v1233 = vpop.permute.xlu0 %1232
        %1234 = vrot.lane.b32.xlu0 %v858, 16
        %v1235 = vpop.permute.xlu0 %1234
        %1236 = vrot.lane.b32.xlu0 %v859, 16
        %v1237 = vpop.permute.xlu0 %1236
        %1238 = vrot.lane.b32.xlu0 %v860, 16
        %v1239 = vpop.permute.xlu0 %1238
        %1240 = vrot.lane.b32.xlu0 %v861, 16
        %v1241 = vpop.permute.xlu0 %1240
        %1242 = vrot.lane.b32.xlu0 %v862, 16
        %v1243 = vpop.permute.xlu0 %1242
        %1244 = vrot.lane.b32.xlu0 %v863, 16
        %v1245 = vpop.permute.xlu0 %1244
        %1246 = vrot.lane.b32.xlu0 %v864, 16
        %v1247 = vpop.permute.xlu0 %1246
        %1248 = vrot.lane.b32.xlu0 %v865, 16
        %v1249 = vpop.permute.xlu0 %1248
        %1250 = vrot.lane.b32.xlu0 %v866, 16
        %v1251 = vpop.permute.xlu0 %1250
        %1268 = vrot.lane.b32.xlu0 %v899, 20
        %v1269 = vpop.permute.xlu0 %1268
        %1270 = vrot.lane.b32.xlu0 %v900, 20
        %v1271 = vpop.permute.xlu0 %1270
        %1272 = vrot.lane.b32.xlu0 %v901, 20
        %v1273 = vpop.permute.xlu0 %1272
        %1274 = vrot.lane.b32.xlu0 %v902, 20
        %v1275 = vpop.permute.xlu0 %1274
        %1276 = vrot.lane.b32.xlu0 %v903, 20
        %v1277 = vpop.permute.xlu0 %1276
        %1278 = vrot.lane.b32.xlu0 %v904, 20
        %v1279 = vpop.permute.xlu0 %1278
        %1280 = vrot.lane.b32.xlu0 %v905, 20
        %v1281 = vpop.permute.xlu0 %1280
        %1282 = vrot.lane.b32.xlu0 %v906, 20
        %v1283 = vpop.permute.xlu0 %1282
        %1284 = vrot.lane.b32.xlu0 %v907, 20
        %v1285 = vpop.permute.xlu0 %1284
        %1286 = vrot.lane.b32.xlu0 %v908, 20
        %v1287 = vpop.permute.xlu0 %1286
        %1288 = vrot.lane.b32.xlu0 %v909, 20
        %v1289 = vpop.permute.xlu0 %1288
        %1290 = vrot.lane.b32.xlu0 %v910, 20
        %v1291 = vpop.permute.xlu0 %1290
        %1292 = vrot.lane.b32.xlu0 %v911, 20
        %v1293 = vpop.permute.xlu0 %1292
        %1294 = vrot.lane.b32.xlu0 %v912, 20
        %v1295 = vpop.permute.xlu0 %1294
        %1296 = vrot.lane.b32.xlu0 %v913, 20
        %v1297 = vpop.permute.xlu0 %1296
        %1298 = vrot.lane.b32.xlu0 %v914, 20
        %v1299 = vpop.permute.xlu0 %1298
        %1316 = vrot.lane.b32.xlu0 %v948, 24
        %v1317 = vpop.permute.xlu0 %1316
        %1318 = vrot.lane.b32.xlu0 %v949, 24
        %v1319 = vpop.permute.xlu0 %1318
        %1320 = vrot.lane.b32.xlu0 %v950, 24
        %v1321 = vpop.permute.xlu0 %1320
        %1322 = vrot.lane.b32.xlu0 %v951, 24
        %v1323 = vpop.permute.xlu0 %1322
        %1324 = vrot.lane.b32.xlu0 %v952, 24
        %v1325 = vpop.permute.xlu0 %1324
        %1326 = vrot.lane.b32.xlu0 %v953, 24
        %v1327 = vpop.permute.xlu0 %1326
        %1328 = vrot.lane.b32.xlu0 %v954, 24
        %v1329 = vpop.permute.xlu0 %1328
        %1330 = vrot.lane.b32.xlu0 %v955, 24
        %v1331 = vpop.permute.xlu0 %1330
        %1332 = vrot.lane.b32.xlu0 %v956, 24
        %v1333 = vpop.permute.xlu0 %1332
        %1334 = vrot.lane.b32.xlu0 %v957, 24
        %v1335 = vpop.permute.xlu0 %1334
        %1336 = vrot.lane.b32.xlu0 %v958, 24
        %v1337 = vpop.permute.xlu0 %1336
        %1338 = vrot.lane.b32.xlu0 %v959, 24
        %v1339 = vpop.permute.xlu0 %1338
        %1340 = vrot.lane.b32.xlu0 %v960, 24
        %v1341 = vpop.permute.xlu0 %1340
        %1342 = vrot.lane.b32.xlu0 %v961, 24
        %v1343 = vpop.permute.xlu0 %1342
        %1344 = vrot.lane.b32.xlu0 %v962, 24
        %v1345 = vpop.permute.xlu0 %1344
        %1346 = vrot.lane.b32.xlu0 %v963, 24
        %v1347 = vpop.permute.xlu0 %1346
        %1364 = vrot.lane.b32.xlu0 %v996, 28
        %v1365 = vpop.permute.xlu0 %1364
        %1366 = vrot.lane.b32.xlu0 %v997, 28
        %v1367 = vpop.permute.xlu0 %1366
        %1368 = vrot.lane.b32.xlu0 %v998, 28
        %v1369 = vpop.permute.xlu0 %1368
        %1370 = vrot.lane.b32.xlu0 %v999, 28
        %v1371 = vpop.permute.xlu0 %1370
        %1372 = vrot.lane.b32.xlu0 %v1000, 28
        %v1373 = vpop.permute.xlu0 %1372
        %1374 = vrot.lane.b32.xlu0 %v1001, 28
        %v1375 = vpop.permute.xlu0 %1374
        %1376 = vrot.lane.b32.xlu0 %v1002, 28
        %v1377 = vpop.permute.xlu0 %1376
        %1378 = vrot.lane.b32.xlu0 %v1003, 28
        %v1379 = vpop.permute.xlu0 %1378
        %1380 = vrot.lane.b32.xlu0 %v1004, 28
        %v1381 = vpop.permute.xlu0 %1380
        %1382 = vrot.lane.b32.xlu0 %v1005, 28
        %v1383 = vpop.permute.xlu0 %1382
        %1384 = vrot.lane.b32.xlu0 %v1006, 28
        %v1385 = vpop.permute.xlu0 %1384
        %1386 = vrot.lane.b32.xlu0 %v1007, 28
        %v1387 = vpop.permute.xlu0 %1386
        %1388 = vrot.lane.b32.xlu0 %v1008, 28
        %v1389 = vpop.permute.xlu0 %1388
        %1390 = vrot.lane.b32.xlu0 %v1009, 28
        %v1391 = vpop.permute.xlu0 %1390
        %1392 = vrot.lane.b32.xlu0 %v1010, 28
        %v1393 = vpop.permute.xlu0 %1392
        %1394 = vrot.lane.b32.xlu0 %v1011, 28
        %v1395 = vpop.permute.xlu0 %1394
        %1412 = vrot.lane.b32.xlu0 %v1044, 32
        %v1413 = vpop.permute.xlu0 %1412
        %1414 = vrot.lane.b32.xlu0 %v1045, 32
        %v1415 = vpop.permute.xlu0 %1414
        %1416 = vrot.lane.b32.xlu0 %v1046, 32
        %v1417 = vpop.permute.xlu0 %1416
        %1418 = vrot.lane.b32.xlu0 %v1047, 32
        %v1419 = vpop.permute.xlu0 %1418
        %1420 = vrot.lane.b32.xlu0 %v1048, 32
        %v1421 = vpop.permute.xlu0 %1420
        %1422 = vrot.lane.b32.xlu0 %v1049, 32
        %v1423 = vpop.permute.xlu0 %1422
        %1424 = vrot.lane.b32.xlu0 %v1050, 32
        %v1425 = vpop.permute.xlu0 %1424
        %1426 = vrot.lane.b32.xlu0 %v1051, 32
        %v1427 = vpop.permute.xlu0 %1426
        %1428 = vrot.lane.b32.xlu0 %v1052, 32
        %v1429 = vpop.permute.xlu0 %1428
        %1430 = vrot.lane.b32.xlu0 %v1053, 32
        %v1431 = vpop.permute.xlu0 %1430
        %1432 = vrot.lane.b32.xlu0 %v1054, 32
        %v1433 = vpop.permute.xlu0 %1432
        %1434 = vrot.lane.b32.xlu0 %v1055, 32
        %v1435 = vpop.permute.xlu0 %1434
        %1436 = vrot.lane.b32.xlu0 %v1056, 32
        %v1437 = vpop.permute.xlu0 %1436
        %1438 = vrot.lane.b32.xlu0 %v1057, 32
        %v1439 = vpop.permute.xlu0 %1438
        %1440 = vrot.lane.b32.xlu0 %v1058, 32
        %v1441 = vpop.permute.xlu0 %1440
        %1442 = vrot.lane.b32.xlu0 %v1059, 32
        %v1443 = vpop.permute.xlu0 %1442
        %v1446 = vsel %vm548, %v659, %v1077
        %v1449 = vsel %vm548, %v660, %v1079
        %v1452 = vsel %vm548, %v661, %v1081
        %v1455 = vsel %vm548, %v662, %v1083
        %v1458 = vsel %vm548, %v663, %v1085
        %v1461 = vsel %vm548, %v664, %v1087
        %v1464 = vsel %vm548, %v665, %v1089
        %v1467 = vsel %vm548, %v666, %v1091
        %v1470 = vsel %vm548, %v667, %v1093
        %v1473 = vsel %vm548, %v668, %v1095
        %v1476 = vsel %vm548, %v669, %v1097
        %v1479 = vsel %vm548, %v670, %v1099
        %v1482 = vsel %vm548, %v671, %v1101
        %v1485 = vsel %vm548, %v672, %v1103
        %v1488 = vsel %vm548, %v673, %v1105
        %v1491 = vsel %vm548, %v674, %v1107
        %vm1492 = vcmask 64512
        %v1494 = vsel %vm1492, %v1446, %v1125
        %v1496 = vsel %vm1492, %v1449, %v1127
        %v1498 = vsel %vm1492, %v1452, %v1129
        %v1500 = vsel %vm1492, %v1455, %v1131
        %v1502 = vsel %vm1492, %v1458, %v1133
        %v1504 = vsel %vm1492, %v1461, %v1135
        %v1506 = vsel %vm1492, %v1464, %v1137
        %v1508 = vsel %vm1492, %v1467, %v1139
        %v1510 = vsel %vm1492, %v1470, %v1141
        %v1512 = vsel %vm1492, %v1473, %v1143
        %v1514 = vsel %vm1492, %v1476, %v1145
        %v1516 = vsel %vm1492, %v1479, %v1147
        %v1518 = vsel %vm1492, %v1482, %v1149
        %v1520 = vsel %vm1492, %v1485, %v1151
        %v1522 = vsel %vm1492, %v1488, %v1153
        %v1524 = vsel %vm1492, %v1491, %v1155
        %vm1525 = vcmask 97280
        %v1527 = vsel %vm1525, %v1494, %v1173
        %v1529 = vsel %vm1525, %v1496, %v1175
        %v1531 = vsel %vm1525, %v1498, %v1177
        %v1533 = vsel %vm1525, %v1500, %v1179
        %v1535 = vsel %vm1525, %v1502, %v1181
        %v1537 = vsel %vm1525, %v1504, %v1183
        %v1539 = vsel %vm1525, %v1506, %v1185
        %v1541 = vsel %vm1525, %v1508, %v1187
        %v1543 = vsel %vm1525, %v1510, %v1189
        %v1545 = vsel %vm1525, %v1512, %v1191
        %v1547 = vsel %vm1525, %v1514, %v1193
        %v1549 = vsel %vm1525, %v1516, %v1195
        %v1551 = vsel %vm1525, %v1518, %v1197
        %v1553 = vsel %vm1525, %v1520, %v1199
        %v1555 = vsel %vm1525, %v1522, %v1201
        %v1557 = vsel %vm1525, %v1524, %v1203
        %vm1558 = vcmask 130048
        %v1560 = vsel %vm1558, %v1527, %v1221
        %v1562 = vsel %vm1558, %v1529, %v1223
        %v1564 = vsel %vm1558, %v1531, %v1225
        %v1566 = vsel %vm1558, %v1533, %v1227
        %v1568 = vsel %vm1558, %v1535, %v1229
        %v1570 = vsel %vm1558, %v1537, %v1231
        %v1572 = vsel %vm1558, %v1539, %v1233
        %v1574 = vsel %vm1558, %v1541, %v1235
        %v1576 = vsel %vm1558, %v1543, %v1237
        %v1578 = vsel %vm1558, %v1545, %v1239
        %v1580 = vsel %vm1558, %v1547, %v1241
        %v1582 = vsel %vm1558, %v1549, %v1243
        %v1584 = vsel %vm1558, %v1551, %v1245
        %v1586 = vsel %vm1558, %v1553, %v1247
        %v1588 = vsel %vm1558, %v1555, %v1249
        %v1590 = vsel %vm1558, %v1557, %v1251
        %vm1591 = vcmask 162816
        %v1593 = vsel %vm1591, %v1560, %v1269
        %v1595 = vsel %vm1591, %v1562, %v1271
        %v1597 = vsel %vm1591, %v1564, %v1273
        %v1599 = vsel %vm1591, %v1566, %v1275
        %v1601 = vsel %vm1591, %v1568, %v1277
        %v1603 = vsel %vm1591, %v1570, %v1279
        %v1605 = vsel %vm1591, %v1572, %v1281
        %v1607 = vsel %vm1591, %v1574, %v1283
        %v1609 = vsel %vm1591, %v1576, %v1285
        %v1611 = vsel %vm1591, %v1578, %v1287
        %v1613 = vsel %vm1591, %v1580, %v1289
        %v1615 = vsel %vm1591, %v1582, %v1291
        %v1617 = vsel %vm1591, %v1584, %v1293
        %v1619 = vsel %vm1591, %v1586, %v1295
        %v1621 = vsel %vm1591, %v1588, %v1297
        %v1623 = vsel %vm1591, %v1590, %v1299
        %vm1624 = vcmask 195584
        %v1626 = vsel %vm1624, %v1593, %v1317
        %v1628 = vsel %vm1624, %v1595, %v1319
        %v1630 = vsel %vm1624, %v1597, %v1321
        %v1632 = vsel %vm1624, %v1599, %v1323
        %v1634 = vsel %vm1624, %v1601, %v1325
        %v1636 = vsel %vm1624, %v1603, %v1327
        %v1638 = vsel %vm1624, %v1605, %v1329
        %v1640 = vsel %vm1624, %v1607, %v1331
        %v1642 = vsel %vm1624, %v1609, %v1333
        %v1644 = vsel %vm1624, %v1611, %v1335
        %v1646 = vsel %vm1624, %v1613, %v1337
        %v1648 = vsel %vm1624, %v1615, %v1339
        %v1650 = vsel %vm1624, %v1617, %v1341
        %v1652 = vsel %vm1624, %v1619, %v1343
        %v1654 = vsel %vm1624, %v1621, %v1345
        %v1656 = vsel %vm1624, %v1623, %v1347
        %vm1657 = vcmask 228352
        %v1659 = vsel %vm1657, %v1626, %v1365
        %v1661 = vsel %vm1657, %v1628, %v1367
        %v1663 = vsel %vm1657, %v1630, %v1369
        %v1665 = vsel %vm1657, %v1632, %v1371
        %v1667 = vsel %vm1657, %v1634, %v1373
        %v1669 = vsel %vm1657, %v1636, %v1375
        %v1671 = vsel %vm1657, %v1638, %v1377
        %v1673 = vsel %vm1657, %v1640, %v1379
        %v1675 = vsel %vm1657, %v1642, %v1381
        %v1677 = vsel %vm1657, %v1644, %v1383
        %v1679 = vsel %vm1657, %v1646, %v1385
        %v1681 = vsel %vm1657, %v1648, %v1387
        %v1683 = vsel %vm1657, %v1650, %v1389
        %v1685 = vsel %vm1657, %v1652, %v1391
        %v1687 = vsel %vm1657, %v1654, %v1393
        %v1689 = vsel %vm1657, %v1656, %v1395
        %vm1690 = vcmask 261120
        %v1692 = vsel %vm1690, %v1659, %v1413
        %v1694 = vsel %vm1690, %v1661, %v1415
        %v1696 = vsel %vm1690, %v1663, %v1417
        %v1698 = vsel %vm1690, %v1665, %v1419
        %v1700 = vsel %vm1690, %v1667, %v1421
        %v1702 = vsel %vm1690, %v1669, %v1423
        %v1704 = vsel %vm1690, %v1671, %v1425
        %v1706 = vsel %vm1690, %v1673, %v1427
        %v1708 = vsel %vm1690, %v1675, %v1429
        %v1710 = vsel %vm1690, %v1677, %v1431
        %v1712 = vsel %vm1690, %v1679, %v1433
        %v1714 = vsel %vm1690, %v1681, %v1435
        %v1716 = vsel %vm1690, %v1683, %v1437
        %v1718 = vsel %vm1690, %v1685, %v1439
        %v1720 = vsel %vm1690, %v1687, %v1441
        %v1722 = vsel %vm1690, %v1689, %v1443
        %v1723 = vld [vmem:[#allocation8] sm:$0xf]
        %v1724 = vld [vmem:[#allocation8 + $0x4] sm:$0xf]
        %v1725 = vld [vmem:[#allocation8 + $0x8] sm:$0xf]
        %v1726 = vld [vmem:[#allocation8 + $0xc] sm:$0xf]
        %v1727 = vld [vmem:[#allocation8 + $0x10] sm:$0x3]
        %v1728 = vld [vmem:[#allocation9] sm:$0x1]
        %v1730 = vlaneseq
        %v1731 = vshrl.u32 %v1730, 7
        %v1732 = vsub.s32 0, %v1731
        %v1733 = vrot.slane %v1728, %v1732
        %v1740 = vunpack.c.l.b16 %v1723
        %v1741 = vunpack.c.l.b16 %v1724
        %v1742 = vunpack.c.l.b16 %v1725
        %v1743 = vunpack.c.l.b16 %v1726
        %v1744 = vunpack.c.l.b16 %v1727
        %v1745 = vpack.c.b16 %v1741, %v1740
        %v1746 = vpack.c.b16 %v1743, %v1742
        %v1747 = vpack.c.b16 %v1744, %v1744
        %vm1750 = vcmask 293888
        %v1751 = vsel %vm1750, %v1692, 0
        %v1753 = vsel %vm1750, %v1694, 0
        %v1755 = vsel %vm1750, %v1696, 0
        %v1757 = vsel %vm1750, %v1698, 0
        %v1759 = vsel %vm1750, %v1700, 0
        %v1761 = vsel %vm1750, %v1702, 0
        %v1763 = vsel %vm1750, %v1704, 0
        %v1765 = vsel %vm1750, %v1706, 0
        %v1767 = vsel %vm1750, %v1708, 0
        %v1769 = vsel %vm1750, %v1710, 0
        %v1771 = vsel %vm1750, %v1712, 0
        %v1773 = vsel %vm1750, %v1714, 0
        %v1775 = vsel %vm1750, %v1716, 0
        %v1777 = vsel %vm1750, %v1718, 0
        %v1779 = vsel %vm1750, %v1720, 0
        %v1781 = vsel %vm1750, %v1722, 0
        %vm1783 = vcmask 1041408
        %v1785 = vsel %vm1783, %v1747, 0
        %1787 = vmatprep.subr.bf16.mxu0 0
        %1788 = vmatpush1.bf16.msra.mxu0 %v1745
        %1789 = vmatprep.subr.bf16.mxu0 0
        %1790 = vmatpush1.bf16.msra.mxu0 %v1746
        %1791 = vmatprep.subr.bf16.mxu0 0
        %1792 = vmatpush1.bf16.msra.mxu0 %v1785
        %1793 = vmatprep.subr.bf16.mxu0 0
        %1794 = vmatpush1.bf16.msra.mxu0 0
        %1795 = vmatprep.subr.bf16.mxu0 0
        %1796 = vmatpush1.bf16.msra.mxu0 0
        %1797 = vmatprep.subr.bf16.mxu0 0
        %1798 = vmatpush1.bf16.msra.mxu0 0
        %1799 = vmatprep.subr.bf16.mxu0 0
        %1800 = vmatpush1.bf16.msra.mxu0 0
        %1801 = vmatprep.subr.bf16.mxu0 0
        %1802 = vmatpush1.bf16.msra.mxu0 0
        %1803 = vmatprep.subr.bf16.mxu0 0
        %1804 = vmatpush1.bf16.msra.mxu0 0
        %1805 = vmatprep.subr.bf16.mxu0 0
        %1806 = vmatpush1.bf16.msra.mxu0 0
        %1807 = vmatprep.subr.bf16.mxu0 0
        %1808 = vmatpush1.bf16.msra.mxu0 0
        %1809 = vmatprep.subr.bf16.mxu0 0
        %1810 = vmatpush1.bf16.msra.mxu0 0
        %1811 = vmatprep.subr.bf16.mxu0 0
        %1812 = vmatpush1.bf16.msra.mxu0 0
        %1813 = vmatprep.subr.bf16.mxu0 0
        %1814 = vmatpush1.bf16.msra.mxu0 0
        %1815 = vmatprep.subr.bf16.mxu0 0
        %1816 = vmatpush1.bf16.msra.mxu0 0
        %1817 = vmatprep.subr.bf16.mxu0 0
        %1818 = vmatpush1.bf16.msra.mxu0 0
        %1819 = vmatprep.mubr.bf16.mxu0 0
        %1820 = vmatmul.mubr.bf16.gmra.mrb[0].mxu0 %v1751
        %v1821 = vpop.f32.mrb[0].mxu0
        %v1822 = vadd.f32 %v1733, %v1821
        %v1823 = vpop.f32.mrb[0].mxu0
        %v1824 = vpop.f32.mrb[0].mxu0
        %v1825 = vadd.f32 %v1733, %v1824
        %v1826 = vpop.f32.mrb[0].mxu0
        %1827 = vmatprep.mubr.bf16.mxu0 0
        %1828 = vmatmul.mubr.bf16.gmra.mrb[0].mxu0 %v1753
        %v1829 = vpop.f32.mrb[0].mxu0
        %v1830 = vadd.f32 %v1733, %v1829
        %v1831 = vpop.f32.mrb[0].mxu0
        %v1832 = vpop.f32.mrb[0].mxu0
        %v1833 = vadd.f32 %v1733, %v1832
        %v1834 = vpop.f32.mrb[0].mxu0
        %1835 = vmatprep.mubr.bf16.mxu0 0
        %1836 = vmatmul.mubr.bf16.gmra.mrb[0].mxu0 %v1755
        %v1837 = vpop.f32.mrb[0].mxu0
        %v1838 = vadd.f32 %v1733, %v1837
        %v1839 = vpop.f32.mrb[0].mxu0
        %v1840 = vpop.f32.mrb[0].mxu0
        %v1841 = vadd.f32 %v1733, %v1840
        %v1842 = vpop.f32.mrb[0].mxu0
        %1843 = vmatprep.mubr.bf16.mxu0 0
        %1844 = vmatmul.mubr.bf16.gmra.mrb[0].mxu0 %v1757
        %v1845 = vpop.f32.mrb[0].mxu0
        %v1846 = vadd.f32 %v1733, %v1845
        %v1847 = vpop.f32.mrb[0].mxu0
        %v1848 = vpop.f32.mrb[0].mxu0
        %v1849 = vadd.f32 %v1733, %v1848
        %v1850 = vpop.f32.mrb[0].mxu0
        %1851 = vmatprep.mubr.bf16.mxu0 0
        %1852 = vmatmul.mubr.bf16.gmra.mrb[0].mxu0 %v1759
        %v1853 = vpop.f32.mrb[0].mxu0
        %v1854 = vadd.f32 %v1733, %v1853
        %v1855 = vpop.f32.mrb[0].mxu0
        %v1856 = vpop.f32.mrb[0].mxu0
        %v1857 = vadd.f32 %v1733, %v1856
        %v1858 = vpop.f32.mrb[0].mxu0
        %1859 = vmatprep.mubr.bf16.mxu0 0
        %1860 = vmatmul.mubr.bf16.gmra.mrb[0].mxu0 %v1761
        %v1861 = vpop.f32.mrb[0].mxu0
        %v1862 = vadd.f32 %v1733, %v1861
        %v1863 = vpop.f32.mrb[0].mxu0
        %v1864 = vpop.f32.mrb[0].mxu0
        %v1865 = vadd.f32 %v1733, %v1864
        %v1866 = vpop.f32.mrb[0].mxu0
        %1867 = vmatprep.mubr.bf16.mxu0 0
        %1868 = vmatmul.mubr.bf16.gmra.mrb[0].mxu0 %v1763
        %v1869 = vpop.f32.mrb[0].mxu0
        %v1870 = vadd.f32 %v1733, %v1869
        %v1871 = vpop.f32.mrb[0].mxu0
        %v1872 = vpop.f32.mrb[0].mxu0
        %v1873 = vadd.f32 %v1733, %v1872
        %v1874 = vpop.f32.mrb[0].mxu0
        %1875 = vmatprep.mubr.bf16.mxu0 0
        %1876 = vmatmul.mubr.bf16.gmra.mrb[0].mxu0 %v1765
        %v1877 = vpop.f32.mrb[0].mxu0
        %v1878 = vadd.f32 %v1733, %v1877
        %v1879 = vpop.f32.mrb[0].mxu0
        %v1880 = vpop.f32.mrb[0].mxu0
        %v1881 = vadd.f32 %v1733, %v1880
        %v1882 = vpop.f32.mrb[0].mxu0
        %1883 = vmatprep.mubr.bf16.mxu0 0
        %1884 = vmatmul.mubr.bf16.gmra.mrb[0].mxu0 %v1767
        %v1885 = vpop.f32.mrb[0].mxu0
        %v1886 = vadd.f32 %v1733, %v1885
        %v1887 = vpop.f32.mrb[0].mxu0
        %v1888 = vpop.f32.mrb[0].mxu0
        %v1889 = vadd.f32 %v1733, %v1888
        %v1890 = vpop.f32.mrb[0].mxu0
        %1891 = vmatprep.mubr.bf16.mxu0 0
        %1892 = vmatmul.mubr.bf16.gmra.mrb[0].mxu0 %v1769
        %v1893 = vpop.f32.mrb[0].mxu0
        %v1894 = vadd.f32 %v1733, %v1893
        %v1895 = vpop.f32.mrb[0].mxu0
        %v1896 = vpop.f32.mrb[0].mxu0
        %v1897 = vadd.f32 %v1733, %v1896
        %v1898 = vpop.f32.mrb[0].mxu0
        %1899 = vmatprep.mubr.bf16.mxu0 0
        %1900 = vmatmul.mubr.bf16.gmra.mrb[0].mxu0 %v1771
        %v1901 = vpop.f32.mrb[0].mxu0
        %v1902 = vadd.f32 %v1733, %v1901
        %v1903 = vpop.f32.mrb[0].mxu0
        %v1904 = vpop.f32.mrb[0].mxu0
        %v1905 = vadd.f32 %v1733, %v1904
        %v1906 = vpop.f32.mrb[0].mxu0
        %1907 = vmatprep.mubr.bf16.mxu0 0
        %1908 = vmatmul.mubr.bf16.gmra.mrb[0].mxu0 %v1773
        %v1909 = vpop.f32.mrb[0].mxu0
        %v1910 = vadd.f32 %v1733, %v1909
        %v1911 = vpop.f32.mrb[0].mxu0
        %v1912 = vpop.f32.mrb[0].mxu0
        %v1913 = vadd.f32 %v1733, %v1912
        %v1914 = vpop.f32.mrb[0].mxu0
        %1915 = vmatprep.mubr.bf16.mxu0 0
        %1916 = vmatmul.mubr.bf16.gmra.mrb[0].mxu0 %v1775
        %v1917 = vpop.f32.mrb[0].mxu0
        %v1918 = vadd.f32 %v1733, %v1917
        %v1919 = vpop.f32.mrb[0].mxu0
        %v1920 = vpop.f32.mrb[0].mxu0
        %v1921 = vadd.f32 %v1733, %v1920
        %v1922 = vpop.f32.mrb[0].mxu0
        %1923 = vmatprep.mubr.bf16.mxu0 0
        %1924 = vmatmul.mubr.bf16.gmra.mrb[0].mxu0 %v1777
        %v1925 = vpop.f32.mrb[0].mxu0
        %v1926 = vadd.f32 %v1733, %v1925
        %v1927 = vpop.f32.mrb[0].mxu0
        %v1928 = vpop.f32.mrb[0].mxu0
        %v1929 = vadd.f32 %v1733, %v1928
        %v1930 = vpop.f32.mrb[0].mxu0
        %1931 = vmatprep.mubr.bf16.mxu0 0
        %1932 = vmatmul.mubr.bf16.gmra.mrb[0].mxu0 %v1779
        %v1933 = vpop.f32.mrb[0].mxu0
        %v1934 = vadd.f32 %v1733, %v1933
        %v1935 = vpop.f32.mrb[0].mxu0
        %v1936 = vpop.f32.mrb[0].mxu0
        %v1937 = vadd.f32 %v1733, %v1936
        %v1938 = vpop.f32.mrb[0].mxu0
        %1939 = vmatprep.mubr.bf16.mxu0 0
        %1940 = vmatmul.mubr.bf16.gmra.mrb[0].mxu0 %v1781
        %v1941 = vpop.f32.mrb[0].mxu0
        %v1942 = vadd.f32 %v1733, %v1941
        %v1943 = vpop.f32.mrb[0].mxu0
        %v1944 = vpop.f32.mrb[0].mxu0
        %v1945 = vadd.f32 %v1733, %v1944
        %v1946 = vpop.f32.mrb[0].mxu0
        %1947 = vdwg.mxu0
        %1948 = vst.msk [vmem:[#allocation2] sm:$0xff] %vm548, 0.0
        %1949 = vst.msk [vmem:[#allocation2 + $0x8] sm:$0xff] %vm548, 0.0
        %1950 = vst.msk [vmem:[#allocation2 + $0x10] sm:$0x3] %vm551, 0.0
        %1951 = vst.msk [vmem:[%s553] sm:$0xff] %vm548, 0.0
        %1952 = vst.msk [vmem:[%s553 + $0x8] sm:$0xff] %vm548, 0.0
        %1953 = vst.msk [vmem:[%s553 + $0x10] sm:$0x3] %vm551, 0.0
        %1954 = vst.msk [vmem:[#allocation2] sm:$0x1] %vm557, 0.0
        %1955 = vst.msk [vmem:[#allocation2 + $0x18] sm:$0x1] %vm557, 0.0
        %1956 = vst.msk [vmem:[#allocation2 + $0x30] sm:$0x1] %vm557, 0.0
        %1957 = vst.msk [vmem:[#allocation2 + $0x48] sm:$0x1] %vm557, 0.0
        %1958 = vst.msk [vmem:[#allocation2 + $0x60] sm:$0x1] %vm557, 0.0
        %1959 = vst.msk [vmem:[#allocation2 + $0x78] sm:$0x1] %vm557, 0.0
        %1960 = vst.msk [vmem:[#allocation2 + $0x90] sm:$0x1] %vm557, 0.0
        %1961 = vst.msk [vmem:[#allocation2 + $0xa8] sm:$0x1] %vm557, 0.0
        %1962 = vst.msk [vmem:[#allocation2 + $0xc0] sm:$0x1] %vm557, 0.0
        %1963 = vst.msk [vmem:[#allocation2 + $0xd8] sm:$0x1] %vm557, 0.0
        %1964 = vst.msk [vmem:[#allocation2 + $0xf0] sm:$0x1] %vm557, 0.0
        %1965 = vst.msk [vmem:[#allocation2 + $0x108] sm:$0x1] %vm557, 0.0
        %1966 = vst.msk [vmem:[#allocation2 + $0x120] sm:$0x1] %vm557, 0.0
        %1967 = vst.msk [vmem:[#allocation2 + $0x138] sm:$0x1] %vm557, 0.0
        %1968 = vst.msk [vmem:[#allocation2 + $0x150] sm:$0x1] %vm557, 0.0
        %1969 = vst.msk [vmem:[#allocation2 + $0x168] sm:$0x1] %vm557, 0.0
        %1970 = vst.msk [vmem:[#allocation2 + $0x180] sm:$0x1] %vm557, 0.0
        %1971 = vst.msk [vmem:[#allocation2 + $0x198] sm:$0x1] %vm557, 0.0
        %1972 = vst.msk [vmem:[#allocation2 + $0x11] sm:$0x1] %vm557, 0.0
        %1973 = vst.msk [vmem:[#allocation2 + $0x29] sm:$0x1] %vm557, 0.0
        %1974 = vst.msk [vmem:[#allocation2 + $0x41] sm:$0x1] %vm557, 0.0
        %1975 = vst.msk [vmem:[#allocation2 + $0x59] sm:$0x1] %vm557, 0.0
        %1976 = vst.msk [vmem:[#allocation2 + $0x71] sm:$0x1] %vm557, 0.0
        %1977 = vst.msk [vmem:[#allocation2 + $0x89] sm:$0x1] %vm557, 0.0
        %1978 = vst.msk [vmem:[#allocation2 + $0xa1] sm:$0x1] %vm557, 0.0
        %1979 = vst.msk [vmem:[#allocation2 + $0xb9] sm:$0x1] %vm557, 0.0
        %1980 = vst.msk [vmem:[#allocation2 + $0xd1] sm:$0x1] %vm557, 0.0
        %1981 = vst.msk [vmem:[#allocation2 + $0xe9] sm:$0x1] %vm557, 0.0
        %1982 = vst.msk [vmem:[#allocation2 + $0x101] sm:$0x1] %vm557, 0.0
        %1983 = vst.msk [vmem:[#allocation2 + $0x119] sm:$0x1] %vm557, 0.0
        %1984 = vst.msk [vmem:[#allocation2 + $0x131] sm:$0x1] %vm557, 0.0
        %1985 = vst.msk [vmem:[#allocation2 + $0x149] sm:$0x1] %vm557, 0.0
        %1986 = vst.msk [vmem:[#allocation2 + $0x161] sm:$0x1] %vm557, 0.0
        %1987 = vst.msk [vmem:[#allocation2 + $0x179] sm:$0x1] %vm557, 0.0
        %1988 = vst.msk [vmem:[#allocation2 + $0x191] sm:$0x1] %vm557, 0.0
        %1989 = vst.msk [vmem:[#allocation2 + $0x1a9] sm:$0x1] %vm557, 0.0
        %1990 = vst.msk [vmem:[%s594 + $0x1] sm:$0xff] %vm548, %v410
        %1991 = vst.msk [vmem:[%s594 + $0x9] sm:$0xff] %vm548, %v411
        %1992 = vst.msk [vmem:[%s594 + $0x19] sm:$0xff] %vm548, %v412
        %1993 = vst.msk [vmem:[%s594 + $0x21] sm:$0xff] %vm548, %v413
        %1994 = vst.msk [vmem:[%s594 + $0x31] sm:$0xff] %vm548, %v414
        %1995 = vst.msk [vmem:[%s594 + $0x39] sm:$0xff] %vm548, %v415
        %1996 = vst.msk [vmem:[%s594 + $0x49] sm:$0xff] %vm548, %v416
        %1997 = vst.msk [vmem:[%s594 + $0x51] sm:$0xff] %vm548, %v417
        %1998 = vst.msk [vmem:[%s594 + $0x61] sm:$0xff] %vm548, %v418
        %1999 = vst.msk [vmem:[%s594 + $0x69] sm:$0xff] %vm548, %v419
        %2000 = vst.msk [vmem:[%s594 + $0x79] sm:$0xff] %vm548, %v420
        %2001 = vst.msk [vmem:[%s594 + $0x81] sm:$0xff] %vm548, %v421
        %2002 = vst.msk [vmem:[%s594 + $0x91] sm:$0xff] %vm548, %v422
        %2003 = vst.msk [vmem:[%s594 + $0x99] sm:$0xff] %vm548, %v423
        %2004 = vst.msk [vmem:[%s594 + $0xa9] sm:$0xff] %vm548, %v424
        %2005 = vst.msk [vmem:[%s594 + $0xb1] sm:$0xff] %vm548, %v425
        %2006 = vst.msk [vmem:[%s594 + $0xc1] sm:$0xff] %vm548, %v426
        %2007 = vst.msk [vmem:[%s594 + $0xc9] sm:$0xff] %vm548, %v427
        %2008 = vst.msk [vmem:[%s594 + $0xd9] sm:$0xff] %vm548, %v428
        %2009 = vst.msk [vmem:[%s594 + $0xe1] sm:$0xff] %vm548, %v429
        %2010 = vst.msk [vmem:[%s594 + $0xf1] sm:$0xff] %vm548, %v430
        %2011 = vst.msk [vmem:[%s594 + $0xf9] sm:$0xff] %vm548, %v431
        %2012 = vst.msk [vmem:[%s594 + $0x109] sm:$0xff] %vm548, %v432
        %2013 = vst.msk [vmem:[%s594 + $0x111] sm:$0xff] %vm548, %v433
        %2014 = vst.msk [vmem:[%s594 + $0x121] sm:$0xff] %vm548, %v434
        %2015 = vst.msk [vmem:[%s594 + $0x129] sm:$0xff] %vm548, %v435
        %2016 = vst.msk [vmem:[%s594 + $0x139] sm:$0xff] %vm548, %v436
        %2017 = vst.msk [vmem:[%s594 + $0x141] sm:$0xff] %vm548, %v437
        %2018 = vst.msk [vmem:[%s594 + $0x151] sm:$0xff] %vm548, %v438
        %2019 = vst.msk [vmem:[%s594 + $0x159] sm:$0xff] %vm548, %v439
        %2020 = vst.msk [vmem:[%s594 + $0x169] sm:$0xff] %vm548, %v440
        %2021 = vst.msk [vmem:[%s594 + $0x171] sm:$0xff] %vm548, %v441
        %v2022 = vld [vmem:[#allocation2] sm:$0xff]
        %v2023 = vld [vmem:[#allocation2 + $0x8] sm:$0xff]
        %v2024 = vld [vmem:[#allocation2 + $0x18] sm:$0xff]
        %v2025 = vld [vmem:[#allocation2 + $0x20] sm:$0xff]
        %v2026 = vld [vmem:[#allocation2 + $0x30] sm:$0xff]
        %v2027 = vld [vmem:[#allocation2 + $0x38] sm:$0xff]
        %v2028 = vld [vmem:[#allocation2 + $0x48] sm:$0xff]
        %v2029 = vld [vmem:[#allocation2 + $0x50] sm:$0xff]
        %v2030 = vld [vmem:[#allocation2 + $0x60] sm:$0xff]
        %v2031 = vld [vmem:[#allocation2 + $0x68] sm:$0xff]
        %v2032 = vld [vmem:[#allocation2 + $0x78] sm:$0xff]
        %v2033 = vld [vmem:[#allocation2 + $0x80] sm:$0xff]
        %v2034 = vld [vmem:[#allocation2 + $0x90] sm:$0xff]
        %v2035 = vld [vmem:[#allocation2 + $0x98] sm:$0xff]
        %v2036 = vld [vmem:[#allocation2 + $0xa8] sm:$0xff]
        %v2037 = vld [vmem:[#allocation2 + $0xb0] sm:$0xff]
        %v2038 = vld [vmem:[#allocation2 + $0xc0] sm:$0xff]
        %v2039 = vld [vmem:[#allocation2 + $0xc8] sm:$0xff]
        %v2040 = vld [vmem:[#allocation2 + $0xd8] sm:$0xff]
        %v2041 = vld [vmem:[#allocation2 + $0xe0] sm:$0xff]
        %v2042 = vld [vmem:[#allocation2 + $0xf0] sm:$0xff]
        %v2043 = vld [vmem:[#allocation2 + $0xf8] sm:$0xff]
        %v2044 = vld [vmem:[#allocation2 + $0x108] sm:$0xff]
        %v2045 = vld [vmem:[#allocation2 + $0x110] sm:$0xff]
        %v2046 = vld [vmem:[#allocation2 + $0x120] sm:$0xff]
        %v2047 = vld [vmem:[#allocation2 + $0x128] sm:$0xff]
        %v2048 = vld [vmem:[#allocation2 + $0x138] sm:$0xff]
        %v2049 = vld [vmem:[#allocation2 + $0x140] sm:$0xff]
        %v2050 = vld [vmem:[#allocation2 + $0x150] sm:$0xff]
        %v2051 = vld [vmem:[#allocation2 + $0x158] sm:$0xff]
        %v2052 = vld [vmem:[#allocation2 + $0x168] sm:$0xff]
        %v2053 = vld [vmem:[#allocation2 + $0x170] sm:$0xff]
        %v2054 = vpack.c.bf16 %v2023, %v2022
        %v2055 = vpack.c.bf16 %v2025, %v2024
        %v2056 = vpack.c.bf16 %v2027, %v2026
        %v2057 = vpack.c.bf16 %v2029, %v2028
        %v2058 = vpack.c.bf16 %v2031, %v2030
        %v2059 = vpack.c.bf16 %v2033, %v2032
        %v2060 = vpack.c.bf16 %v2035, %v2034
        %v2061 = vpack.c.bf16 %v2037, %v2036
        %v2062 = vpack.c.bf16 %v2039, %v2038
        %v2063 = vpack.c.bf16 %v2041, %v2040
        %v2064 = vpack.c.bf16 %v2043, %v2042
        %v2065 = vpack.c.bf16 %v2045, %v2044
        %v2066 = vpack.c.bf16 %v2047, %v2046
        %v2067 = vpack.c.bf16 %v2049, %v2048
        %v2068 = vpack.c.bf16 %v2051, %v2050
        %v2069 = vpack.c.bf16 %v2053, %v2052
        %v2070 = vld [vmem:[#allocation2 + $0x1] sm:$0xff]
        %v2071 = vld [vmem:[#allocation2 + $0x9] sm:$0xff]
        %v2072 = vld [vmem:[#allocation2 + $0x19] sm:$0xff]
        %v2073 = vld [vmem:[#allocation2 + $0x21] sm:$0xff]
        %v2074 = vld [vmem:[#allocation2 + $0x31] sm:$0xff]
        %v2075 = vld [vmem:[#allocation2 + $0x39] sm:$0xff]
        %v2076 = vld [vmem:[#allocation2 + $0x49] sm:$0xff]
        %v2077 = vld [vmem:[#allocation2 + $0x51] sm:$0xff]
        %v2078 = vld [vmem:[#allocation2 + $0x61] sm:$0xff]
        %v2079 = vld [vmem:[#allocation2 + $0x69] sm:$0xff]
        %v2080 = vld [vmem:[#allocation2 + $0x79] sm:$0xff]
        %v2081 = vld [vmem:[#allocation2 + $0x81] sm:$0xff]
        %v2082 = vld [vmem:[#allocation2 + $0x91] sm:$0xff]
        %v2083 = vld [vmem:[#allocation2 + $0x99] sm:$0xff]
        %v2084 = vld [vmem:[#allocation2 + $0xa9] sm:$0xff]
        %v2085 = vld [vmem:[#allocation2 + $0xb1] sm:$0xff]
        %v2086 = vld [vmem:[#allocation2 + $0xc1] sm:$0xff]
        %v2087 = vld [vmem:[#allocation2 + $0xc9] sm:$0xff]
        %v2088 = vld [vmem:[#allocation2 + $0xd9] sm:$0xff]
        %v2089 = vld [vmem:[#allocation2 + $0xe1] sm:$0xff]
        %v2090 = vld [vmem:[#allocation2 + $0xf1] sm:$0xff]
        %v2091 = vld [vmem:[#allocation2 + $0xf9] sm:$0xff]
        %v2092 = vld [vmem:[#allocation2 + $0x109] sm:$0xff]
        %v2093 = vld [vmem:[#allocation2 + $0x111] sm:$0xff]
        %v2094 = vld [vmem:[#allocation2 + $0x121] sm:$0xff]
        %v2095 = vld [vmem:[#allocation2 + $0x129] sm:$0xff]
        %v2096 = vld [vmem:[#allocation2 + $0x139] sm:$0xff]
        %v2097 = vld [vmem:[#allocation2 + $0x141] sm:$0xff]
        %v2098 = vld [vmem:[#allocation2 + $0x151] sm:$0xff]
        %v2099 = vld [vmem:[#allocation2 + $0x159] sm:$0xff]
        %v2100 = vld [vmem:[#allocation2 + $0x169] sm:$0xff]
        %v2101 = vld [vmem:[#allocation2 + $0x171] sm:$0xff]
        %v2102 = vpack.c.bf16 %v2071, %v2070
        %v2103 = vpack.c.bf16 %v2073, %v2072
        %v2104 = vpack.c.bf16 %v2075, %v2074
        %v2105 = vpack.c.bf16 %v2077, %v2076
        %v2106 = vpack.c.bf16 %v2079, %v2078
        %v2107 = vpack.c.bf16 %v2081, %v2080
        %v2108 = vpack.c.bf16 %v2083, %v2082
        %v2109 = vpack.c.bf16 %v2085, %v2084
        %v2110 = vpack.c.bf16 %v2087, %v2086
        %v2111 = vpack.c.bf16 %v2089, %v2088
        %v2112 = vpack.c.bf16 %v2091, %v2090
        %v2113 = vpack.c.bf16 %v2093, %v2092
        %v2114 = vpack.c.bf16 %v2095, %v2094
        %v2115 = vpack.c.bf16 %v2097, %v2096
        %v2116 = vpack.c.bf16 %v2099, %v2098
        %v2117 = vpack.c.bf16 %v2101, %v2100
        %v2118 = vld [vmem:[#allocation2 + $0x2] sm:$0xff]
        %v2119 = vld [vmem:[#allocation2 + $0xa] sm:$0xff]
        %v2120 = vld [vmem:[#allocation2 + $0x1a] sm:$0xff]
        %v2121 = vld [vmem:[#allocation2 + $0x22] sm:$0xff]
        %v2122 = vld [vmem:[#allocation2 + $0x32] sm:$0xff]
        %v2123 = vld [vmem:[#allocation2 + $0x3a] sm:$0xff]
        %v2124 = vld [vmem:[#allocation2 + $0x4a] sm:$0xff]
        %v2125 = vld [vmem:[#allocation2 + $0x52] sm:$0xff]
        %v2126 = vld [vmem:[#allocation2 + $0x62] sm:$0xff]
        %v2127 = vld [vmem:[#allocation2 + $0x6a] sm:$0xff]
        %v2128 = vld [vmem:[#allocation2 + $0x7a] sm:$0xff]
        %v2129 = vld [vmem:[#allocation2 + $0x82] sm:$0xff]
        %v2130 = vld [vmem:[#allocation2 + $0x92] sm:$0xff]
        %v2131 = vld [vmem:[#allocation2 + $0x9a] sm:$0xff]
        %v2132 = vld [vmem:[#allocation2 + $0xaa] sm:$0xff]
        %v2133 = vld [vmem:[#allocation2 + $0xb2] sm:$0xff]
        %v2134 = vld [vmem:[#allocation2 + $0xc2] sm:$0xff]
        %v2135 = vld [vmem:[#allocation2 + $0xca] sm:$0xff]
        %v2136 = vld [vmem:[#allocation2 + $0xda] sm:$0xff]
        %v2137 = vld [vmem:[#allocation2 + $0xe2] sm:$0xff]
        %v2138 = vld [vmem:[#allocation2 + $0xf2] sm:$0xff]
        %v2139 = vld [vmem:[#allocation2 + $0xfa] sm:$0xff]
        %v2140 = vld [vmem:[#allocation2 + $0x10a] sm:$0xff]
        %v2141 = vld [vmem:[#allocation2 + $0x112] sm:$0xff]
        %v2142 = vld [vmem:[#allocation2 + $0x122] sm:$0xff]
        %v2143 = vld [vmem:[#allocation2 + $0x12a] sm:$0xff]
        %v2144 = vld [vmem:[#allocation2 + $0x13a] sm:$0xff]
        %v2145 = vld [vmem:[#allocation2 + $0x142] sm:$0xff]
        %v2146 = vld [vmem:[#allocation2 + $0x152] sm:$0xff]
        %v2147 = vld [vmem:[#allocation2 + $0x15a] sm:$0xff]
        %v2148 = vld [vmem:[#allocation2 + $0x16a] sm:$0xff]
        %v2149 = vld [vmem:[#allocation2 + $0x172] sm:$0xff]
        %v2150 = vpack.c.bf16 %v2119, %v2118
        %v2151 = vpack.c.bf16 %v2121, %v2120
        %v2152 = vpack.c.bf16 %v2123, %v2122
        %v2153 = vpack.c.bf16 %v2125, %v2124
        %v2154 = vpack.c.bf16 %v2127, %v2126
        %v2155 = vpack.c.bf16 %v2129, %v2128
        %v2156 = vpack.c.bf16 %v2131, %v2130
        %v2157 = vpack.c.bf16 %v2133, %v2132
        %v2158 = vpack.c.bf16 %v2135, %v2134
        %v2159 = vpack.c.bf16 %v2137, %v2136
        %v2160 = vpack.c.bf16 %v2139, %v2138
        %v2161 = vpack.c.bf16 %v2141, %v2140
        %v2162 = vpack.c.bf16 %v2143, %v2142
        %v2163 = vpack.c.bf16 %v2145, %v2144
        %v2164 = vpack.c.bf16 %v2147, %v2146
        %v2165 = vpack.c.bf16 %v2149, %v2148
        %v2166 = vld [vmem:[%s594] sm:$0xff]
        %v2167 = vld [vmem:[%s594 + $0x8] sm:$0xff]
        %v2168 = vld [vmem:[%s594 + $0x18] sm:$0xff]
        %v2169 = vld [vmem:[%s594 + $0x20] sm:$0xff]
        %v2170 = vld [vmem:[%s594 + $0x30] sm:$0xff]
        %v2171 = vld [vmem:[%s594 + $0x38] sm:$0xff]
        %v2172 = vld [vmem:[%s594 + $0x48] sm:$0xff]
        %v2173 = vld [vmem:[%s594 + $0x50] sm:$0xff]
        %v2174 = vld [vmem:[%s594 + $0x60] sm:$0xff]
        %v2175 = vld [vmem:[%s594 + $0x68] sm:$0xff]
        %v2176 = vld [vmem:[%s594 + $0x78] sm:$0xff]
        %v2177 = vld [vmem:[%s594 + $0x80] sm:$0xff]
        %v2178 = vld [vmem:[%s594 + $0x90] sm:$0xff]
        %v2179 = vld [vmem:[%s594 + $0x98] sm:$0xff]
        %v2180 = vld [vmem:[%s594 + $0xa8] sm:$0xff]
        %v2181 = vld [vmem:[%s594 + $0xb0] sm:$0xff]
        %v2182 = vld [vmem:[%s594 + $0xc0] sm:$0xff]
        %v2183 = vld [vmem:[%s594 + $0xc8] sm:$0xff]
        %v2184 = vld [vmem:[%s594 + $0xd8] sm:$0xff]
        %v2185 = vld [vmem:[%s594 + $0xe0] sm:$0xff]
        %v2186 = vld [vmem:[%s594 + $0xf0] sm:$0xff]
        %v2187 = vld [vmem:[%s594 + $0xf8] sm:$0xff]
        %v2188 = vld [vmem:[%s594 + $0x108] sm:$0xff]
        %v2189 = vld [vmem:[%s594 + $0x110] sm:$0xff]
        %v2190 = vld [vmem:[%s594 + $0x120] sm:$0xff]
        %v2191 = vld [vmem:[%s594 + $0x128] sm:$0xff]
        %v2192 = vld [vmem:[%s594 + $0x138] sm:$0xff]
        %v2193 = vld [vmem:[%s594 + $0x140] sm:$0xff]
        %v2194 = vld [vmem:[%s594 + $0x150] sm:$0xff]
        %v2195 = vld [vmem:[%s594 + $0x158] sm:$0xff]
        %v2196 = vld [vmem:[%s594 + $0x168] sm:$0xff]
        %v2197 = vld [vmem:[%s594 + $0x170] sm:$0xff]
        %v2198 = vpack.c.bf16 %v2167, %v2166
        %v2199 = vpack.c.bf16 %v2169, %v2168
        %v2200 = vpack.c.bf16 %v2171, %v2170
        %v2201 = vpack.c.bf16 %v2173, %v2172
        %v2202 = vpack.c.bf16 %v2175, %v2174
        %v2203 = vpack.c.bf16 %v2177, %v2176
        %v2204 = vpack.c.bf16 %v2179, %v2178
        %v2205 = vpack.c.bf16 %v2181, %v2180
        %v2206 = vpack.c.bf16 %v2183, %v2182
        %v2207 = vpack.c.bf16 %v2185, %v2184
        %v2208 = vpack.c.bf16 %v2187, %v2186
        %v2209 = vpack.c.bf16 %v2189, %v2188
        %v2210 = vpack.c.bf16 %v2191, %v2190
        %v2211 = vpack.c.bf16 %v2193, %v2192
        %v2212 = vpack.c.bf16 %v2195, %v2194
        %v2213 = vpack.c.bf16 %v2197, %v2196
        %v2214 = vld [vmem:[%s594 + $0x1] sm:$0xff]
        %v2215 = vld [vmem:[%s594 + $0x9] sm:$0xff]
        %v2216 = vld [vmem:[%s594 + $0x19] sm:$0xff]
        %v2217 = vld [vmem:[%s594 + $0x21] sm:$0xff]
        %v2218 = vld [vmem:[%s594 + $0x31] sm:$0xff]
        %v2219 = vld [vmem:[%s594 + $0x39] sm:$0xff]
        %v2220 = vld [vmem:[%s594 + $0x49] sm:$0xff]
        %v2221 = vld [vmem:[%s594 + $0x51] sm:$0xff]
        %v2222 = vld [vmem:[%s594 + $0x61] sm:$0xff]
        %v2223 = vld [vmem:[%s594 + $0x69] sm:$0xff]
        %v2224 = vld [vmem:[%s594 + $0x79] sm:$0xff]
        %v2225 = vld [vmem:[%s594 + $0x81] sm:$0xff]
        %v2226 = vld [vmem:[%s594 + $0x91] sm:$0xff]
        %v2227 = vld [vmem:[%s594 + $0x99] sm:$0xff]
        %v2228 = vld [vmem:[%s594 + $0xa9] sm:$0xff]
        %v2229 = vld [vmem:[%s594 + $0xb1] sm:$0xff]
        %v2230 = vld [vmem:[%s594 + $0xc1] sm:$0xff]
        %v2231 = vld [vmem:[%s594 + $0xc9] sm:$0xff]
        %v2232 = vld [vmem:[%s594 + $0xd9] sm:$0xff]
        %v2233 = vld [vmem:[%s594 + $0xe1] sm:$0xff]
        %v2234 = vld [vmem:[%s594 + $0xf1] sm:$0xff]
        %v2235 = vld [vmem:[%s594 + $0xf9] sm:$0xff]
        %v2236 = vld [vmem:[%s594 + $0x109] sm:$0xff]
        %v2237 = vld [vmem:[%s594 + $0x111] sm:$0xff]
        %v2238 = vld [vmem:[%s594 + $0x121] sm:$0xff]
        %v2239 = vld [vmem:[%s594 + $0x129] sm:$0xff]
        %v2240 = vld [vmem:[%s594 + $0x139] sm:$0xff]
        %v2241 = vld [vmem:[%s594 + $0x141] sm:$0xff]
        %v2242 = vld [vmem:[%s594 + $0x151] sm:$0xff]
        %v2243 = vld [vmem:[%s594 + $0x159] sm:$0xff]
        %v2244 = vld [vmem:[%s594 + $0x169] sm:$0xff]
        %v2245 = vld [vmem:[%s594 + $0x171] sm:$0xff]
        %v2246 = vpack.c.bf16 %v2215, %v2214
        %v2247 = vpack.c.bf16 %v2217, %v2216
        %v2248 = vpack.c.bf16 %v2219, %v2218
        %v2249 = vpack.c.bf16 %v2221, %v2220
        %v2250 = vpack.c.bf16 %v2223, %v2222
        %v2251 = vpack.c.bf16 %v2225, %v2224
        %v2252 = vpack.c.bf16 %v2227, %v2226
        %v2253 = vpack.c.bf16 %v2229, %v2228
        %v2254 = vpack.c.bf16 %v2231, %v2230
        %v2255 = vpack.c.bf16 %v2233, %v2232
        %v2256 = vpack.c.bf16 %v2235, %v2234
        %v2257 = vpack.c.bf16 %v2237, %v2236
        %v2258 = vpack.c.bf16 %v2239, %v2238
        %v2259 = vpack.c.bf16 %v2241, %v2240
        %v2260 = vpack.c.bf16 %v2243, %v2242
        %v2261 = vpack.c.bf16 %v2245, %v2244
        %v2262 = vld [vmem:[%s594 + $0x2] sm:$0xff]
        %v2263 = vld [vmem:[%s594 + $0xa] sm:$0xff]
        %v2264 = vld [vmem:[%s594 + $0x1a] sm:$0xff]
        %v2265 = vld [vmem:[%s594 + $0x22] sm:$0xff]
        %v2266 = vld [vmem:[%s594 + $0x32] sm:$0xff]
        %v2267 = vld [vmem:[%s594 + $0x3a] sm:$0xff]
        %v2268 = vld [vmem:[%s594 + $0x4a] sm:$0xff]
        %v2269 = vld [vmem:[%s594 + $0x52] sm:$0xff]
        %v2270 = vld [vmem:[%s594 + $0x62] sm:$0xff]
        %v2271 = vld [vmem:[%s594 + $0x6a] sm:$0xff]
        %v2272 = vld [vmem:[%s594 + $0x7a] sm:$0xff]
        %v2273 = vld [vmem:[%s594 + $0x82] sm:$0xff]
        %v2274 = vld [vmem:[%s594 + $0x92] sm:$0xff]
        %v2275 = vld [vmem:[%s594 + $0x9a] sm:$0xff]
        %v2276 = vld [vmem:[%s594 + $0xaa] sm:$0xff]
        %v2277 = vld [vmem:[%s594 + $0xb2] sm:$0xff]
        %v2278 = vld [vmem:[%s594 + $0xc2] sm:$0xff]
        %v2279 = vld [vmem:[%s594 + $0xca] sm:$0xff]
        %v2280 = vld [vmem:[%s594 + $0xda] sm:$0xff]
        %v2281 = vld [vmem:[%s594 + $0xe2] sm:$0xff]
        %v2282 = vld [vmem:[%s594 + $0xf2] sm:$0xff]
        %v2283 = vld [vmem:[%s594 + $0xfa] sm:$0xff]
        %v2284 = vld [vmem:[%s594 + $0x10a] sm:$0xff]
        %v2285 = vld [vmem:[%s594 + $0x112] sm:$0xff]
        %v2286 = vld [vmem:[%s594 + $0x122] sm:$0xff]
        %v2287 = vld [vmem:[%s594 + $0x12a] sm:$0xff]
        %v2288 = vld [vmem:[%s594 + $0x13a] sm:$0xff]
        %v2289 = vld [vmem:[%s594 + $0x142] sm:$0xff]
        %v2290 = vld [vmem:[%s594 + $0x152] sm:$0xff]
        %v2291 = vld [vmem:[%s594 + $0x15a] sm:$0xff]
        %v2292 = vld [vmem:[%s594 + $0x16a] sm:$0xff]
        %v2293 = vld [vmem:[%s594 + $0x172] sm:$0xff]
        %v2294 = vpack.c.bf16 %v2263, %v2262
        %v2295 = vpack.c.bf16 %v2265, %v2264
        %v2296 = vpack.c.bf16 %v2267, %v2266
        %v2297 = vpack.c.bf16 %v2269, %v2268
        %v2298 = vpack.c.bf16 %v2271, %v2270
        %v2299 = vpack.c.bf16 %v2273, %v2272
        %v2300 = vpack.c.bf16 %v2275, %v2274
        %v2301 = vpack.c.bf16 %v2277, %v2276
        %v2302 = vpack.c.bf16 %v2279, %v2278
        %v2303 = vpack.c.bf16 %v2281, %v2280
        %v2304 = vpack.c.bf16 %v2283, %v2282
        %v2305 = vpack.c.bf16 %v2285, %v2284
        %v2306 = vpack.c.bf16 %v2287, %v2286
        %v2307 = vpack.c.bf16 %v2289, %v2288
        %v2308 = vpack.c.bf16 %v2291, %v2290
        %v2309 = vpack.c.bf16 %v2293, %v2292
        %v2310 = vld [vmem:[%s915] sm:$0xff]
        %v2311 = vld [vmem:[%s915 + $0x8] sm:$0xff]
        %v2312 = vld [vmem:[%s915 + $0x18] sm:$0xff]
        %v2313 = vld [vmem:[%s915 + $0x20] sm:$0xff]
        %v2314 = vld [vmem:[%s915 + $0x30] sm:$0xff]
        %v2315 = vld [vmem:[%s915 + $0x38] sm:$0xff]
        %v2316 = vld [vmem:[%s915 + $0x48] sm:$0xff]
        %v2317 = vld [vmem:[%s915 + $0x50] sm:$0xff]
        %v2318 = vld [vmem:[%s915 + $0x60] sm:$0xff]
        %v2319 = vld [vmem:[%s915 + $0x68] sm:$0xff]
        %v2320 = vld [vmem:[%s915 + $0x78] sm:$0xff]
        %v2321 = vld [vmem:[%s915 + $0x80] sm:$0xff]
        %v2322 = vld [vmem:[%s915 + $0x90] sm:$0xff]
        %v2323 = vld [vmem:[%s915 + $0x98] sm:$0xff]
        %v2324 = vld [vmem:[%s915 + $0xa8] sm:$0xff]
        %v2325 = vld [vmem:[%s915 + $0xb0] sm:$0xff]
        %v2326 = vld [vmem:[%s915 + $0xc0] sm:$0xff]
        %v2327 = vld [vmem:[%s915 + $0xc8] sm:$0xff]
        %v2328 = vld [vmem:[%s915 + $0xd8] sm:$0xff]
        %v2329 = vld [vmem:[%s915 + $0xe0] sm:$0xff]
        %v2330 = vld [vmem:[%s915 + $0xf0] sm:$0xff]
        %v2331 = vld [vmem:[%s915 + $0xf8] sm:$0xff]
        %v2332 = vld [vmem:[%s915 + $0x108] sm:$0xff]
        %v2333 = vld [vmem:[%s915 + $0x110] sm:$0xff]
        %v2334 = vld [vmem:[%s915 + $0x120] sm:$0xff]
        %v2335 = vld [vmem:[%s915 + $0x128] sm:$0xff]
        %v2336 = vld [vmem:[%s915 + $0x138] sm:$0xff]
        %v2337 = vld [vmem:[%s915 + $0x140] sm:$0xff]
        %v2338 = vld [vmem:[%s915 + $0x150] sm:$0xff]
        %v2339 = vld [vmem:[%s915 + $0x158] sm:$0xff]
        %v2340 = vld [vmem:[%s915 + $0x168] sm:$0xff]
        %v2341 = vld [vmem:[%s915 + $0x170] sm:$0xff]
        %v2342 = vpack.c.bf16 %v2311, %v2310
        %v2343 = vpack.c.bf16 %v2313, %v2312
        %v2344 = vpack.c.bf16 %v2315, %v2314
        %v2345 = vpack.c.bf16 %v2317, %v2316
        %v2346 = vpack.c.bf16 %v2319, %v2318
        %v2347 = vpack.c.bf16 %v2321, %v2320
        %v2348 = vpack.c.bf16 %v2323, %v2322
        %v2349 = vpack.c.bf16 %v2325, %v2324
        %v2350 = vpack.c.bf16 %v2327, %v2326
        %v2351 = vpack.c.bf16 %v2329, %v2328
        %v2352 = vpack.c.bf16 %v2331, %v2330
        %v2353 = vpack.c.bf16 %v2333, %v2332
        %v2354 = vpack.c.bf16 %v2335, %v2334
        %v2355 = vpack.c.bf16 %v2337, %v2336
        %v2356 = vpack.c.bf16 %v2339, %v2338
        %v2357 = vpack.c.bf16 %v2341, %v2340
        %v2358 = vld [vmem:[%s915 + $0x1] sm:$0xff]
        %v2359 = vld [vmem:[%s915 + $0x9] sm:$0xff]
        %v2360 = vld [vmem:[%s915 + $0x19] sm:$0xff]
        %v2361 = vld [vmem:[%s915 + $0x21] sm:$0xff]
        %v2362 = vld [vmem:[%s915 + $0x31] sm:$0xff]
        %v2363 = vld [vmem:[%s915 + $0x39] sm:$0xff]
        %v2364 = vld [vmem:[%s915 + $0x49] sm:$0xff]
        %v2365 = vld [vmem:[%s915 + $0x51] sm:$0xff]
        %v2366 = vld [vmem:[%s915 + $0x61] sm:$0xff]
        %v2367 = vld [vmem:[%s915 + $0x69] sm:$0xff]
        %v2368 = vld [vmem:[%s915 + $0x79] sm:$0xff]
        %v2369 = vld [vmem:[%s915 + $0x81] sm:$0xff]
        %v2370 = vld [vmem:[%s915 + $0x91] sm:$0xff]
        %v2371 = vld [vmem:[%s915 + $0x99] sm:$0xff]
        %v2372 = vld [vmem:[%s915 + $0xa9] sm:$0xff]
        %v2373 = vld [vmem:[%s915 + $0xb1] sm:$0xff]
        %v2374 = vld [vmem:[%s915 + $0xc1] sm:$0xff]
        %v2375 = vld [vmem:[%s915 + $0xc9] sm:$0xff]
        %v2376 = vld [vmem:[%s915 + $0xd9] sm:$0xff]
        %v2377 = vld [vmem:[%s915 + $0xe1] sm:$0xff]
        %v2378 = vld [vmem:[%s915 + $0xf1] sm:$0xff]
        %v2379 = vld [vmem:[%s915 + $0xf9] sm:$0xff]
        %v2380 = vld [vmem:[%s915 + $0x109] sm:$0xff]
        %v2381 = vld [vmem:[%s915 + $0x111] sm:$0xff]
        %v2382 = vld [vmem:[%s915 + $0x121] sm:$0xff]
        %v2383 = vld [vmem:[%s915 + $0x129] sm:$0xff]
        %v2384 = vld [vmem:[%s915 + $0x139] sm:$0xff]
        %v2385 = vld [vmem:[%s915 + $0x141] sm:$0xff]
        %v2386 = vld [vmem:[%s915 + $0x151] sm:$0xff]
        %v2387 = vld [vmem:[%s915 + $0x159] sm:$0xff]
        %v2388 = vld [vmem:[%s915 + $0x169] sm:$0xff]
        %v2389 = vld [vmem:[%s915 + $0x171] sm:$0xff]
        %v2390 = vpack.c.bf16 %v2359, %v2358
        %v2391 = vpack.c.bf16 %v2361, %v2360
        %v2392 = vpack.c.bf16 %v2363, %v2362
        %v2393 = vpack.c.bf16 %v2365, %v2364
        %v2394 = vpack.c.bf16 %v2367, %v2366
        %v2395 = vpack.c.bf16 %v2369, %v2368
        %v2396 = vpack.c.bf16 %v2371, %v2370
        %v2397 = vpack.c.bf16 %v2373, %v2372
        %v2398 = vpack.c.bf16 %v2375, %v2374
        %v2399 = vpack.c.bf16 %v2377, %v2376
        %v2400 = vpack.c.bf16 %v2379, %v2378
        %v2401 = vpack.c.bf16 %v2381, %v2380
        %v2402 = vpack.c.bf16 %v2383, %v2382
        %v2403 = vpack.c.bf16 %v2385, %v2384
        %v2404 = vpack.c.bf16 %v2387, %v2386
        %v2405 = vpack.c.bf16 %v2389, %v2388
        %v2406 = vld [vmem:[%s915 + $0x2] sm:$0xff]
        %v2407 = vld [vmem:[%s915 + $0xa] sm:$0xff]
        %v2408 = vld [vmem:[%s915 + $0x1a] sm:$0xff]
        %v2409 = vld [vmem:[%s915 + $0x22] sm:$0xff]
        %v2410 = vld [vmem:[%s915 + $0x32] sm:$0xff]
        %v2411 = vld [vmem:[%s915 + $0x3a] sm:$0xff]
        %v2412 = vld [vmem:[%s915 + $0x4a] sm:$0xff]
        %v2413 = vld [vmem:[%s915 + $0x52] sm:$0xff]
        %v2414 = vld [vmem:[%s915 + $0x62] sm:$0xff]
        %v2415 = vld [vmem:[%s915 + $0x6a] sm:$0xff]
        %v2416 = vld [vmem:[%s915 + $0x7a] sm:$0xff]
        %v2417 = vld [vmem:[%s915 + $0x82] sm:$0xff]
        %v2418 = vld [vmem:[%s915 + $0x92] sm:$0xff]
        %v2419 = vld [vmem:[%s915 + $0x9a] sm:$0xff]
        %v2420 = vld [vmem:[%s915 + $0xaa] sm:$0xff]
        %v2421 = vld [vmem:[%s915 + $0xb2] sm:$0xff]
        %v2422 = vld [vmem:[%s915 + $0xc2] sm:$0xff]
        %v2423 = vld [vmem:[%s915 + $0xca] sm:$0xff]
        %v2424 = vld [vmem:[%s915 + $0xda] sm:$0xff]
        %v2425 = vld [vmem:[%s915 + $0xe2] sm:$0xff]
        %v2426 = vld [vmem:[%s915 + $0xf2] sm:$0xff]
        %v2427 = vld [vmem:[%s915 + $0xfa] sm:$0xff]
        %v2428 = vld [vmem:[%s915 + $0x10a] sm:$0xff]
        %v2429 = vld [vmem:[%s915 + $0x112] sm:$0xff]
        %v2430 = vld [vmem:[%s915 + $0x122] sm:$0xff]
        %v2431 = vld [vmem:[%s915 + $0x12a] sm:$0xff]
        %v2432 = vld [vmem:[%s915 + $0x13a] sm:$0xff]
        %v2433 = vld [vmem:[%s915 + $0x142] sm:$0xff]
        %v2434 = vld [vmem:[%s915 + $0x152] sm:$0xff]
        %v2435 = vld [vmem:[%s915 + $0x15a] sm:$0xff]
        %v2436 = vld [vmem:[%s915 + $0x16a] sm:$0xff]
        %v2437 = vld [vmem:[%s915 + $0x172] sm:$0xff]
        %v2438 = vpack.c.bf16 %v2407, %v2406
        %v2439 = vpack.c.bf16 %v2409, %v2408
        %v2440 = vpack.c.bf16 %v2411, %v2410
        %v2441 = vpack.c.bf16 %v2413, %v2412
        %v2442 = vpack.c.bf16 %v2415, %v2414
        %v2443 = vpack.c.bf16 %v2417, %v2416
        %v2444 = vpack.c.bf16 %v2419, %v2418
        %v2445 = vpack.c.bf16 %v2421, %v2420
        %v2446 = vpack.c.bf16 %v2423, %v2422
        %v2447 = vpack.c.bf16 %v2425, %v2424
        %v2448 = vpack.c.bf16 %v2427, %v2426
        %v2449 = vpack.c.bf16 %v2429, %v2428
        %v2450 = vpack.c.bf16 %v2431, %v2430
        %v2451 = vpack.c.bf16 %v2433, %v2432
        %v2452 = vpack.c.bf16 %v2435, %v2434
        %v2453 = vpack.c.bf16 %v2437, %v2436
        %2470 = vrot.lane.b32.xlu0 %v2102, 4
        %v2471 = vpop.permute.xlu0 %2470
        %2472 = vrot.lane.b32.xlu0 %v2103, 4
        %v2473 = vpop.permute.xlu0 %2472
        %2474 = vrot.lane.b32.xlu0 %v2104, 4
        %v2475 = vpop.permute.xlu0 %2474
        %2476 = vrot.lane.b32.xlu0 %v2105, 4
        %v2477 = vpop.permute.xlu0 %2476
        %2478 = vrot.lane.b32.xlu0 %v2106, 4
        %v2479 = vpop.permute.xlu0 %2478
        %2480 = vrot.lane.b32.xlu0 %v2107, 4
        %v2481 = vpop.permute.xlu0 %2480
        %2482 = vrot.lane.b32.xlu0 %v2108, 4
        %v2483 = vpop.permute.xlu0 %2482
        %2484 = vrot.lane.b32.xlu0 %v2109, 4
        %v2485 = vpop.permute.xlu0 %2484
        %2486 = vrot.lane.b32.xlu0 %v2110, 4
        %v2487 = vpop.permute.xlu0 %2486
        %2488 = vrot.lane.b32.xlu0 %v2111, 4
        %v2489 = vpop.permute.xlu0 %2488
        %2490 = vrot.lane.b32.xlu0 %v2112, 4
        %v2491 = vpop.permute.xlu0 %2490
        %2492 = vrot.lane.b32.xlu0 %v2113, 4
        %v2493 = vpop.permute.xlu0 %2492
        %2494 = vrot.lane.b32.xlu0 %v2114, 4
        %v2495 = vpop.permute.xlu0 %2494
        %2496 = vrot.lane.b32.xlu0 %v2115, 4
        %v2497 = vpop.permute.xlu0 %2496
        %2498 = vrot.lane.b32.xlu0 %v2116, 4
        %v2499 = vpop.permute.xlu0 %2498
        %2500 = vrot.lane.b32.xlu0 %v2117, 4
        %v2501 = vpop.permute.xlu0 %2500
        %2518 = vrot.lane.b32.xlu0 %v2150, 8
        %v2519 = vpop.permute.xlu0 %2518
        %2520 = vrot.lane.b32.xlu0 %v2151, 8
        %v2521 = vpop.permute.xlu0 %2520
        %2522 = vrot.lane.b32.xlu0 %v2152, 8
        %v2523 = vpop.permute.xlu0 %2522
        %2524 = vrot.lane.b32.xlu0 %v2153, 8
        %v2525 = vpop.permute.xlu0 %2524
        %2526 = vrot.lane.b32.xlu0 %v2154, 8
        %v2527 = vpop.permute.xlu0 %2526
        %2528 = vrot.lane.b32.xlu0 %v2155, 8
        %v2529 = vpop.permute.xlu0 %2528
        %2530 = vrot.lane.b32.xlu0 %v2156, 8
        %v2531 = vpop.permute.xlu0 %2530
        %2532 = vrot.lane.b32.xlu0 %v2157, 8
        %v2533 = vpop.permute.xlu0 %2532
        %2534 = vrot.lane.b32.xlu0 %v2158, 8
        %v2535 = vpop.permute.xlu0 %2534
        %2536 = vrot.lane.b32.xlu0 %v2159, 8
        %v2537 = vpop.permute.xlu0 %2536
        %2538 = vrot.lane.b32.xlu0 %v2160, 8
        %v2539 = vpop.permute.xlu0 %2538
        %2540 = vrot.lane.b32.xlu0 %v2161, 8
        %v2541 = vpop.permute.xlu0 %2540
        %2542 = vrot.lane.b32.xlu0 %v2162, 8
        %v2543 = vpop.permute.xlu0 %2542
        %2544 = vrot.lane.b32.xlu0 %v2163, 8
        %v2545 = vpop.permute.xlu0 %2544
        %2546 = vrot.lane.b32.xlu0 %v2164, 8
        %v2547 = vpop.permute.xlu0 %2546
        %2548 = vrot.lane.b32.xlu0 %v2165, 8
        %v2549 = vpop.permute.xlu0 %2548
        %2566 = vrot.lane.b32.xlu0 %v2198, 12
        %v2567 = vpop.permute.xlu0 %2566
        %2568 = vrot.lane.b32.xlu0 %v2199, 12
        %v2569 = vpop.permute.xlu0 %2568
        %2570 = vrot.lane.b32.xlu0 %v2200, 12
        %v2571 = vpop.permute.xlu0 %2570
        %2572 = vrot.lane.b32.xlu0 %v2201, 12
        %v2573 = vpop.permute.xlu0 %2572
        %2574 = vrot.lane.b32.xlu0 %v2202, 12
        %v2575 = vpop.permute.xlu0 %2574
        %2576 = vrot.lane.b32.xlu0 %v2203, 12
        %v2577 = vpop.permute.xlu0 %2576
        %2578 = vrot.lane.b32.xlu0 %v2204, 12
        %v2579 = vpop.permute.xlu0 %2578
        %2580 = vrot.lane.b32.xlu0 %v2205, 12
        %v2581 = vpop.permute.xlu0 %2580
        %2582 = vrot.lane.b32.xlu0 %v2206, 12
        %v2583 = vpop.permute.xlu0 %2582
        %2584 = vrot.lane.b32.xlu0 %v2207, 12
        %v2585 = vpop.permute.xlu0 %2584
        %2586 = vrot.lane.b32.xlu0 %v2208, 12
        %v2587 = vpop.permute.xlu0 %2586
        %2588 = vrot.lane.b32.xlu0 %v2209, 12
        %v2589 = vpop.permute.xlu0 %2588
        %2590 = vrot.lane.b32.xlu0 %v2210, 12
        %v2591 = vpop.permute.xlu0 %2590
        %2592 = vrot.lane.b32.xlu0 %v2211, 12
        %v2593 = vpop.permute.xlu0 %2592
        %2594 = vrot.lane.b32.xlu0 %v2212, 12
        %v2595 = vpop.permute.xlu0 %2594
        %2596 = vrot.lane.b32.xlu0 %v2213, 12
        %v2597 = vpop.permute.xlu0 %2596
        %2614 = vrot.lane.b32.xlu0 %v2246, 16
        %v2615 = vpop.permute.xlu0 %2614
        %2616 = vrot.lane.b32.xlu0 %v2247, 16
        %v2617 = vpop.permute.xlu0 %2616
        %2618 = vrot.lane.b32.xlu0 %v2248, 16
        %v2619 = vpop.permute.xlu0 %2618
        %2620 = vrot.lane.b32.xlu0 %v2249, 16
        %v2621 = vpop.permute.xlu0 %2620
        %2622 = vrot.lane.b32.xlu0 %v2250, 16
        %v2623 = vpop.permute.xlu0 %2622
        %2624 = vrot.lane.b32.xlu0 %v2251, 16
        %v2625 = vpop.permute.xlu0 %2624
        %2626 = vrot.lane.b32.xlu0 %v2252, 16
        %v2627 = vpop.permute.xlu0 %2626
        %2628 = vrot.lane.b32.xlu0 %v2253, 16
        %v2629 = vpop.permute.xlu0 %2628
        %2630 = vrot.lane.b32.xlu0 %v2254, 16
        %v2631 = vpop.permute.xlu0 %2630
        %2632 = vrot.lane.b32.xlu0 %v2255, 16
        %v2633 = vpop.permute.xlu0 %2632
        %2634 = vrot.lane.b32.xlu0 %v2256, 16
        %v2635 = vpop.permute.xlu0 %2634
        %2636 = vrot.lane.b32.xlu0 %v2257, 16
        %v2637 = vpop.permute.xlu0 %2636
        %2638 = vrot.lane.b32.xlu0 %v2258, 16
        %v2639 = vpop.permute.xlu0 %2638
        %2640 = vrot.lane.b32.xlu0 %v2259, 16
        %v2641 = vpop.permute.xlu0 %2640
        %2642 = vrot.lane.b32.xlu0 %v2260, 16
        %v2643 = vpop.permute.xlu0 %2642
        %2644 = vrot.lane.b32.xlu0 %v2261, 16
        %v2645 = vpop.permute.xlu0 %2644
        %2662 = vrot.lane.b32.xlu0 %v2294, 20
        %v2663 = vpop.permute.xlu0 %2662
        %2664 = vrot.lane.b32.xlu0 %v2295, 20
        %v2665 = vpop.permute.xlu0 %2664
        %2666 = vrot.lane.b32.xlu0 %v2296, 20
        %v2667 = vpop.permute.xlu0 %2666
        %2668 = vrot.lane.b32.xlu0 %v2297, 20
        %v2669 = vpop.permute.xlu0 %2668
        %2670 = vrot.lane.b32.xlu0 %v2298, 20
        %v2671 = vpop.permute.xlu0 %2670
        %2672 = vrot.lane.b32.xlu0 %v2299, 20
        %v2673 = vpop.permute.xlu0 %2672
        %2674 = vrot.lane.b32.xlu0 %v2300, 20
        %v2675 = vpop.permute.xlu0 %2674
        %2676 = vrot.lane.b32.xlu0 %v2301, 20
        %v2677 = vpop.permute.xlu0 %2676
        %2678 = vrot.lane.b32.xlu0 %v2302, 20
        %v2679 = vpop.permute.xlu0 %2678
        %2680 = vrot.lane.b32.xlu0 %v2303, 20
        %v2681 = vpop.permute.xlu0 %2680
        %2682 = vrot.lane.b32.xlu0 %v2304, 20
        %v2683 = vpop.permute.xlu0 %2682
        %2684 = vrot.lane.b32.xlu0 %v2305, 20
        %v2685 = vpop.permute.xlu0 %2684
        %2686 = vrot.lane.b32.xlu0 %v2306, 20
        %v2687 = vpop.permute.xlu0 %2686
        %2688 = vrot.lane.b32.xlu0 %v2307, 20
        %v2689 = vpop.permute.xlu0 %2688
        %2690 = vrot.lane.b32.xlu0 %v2308, 20
        %v2691 = vpop.permute.xlu0 %2690
        %2692 = vrot.lane.b32.xlu0 %v2309, 20
        %v2693 = vpop.permute.xlu0 %2692
        %2710 = vrot.lane.b32.xlu0 %v2342, 24
        %v2711 = vpop.permute.xlu0 %2710
        %2712 = vrot.lane.b32.xlu0 %v2343, 24
        %v2713 = vpop.permute.xlu0 %2712
        %2714 = vrot.lane.b32.xlu0 %v2344, 24
        %v2715 = vpop.permute.xlu0 %2714
        %2716 = vrot.lane.b32.xlu0 %v2345, 24
        %v2717 = vpop.permute.xlu0 %2716
        %2718 = vrot.lane.b32.xlu0 %v2346, 24
        %v2719 = vpop.permute.xlu0 %2718
        %2720 = vrot.lane.b32.xlu0 %v2347, 24
        %v2721 = vpop.permute.xlu0 %2720
        %2722 = vrot.lane.b32.xlu0 %v2348, 24
        %v2723 = vpop.permute.xlu0 %2722
        %2724 = vrot.lane.b32.xlu0 %v2349, 24
        %v2725 = vpop.permute.xlu0 %2724
        %2726 = vrot.lane.b32.xlu0 %v2350, 24
        %v2727 = vpop.permute.xlu0 %2726
        %2728 = vrot.lane.b32.xlu0 %v2351, 24
        %v2729 = vpop.permute.xlu0 %2728
        %2730 = vrot.lane.b32.xlu0 %v2352, 24
        %v2731 = vpop.permute.xlu0 %2730
        %2732 = vrot.lane.b32.xlu0 %v2353, 24
        %v2733 = vpop.permute.xlu0 %2732
        %2734 = vrot.lane.b32.xlu0 %v2354, 24
        %v2735 = vpop.permute.xlu0 %2734
        %2736 = vrot.lane.b32.xlu0 %v2355, 24
        %v2737 = vpop.permute.xlu0 %2736
        %2738 = vrot.lane.b32.xlu0 %v2356, 24
        %v2739 = vpop.permute.xlu0 %2738
        %2740 = vrot.lane.b32.xlu0 %v2357, 24
        %v2741 = vpop.permute.xlu0 %2740
        %2758 = vrot.lane.b32.xlu0 %v2390, 28
        %v2759 = vpop.permute.xlu0 %2758
        %2760 = vrot.lane.b32.xlu0 %v2391, 28
        %v2761 = vpop.permute.xlu0 %2760
        %2762 = vrot.lane.b32.xlu0 %v2392, 28
        %v2763 = vpop.permute.xlu0 %2762
        %2764 = vrot.lane.b32.xlu0 %v2393, 28
        %v2765 = vpop.permute.xlu0 %2764
        %2766 = vrot.lane.b32.xlu0 %v2394, 28
        %v2767 = vpop.permute.xlu0 %2766
        %2768 = vrot.lane.b32.xlu0 %v2395, 28
        %v2769 = vpop.permute.xlu0 %2768
        %2770 = vrot.lane.b32.xlu0 %v2396, 28
        %v2771 = vpop.permute.xlu0 %2770
        %2772 = vrot.lane.b32.xlu0 %v2397, 28
        %v2773 = vpop.permute.xlu0 %2772
        %2774 = vrot.lane.b32.xlu0 %v2398, 28
        %v2775 = vpop.permute.xlu0 %2774
        %2776 = vrot.lane.b32.xlu0 %v2399, 28
        %v2777 = vpop.permute.xlu0 %2776
        %2778 = vrot.lane.b32.xlu0 %v2400, 28
        %v2779 = vpop.permute.xlu0 %2778
        %2780 = vrot.lane.b32.xlu0 %v2401, 28
        %v2781 = vpop.permute.xlu0 %2780
        %2782 = vrot.lane.b32.xlu0 %v2402, 28
        %v2783 = vpop.permute.xlu0 %2782
        %2784 = vrot.lane.b32.xlu0 %v2403, 28
        %v2785 = vpop.permute.xlu0 %2784
        %2786 = vrot.lane.b32.xlu0 %v2404, 28
        %v2787 = vpop.permute.xlu0 %2786
        %2788 = vrot.lane.b32.xlu0 %v2405, 28
        %v2789 = vpop.permute.xlu0 %2788
        %2806 = vrot.lane.b32.xlu0 %v2438, 32
        %v2807 = vpop.permute.xlu0 %2806
        %2808 = vrot.lane.b32.xlu0 %v2439, 32
        %v2809 = vpop.permute.xlu0 %2808
        %2810 = vrot.lane.b32.xlu0 %v2440, 32
        %v2811 = vpop.permute.xlu0 %2810
        %2812 = vrot.lane.b32.xlu0 %v2441, 32
        %v2813 = vpop.permute.xlu0 %2812
        %2814 = vrot.lane.b32.xlu0 %v2442, 32
        %v2815 = vpop.permute.xlu0 %2814
        %2816 = vrot.lane.b32.xlu0 %v2443, 32
        %v2817 = vpop.permute.xlu0 %2816
        %2818 = vrot.lane.b32.xlu0 %v2444, 32
        %v2819 = vpop.permute.xlu0 %2818
        %2820 = vrot.lane.b32.xlu0 %v2445, 32
        %v2821 = vpop.permute.xlu0 %2820
        %2822 = vrot.lane.b32.xlu0 %v2446, 32
        %v2823 = vpop.permute.xlu0 %2822
        %2824 = vrot.lane.b32.xlu0 %v2447, 32
        %v2825 = vpop.permute.xlu0 %2824
        %2826 = vrot.lane.b32.xlu0 %v2448, 32
        %v2827 = vpop.permute.xlu0 %2826
        %2828 = vrot.lane.b32.xlu0 %v2449, 32
        %v2829 = vpop.permute.xlu0 %2828
        %2830 = vrot.lane.b32.xlu0 %v2450, 32
        %v2831 = vpop.permute.xlu0 %2830
        %2832 = vrot.lane.b32.xlu0 %v2451, 32
        %v2833 = vpop.permute.xlu0 %2832
        %2834 = vrot.lane.b32.xlu0 %v2452, 32
        %v2835 = vpop.permute.xlu0 %2834
        %2836 = vrot.lane.b32.xlu0 %v2453, 32
        %v2837 = vpop.permute.xlu0 %2836
        %v2840 = vsel %vm548, %v2054, %v2471
        %v2843 = vsel %vm548, %v2055, %v2473
        %v2846 = vsel %vm548, %v2056, %v2475
        %v2849 = vsel %vm548, %v2057, %v2477
        %v2852 = vsel %vm548, %v2058, %v2479
        %v2855 = vsel %vm548, %v2059, %v2481
        %v2858 = vsel %vm548, %v2060, %v2483
        %v2861 = vsel %vm548, %v2061, %v2485
        %v2864 = vsel %vm548, %v2062, %v2487
        %v2867 = vsel %vm548, %v2063, %v2489
        %v2870 = vsel %vm548, %v2064, %v2491
        %v2873 = vsel %vm548, %v2065, %v2493
        %v2876 = vsel %vm548, %v2066, %v2495
        %v2879 = vsel %vm548, %v2067, %v2497
        %v2882 = vsel %vm548, %v2068, %v2499
        %v2885 = vsel %vm548, %v2069, %v2501
        %v2887 = vsel %vm1492, %v2840, %v2519
        %v2889 = vsel %vm1492, %v2843, %v2521
        %v2891 = vsel %vm1492, %v2846, %v2523
        %v2893 = vsel %vm1492, %v2849, %v2525
        %v2895 = vsel %vm1492, %v2852, %v2527
        %v2897 = vsel %vm1492, %v2855, %v2529
        %v2899 = vsel %vm1492, %v2858, %v2531
        %v2901 = vsel %vm1492, %v2861, %v2533
        %v2903 = vsel %vm1492, %v2864, %v2535
        %v2905 = vsel %vm1492, %v2867, %v2537
        %v2907 = vsel %vm1492, %v2870, %v2539
        %v2909 = vsel %vm1492, %v2873, %v2541
        %v2911 = vsel %vm1492, %v2876, %v2543
        %v2913 = vsel %vm1492, %v2879, %v2545
        %v2915 = vsel %vm1492, %v2882, %v2547
        %v2917 = vsel %vm1492, %v2885, %v2549
        %v2919 = vsel %vm1525, %v2887, %v2567
        %v2921 = vsel %vm1525, %v2889, %v2569
        %v2923 = vsel %vm1525, %v2891, %v2571
        %v2925 = vsel %vm1525, %v2893, %v2573
        %v2927 = vsel %vm1525, %v2895, %v2575
        %v2929 = vsel %vm1525, %v2897, %v2577
        %v2931 = vsel %vm1525, %v2899, %v2579
        %v2933 = vsel %vm1525, %v2901, %v2581
        %v2935 = vsel %vm1525, %v2903, %v2583
        %v2937 = vsel %vm1525, %v2905, %v2585
        %v2939 = vsel %vm1525, %v2907, %v2587
        %v2941 = vsel %vm1525, %v2909, %v2589
        %v2943 = vsel %vm1525, %v2911, %v2591
        %v2945 = vsel %vm1525, %v2913, %v2593
        %v2947 = vsel %vm1525, %v2915, %v2595
        %v2949 = vsel %vm1525, %v2917, %v2597
        %v2951 = vsel %vm1558, %v2919, %v2615
        %v2953 = vsel %vm1558, %v2921, %v2617
        %v2955 = vsel %vm1558, %v2923, %v2619
        %v2957 = vsel %vm1558, %v2925, %v2621
        %v2959 = vsel %vm1558, %v2927, %v2623
        %v2961 = vsel %vm1558, %v2929, %v2625
        %v2963 = vsel %vm1558, %v2931, %v2627
        %v2965 = vsel %vm1558, %v2933, %v2629
        %v2967 = vsel %vm1558, %v2935, %v2631
        %v2969 = vsel %vm1558, %v2937, %v2633
        %v2971 = vsel %vm1558, %v2939, %v2635
        %v2973 = vsel %vm1558, %v2941, %v2637
        %v2975 = vsel %vm1558, %v2943, %v2639
        %v2977 = vsel %vm1558, %v2945, %v2641
        %v2979 = vsel %vm1558, %v2947, %v2643
        %v2981 = vsel %vm1558, %v2949, %v2645
        %v2983 = vsel %vm1591, %v2951, %v2663
        %v2985 = vsel %vm1591, %v2953, %v2665
        %v2987 = vsel %vm1591, %v2955, %v2667
        %v2989 = vsel %vm1591, %v2957, %v2669
        %v2991 = vsel %vm1591, %v2959, %v2671
        %v2993 = vsel %vm1591, %v2961, %v2673
        %v2995 = vsel %vm1591, %v2963, %v2675
        %v2997 = vsel %vm1591, %v2965, %v2677
        %v2999 = vsel %vm1591, %v2967, %v2679
        %v3001 = vsel %vm1591, %v2969, %v2681
        %v3003 = vsel %vm1591, %v2971, %v2683
        %v3005 = vsel %vm1591, %v2973, %v2685
        %v3007 = vsel %vm1591, %v2975, %v2687
        %v3009 = vsel %vm1591, %v2977, %v2689
        %v3011 = vsel %vm1591, %v2979, %v2691
        %v3013 = vsel %vm1591, %v2981, %v2693
        %v3015 = vsel %vm1624, %v2983, %v2711
        %v3017 = vsel %vm1624, %v2985, %v2713
        %v3019 = vsel %vm1624, %v2987, %v2715
        %v3021 = vsel %vm1624, %v2989, %v2717
        %v3023 = vsel %vm1624, %v2991, %v2719
        %v3025 = vsel %vm1624, %v2993, %v2721
        %v3027 = vsel %vm1624, %v2995, %v2723
        %v3029 = vsel %vm1624, %v2997, %v2725
        %v3031 = vsel %vm1624, %v2999, %v2727
        %v3033 = vsel %vm1624, %v3001, %v2729
        %v3035 = vsel %vm1624, %v3003, %v2731
        %v3037 = vsel %vm1624, %v3005, %v2733
        %v3039 = vsel %vm1624, %v3007, %v2735
        %v3041 = vsel %vm1624, %v3009, %v2737
        %v3043 = vsel %vm1624, %v3011, %v2739
        %v3045 = vsel %vm1624, %v3013, %v2741
        %v3047 = vsel %vm1657, %v3015, %v2759
        %v3049 = vsel %vm1657, %v3017, %v2761
        %v3051 = vsel %vm1657, %v3019, %v2763
        %v3053 = vsel %vm1657, %v3021, %v2765
        %v3055 = vsel %vm1657, %v3023, %v2767
        %v3057 = vsel %vm1657, %v3025, %v2769
        %v3059 = vsel %vm1657, %v3027, %v2771
        %v3061 = vsel %vm1657, %v3029, %v2773
        %v3063 = vsel %vm1657, %v3031, %v2775
        %v3065 = vsel %vm1657, %v3033, %v2777
        %v3067 = vsel %vm1657, %v3035, %v2779
        %v3069 = vsel %vm1657, %v3037, %v2781
        %v3071 = vsel %vm1657, %v3039, %v2783
        %v3073 = vsel %vm1657, %v3041, %v2785
        %v3075 = vsel %vm1657, %v3043, %v2787
        %v3077 = vsel %vm1657, %v3045, %v2789
        %v3079 = vsel %vm1690, %v3047, %v2807
        %v3081 = vsel %vm1690, %v3049, %v2809
        %v3083 = vsel %vm1690, %v3051, %v2811
        %v3085 = vsel %vm1690, %v3053, %v2813
        %v3087 = vsel %vm1690, %v3055, %v2815
        %v3089 = vsel %vm1690, %v3057, %v2817
        %v3091 = vsel %vm1690, %v3059, %v2819
        %v3093 = vsel %vm1690, %v3061, %v2821
        %v3095 = vsel %vm1690, %v3063, %v2823
        %v3097 = vsel %vm1690, %v3065, %v2825
        %v3099 = vsel %vm1690, %v3067, %v2827
        %v3101 = vsel %vm1690, %v3069, %v2829
        %v3103 = vsel %vm1690, %v3071, %v2831
        %v3105 = vsel %vm1690, %v3073, %v2833
        %v3107 = vsel %vm1690, %v3075, %v2835
        %v3109 = vsel %vm1690, %v3077, %v2837
        %v3110 = vld [vmem:[#allocation11] sm:$0xf]
        %v3111 = vld [vmem:[#allocation11 + $0x4] sm:$0xf]
        %v3112 = vld [vmem:[#allocation11 + $0x8] sm:$0xf]
        %v3113 = vld [vmem:[#allocation11 + $0xc] sm:$0xf]
        %v3114 = vld [vmem:[#allocation11 + $0x10] sm:$0x3]
        %v3115 = vld [vmem:[#allocation12] sm:$0x1]
        %v3117 = vlaneseq
        %v3118 = vshrl.u32 %v3117, 7
        %v3119 = vsub.s32 0, %v3118
        %v3120 = vrot.slane %v3115, %v3119
        %v3127 = vunpack.c.l.b16 %v3110
        %v3128 = vunpack.c.l.b16 %v3111
        %v3129 = vunpack.c.l.b16 %v3112
        %v3130 = vunpack.c.l.b16 %v3113
        %v3131 = vunpack.c.l.b16 %v3114
        %v3132 = vpack.c.b16 %v3128, %v3127
        %v3133 = vpack.c.b16 %v3130, %v3129
        %v3134 = vpack.c.b16 %v3131, %v3131
        %v3137 = vsel %vm1750, %v3079, 0
        %v3139 = vsel %vm1750, %v3081, 0
        %v3141 = vsel %vm1750, %v3083, 0
        %v3143 = vsel %vm1750, %v3085, 0
        %v3145 = vsel %vm1750, %v3087, 0
        %v3147 = vsel %vm1750, %v3089, 0
        %v3149 = vsel %vm1750, %v3091, 0
        %v3151 = vsel %vm1750, %v3093, 0
        %v3153 = vsel %vm1750, %v3095, 0
        %v3155 = vsel %vm1750, %v3097, 0
        %v3157 = vsel %vm1750, %v3099, 0
        %v3159 = vsel %vm1750, %v3101, 0
        %v3161 = vsel %vm1750, %v3103, 0
        %v3163 = vsel %vm1750, %v3105, 0
        %v3165 = vsel %vm1750, %v3107, 0
        %v3167 = vsel %vm1750, %v3109, 0
        %v3170 = vsel %vm1783, %v3134, 0
        %3172 = vmatprep.subr.bf16.mxu0 0
        %3173 = vmatpush1.bf16.msra.mxu0 %v3132
        %3174 = vmatprep.subr.bf16.mxu0 0
        %3175 = vmatpush1.bf16.msra.mxu0 %v3133
        %3176 = vmatprep.subr.bf16.mxu0 0
        %3177 = vmatpush1.bf16.msra.mxu0 %v3170
        %3178 = vmatprep.subr.bf16.mxu0 0
        %3179 = vmatpush1.bf16.msra.mxu0 0
        %3180 = vmatprep.subr.bf16.mxu0 0
        %3181 = vmatpush1.bf16.msra.mxu0 0
        %3182 = vmatprep.subr.bf16.mxu0 0
        %3183 = vmatpush1.bf16.msra.mxu0 0
        %3184 = vmatprep.subr.bf16.mxu0 0
        %3185 = vmatpush1.bf16.msra.mxu0 0
        %3186 = vmatprep.subr.bf16.mxu0 0
        %3187 = vmatpush1.bf16.msra.mxu0 0
        %3188 = vmatprep.subr.bf16.mxu0 0
        %3189 = vmatpush1.bf16.msra.mxu0 0
        %3190 = vmatprep.subr.bf16.mxu0 0
        %3191 = vmatpush1.bf16.msra.mxu0 0
        %3192 = vmatprep.subr.bf16.mxu0 0
        %3193 = vmatpush1.bf16.msra.mxu0 0
        %3194 = vmatprep.subr.bf16.mxu0 0
        %3195 = vmatpush1.bf16.msra.mxu0 0
        %3196 = vmatprep.subr.bf16.mxu0 0
        %3197 = vmatpush1.bf16.msra.mxu0 0
        %3198 = vmatprep.subr.bf16.mxu0 0
        %3199 = vmatpush1.bf16.msra.mxu0 0
        %3200 = vmatprep.subr.bf16.mxu0 0
        %3201 = vmatpush1.bf16.msra.mxu0 0
        %3202 = vmatprep.subr.bf16.mxu0 0
        %3203 = vmatpush1.bf16.msra.mxu0 0
        %3204 = vmatprep.mubr.bf16.mxu0 0
        %3205 = vmatmul.mubr.bf16.gmra.mrb[0].mxu0 %v3137
        %v3206 = vpop.f32.mrb[0].mxu0
        %v3207 = vadd.f32 %v3120, %v3206
        %v3208 = vpop.f32.mrb[0].mxu0
        %v3209 = vpop.f32.mrb[0].mxu0
        %v3210 = vadd.f32 %v3120, %v3209
        %v3211 = vpop.f32.mrb[0].mxu0
        %3212 = vmatprep.mubr.bf16.mxu0 0
        %3213 = vmatmul.mubr.bf16.gmra.mrb[0].mxu0 %v3139
        %v3214 = vpop.f32.mrb[0].mxu0
        %v3215 = vadd.f32 %v3120, %v3214
        %v3216 = vpop.f32.mrb[0].mxu0
        %v3217 = vpop.f32.mrb[0].mxu0
        %v3218 = vadd.f32 %v3120, %v3217
        %v3219 = vpop.f32.mrb[0].mxu0
        %3220 = vmatprep.mubr.bf16.mxu0 0
        %3221 = vmatmul.mubr.bf16.gmra.mrb[0].mxu0 %v3141
        %v3222 = vpop.f32.mrb[0].mxu0
        %v3223 = vadd.f32 %v3120, %v3222
        %v3224 = vpop.f32.mrb[0].mxu0
        %v3225 = vpop.f32.mrb[0].mxu0
        %v3226 = vadd.f32 %v3120, %v3225
        %v3227 = vpop.f32.mrb[0].mxu0
        %3228 = vmatprep.mubr.bf16.mxu0 0
        %3229 = vmatmul.mubr.bf16.gmra.mrb[0].mxu0 %v3143
        %v3230 = vpop.f32.mrb[0].mxu0
        %v3231 = vadd.f32 %v3120, %v3230
        %v3232 = vpop.f32.mrb[0].mxu0
        %v3233 = vpop.f32.mrb[0].mxu0
        %v3234 = vadd.f32 %v3120, %v3233
        %v3235 = vpop.f32.mrb[0].mxu0
        %3236 = vmatprep.mubr.bf16.mxu0 0
        %3237 = vmatmul.mubr.bf16.gmra.mrb[0].mxu0 %v3145
        %v3238 = vpop.f32.mrb[0].mxu0
        %v3239 = vadd.f32 %v3120, %v3238
        %v3240 = vpop.f32.mrb[0].mxu0
        %v3241 = vpop.f32.mrb[0].mxu0
        %v3242 = vadd.f32 %v3120, %v3241
        %v3243 = vpop.f32.mrb[0].mxu0
        %3244 = vmatprep.mubr.bf16.mxu0 0
        %3245 = vmatmul.mubr.bf16.gmra.mrb[0].mxu0 %v3147
        %v3246 = vpop.f32.mrb[0].mxu0
        %v3247 = vadd.f32 %v3120, %v3246
        %v3248 = vpop.f32.mrb[0].mxu0
        %v3249 = vpop.f32.mrb[0].mxu0
        %v3250 = vadd.f32 %v3120, %v3249
        %v3251 = vpop.f32.mrb[0].mxu0
        %3252 = vmatprep.mubr.bf16.mxu0 0
        %3253 = vmatmul.mubr.bf16.gmra.mrb[0].mxu0 %v3149
        %v3254 = vpop.f32.mrb[0].mxu0
        %v3255 = vadd.f32 %v3120, %v3254
        %v3256 = vpop.f32.mrb[0].mxu0
        %v3257 = vpop.f32.mrb[0].mxu0
        %v3258 = vadd.f32 %v3120, %v3257
        %v3259 = vpop.f32.mrb[0].mxu0
        %3260 = vmatprep.mubr.bf16.mxu0 0
        %3261 = vmatmul.mubr.bf16.gmra.mrb[0].mxu0 %v3151
        %v3262 = vpop.f32.mrb[0].mxu0
        %v3263 = vadd.f32 %v3120, %v3262
        %v3264 = vpop.f32.mrb[0].mxu0
        %v3265 = vpop.f32.mrb[0].mxu0
        %v3266 = vadd.f32 %v3120, %v3265
        %v3267 = vpop.f32.mrb[0].mxu0
        %3268 = vmatprep.mubr.bf16.mxu0 0
        %3269 = vmatmul.mubr.bf16.gmra.mrb[0].mxu0 %v3153
        %v3270 = vpop.f32.mrb[0].mxu0
        %v3271 = vadd.f32 %v3120, %v3270
        %v3272 = vpop.f32.mrb[0].mxu0
        %v3273 = vpop.f32.mrb[0].mxu0
        %v3274 = vadd.f32 %v3120, %v3273
        %v3275 = vpop.f32.mrb[0].mxu0
        %3276 = vmatprep.mubr.bf16.mxu0 0
        %3277 = vmatmul.mubr.bf16.gmra.mrb[0].mxu0 %v3155
        %v3278 = vpop.f32.mrb[0].mxu0
        %v3279 = vadd.f32 %v3120, %v3278
        %v3280 = vpop.f32.mrb[0].mxu0
        %v3281 = vpop.f32.mrb[0].mxu0
        %v3282 = vadd.f32 %v3120, %v3281
        %v3283 = vpop.f32.mrb[0].mxu0
        %3284 = vmatprep.mubr.bf16.mxu0 0
        %3285 = vmatmul.mubr.bf16.gmra.mrb[0].mxu0 %v3157
        %v3286 = vpop.f32.mrb[0].mxu0
        %v3287 = vadd.f32 %v3120, %v3286
        %v3288 = vpop.f32.mrb[0].mxu0
        %v3289 = vpop.f32.mrb[0].mxu0
        %v3290 = vadd.f32 %v3120, %v3289
        %v3291 = vpop.f32.mrb[0].mxu0
        %3292 = vmatprep.mubr.bf16.mxu0 0
        %3293 = vmatmul.mubr.bf16.gmra.mrb[0].mxu0 %v3159
        %v3294 = vpop.f32.mrb[0].mxu0
        %v3295 = vadd.f32 %v3120, %v3294
        %v3296 = vpop.f32.mrb[0].mxu0
        %v3297 = vpop.f32.mrb[0].mxu0
        %v3298 = vadd.f32 %v3120, %v3297
        %v3299 = vpop.f32.mrb[0].mxu0
        %3300 = vmatprep.mubr.bf16.mxu0 0
        %3301 = vmatmul.mubr.bf16.gmra.mrb[0].mxu0 %v3161
        %v3302 = vpop.f32.mrb[0].mxu0
        %v3303 = vadd.f32 %v3120, %v3302
        %v3304 = vpop.f32.mrb[0].mxu0
        %v3305 = vpop.f32.mrb[0].mxu0
        %v3306 = vadd.f32 %v3120, %v3305
        %v3307 = vpop.f32.mrb[0].mxu0
        %3308 = vmatprep.mubr.bf16.mxu0 0
        %3309 = vmatmul.mubr.bf16.gmra.mrb[0].mxu0 %v3163
        %v3310 = vpop.f32.mrb[0].mxu0
        %v3311 = vadd.f32 %v3120, %v3310
        %v3312 = vpop.f32.mrb[0].mxu0
        %v3313 = vpop.f32.mrb[0].mxu0
        %v3314 = vadd.f32 %v3120, %v3313
        %v3315 = vpop.f32.mrb[0].mxu0
        %3316 = vmatprep.mubr.bf16.mxu0 0
        %3317 = vmatmul.mubr.bf16.gmra.mrb[0].mxu0 %v3165
        %v3318 = vpop.f32.mrb[0].mxu0
        %v3319 = vadd.f32 %v3120, %v3318
        %v3320 = vpop.f32.mrb[0].mxu0
        %v3321 = vpop.f32.mrb[0].mxu0
        %v3322 = vadd.f32 %v3120, %v3321
        %v3323 = vpop.f32.mrb[0].mxu0
        %3324 = vmatprep.mubr.bf16.mxu0 0
        %3325 = vmatmul.mubr.bf16.gmra.mrb[0].mxu0 %v3167
        %v3326 = vpop.f32.mrb[0].mxu0
        %v3327 = vadd.f32 %v3120, %v3326
        %v3328 = vpop.f32.mrb[0].mxu0
        %v3329 = vpop.f32.mrb[0].mxu0
        %v3330 = vadd.f32 %v3120, %v3329
        %v3331 = vpop.f32.mrb[0].mxu0
        %3332 = vdwg.mxu0
        %v3333 = vadd.f32 %v1822, %v1825
        %v3334 = vadd.f32 %v3333, %v1830
        %v3335 = vadd.f32 %v3334, %v1833
        %v3336 = vadd.f32 %v3335, %v1838
        %v3337 = vadd.f32 %v3336, %v1841
        %v3338 = vadd.f32 %v3337, %v1846
        %v3339 = vadd.f32 %v3338, %v1849
        %v3340 = vadd.f32 %v3339, %v1854
        %v3341 = vadd.f32 %v3340, %v1857
        %v3342 = vadd.f32 %v3341, %v1862
        %v3343 = vadd.f32 %v3342, %v1865
        %v3344 = vadd.f32 %v3343, %v1870
        %v3345 = vadd.f32 %v3344, %v1873
        %v3346 = vadd.f32 %v3345, %v1878
        %v3347 = vadd.f32 %v3346, %v1881
        %v3348 = vadd.f32 %v3347, %v1886
        %v3349 = vadd.f32 %v3348, %v1889
        %v3350 = vadd.f32 %v3349, %v1894
        %v3351 = vadd.f32 %v3350, %v1897
        %v3352 = vadd.f32 %v3351, %v1902
        %v3353 = vadd.f32 %v3352, %v1905
        %v3354 = vadd.f32 %v3353, %v1910
        %v3355 = vadd.f32 %v3354, %v1913
        %v3356 = vadd.f32 %v3355, %v1918
        %v3357 = vadd.f32 %v3356, %v1921
        %v3358 = vadd.f32 %v3357, %v1926
        %v3359 = vadd.f32 %v3358, %v1929
        %v3360 = vadd.f32 %v3359, %v1934
        %v3361 = vadd.f32 %v3360, %v1937
        %v3362 = vadd.f32 %v3361, %v1942
        %v3363 = vadd.f32 %v3362, %v1945
        %v3364 = vrot.slane %v3363, 4
        %v3365 = vadd.f32 %v3363, %v3364
        %v3366 = vrot.slane %v3365, 2
        %v3367 = vadd.f32 %v3365, %v3366
        %v3368 = vrot.slane %v3367, 1
        %v3369 = vadd.f32 %v3367, %v3368
        %v3370 = vmul.f32 %v3369, 0.00390625
        %v3371 = vsub.f32 %v1822, %v3370
        %v3372 = vsub.f32 %v1825, %v3370
        %v3373 = vsub.f32 %v1830, %v3370
        %v3374 = vsub.f32 %v1833, %v3370
        %v3375 = vsub.f32 %v1838, %v3370
        %v3376 = vsub.f32 %v1841, %v3370
        %v3377 = vsub.f32 %v1846, %v3370
        %v3378 = vsub.f32 %v1849, %v3370
        %v3379 = vsub.f32 %v1854, %v3370
        %v3380 = vsub.f32 %v1857, %v3370
        %v3381 = vsub.f32 %v1862, %v3370
        %v3382 = vsub.f32 %v1865, %v3370
        %v3383 = vsub.f32 %v1870, %v3370
        %v3384 = vsub.f32 %v1873, %v3370
        %v3385 = vsub.f32 %v1878, %v3370
        %v3386 = vsub.f32 %v1881, %v3370
        %v3387 = vsub.f32 %v1886, %v3370
        %v3388 = vsub.f32 %v1889, %v3370
        %v3389 = vsub.f32 %v1894, %v3370
        %v3390 = vsub.f32 %v1897, %v3370
        %v3391 = vsub.f32 %v1902, %v3370
        %v3392 = vsub.f32 %v1905, %v3370
        %v3393 = vsub.f32 %v1910, %v3370
        %v3394 = vsub.f32 %v1913, %v3370
        %v3395 = vsub.f32 %v1918, %v3370
        %v3396 = vsub.f32 %v1921, %v3370
        %v3397 = vsub.f32 %v1926, %v3370
        %v3398 = vsub.f32 %v1929, %v3370
        %v3399 = vsub.f32 %v1934, %v3370
        %v3400 = vsub.f32 %v1937, %v3370
        %v3401 = vsub.f32 %v1942, %v3370
        %v3402 = vsub.f32 %v1945, %v3370
        %v3403 = vmul.f32 %v3371, %v3371
        %v3404 = vmul.f32 %v3372, %v3372
        %v3405 = vmul.f32 %v3373, %v3373
        %v3406 = vmul.f32 %v3374, %v3374
        %v3407 = vmul.f32 %v3375, %v3375
        %v3408 = vmul.f32 %v3376, %v3376
        %v3409 = vmul.f32 %v3377, %v3377
        %v3410 = vmul.f32 %v3378, %v3378
        %v3411 = vmul.f32 %v3379, %v3379
        %v3412 = vmul.f32 %v3380, %v3380
        %v3413 = vmul.f32 %v3381, %v3381
        %v3414 = vmul.f32 %v3382, %v3382
        %v3415 = vmul.f32 %v3383, %v3383
        %v3416 = vmul.f32 %v3384, %v3384
        %v3417 = vmul.f32 %v3385, %v3385
        %v3418 = vmul.f32 %v3386, %v3386
        %v3419 = vmul.f32 %v3387, %v3387
        %v3420 = vmul.f32 %v3388, %v3388
        %v3421 = vmul.f32 %v3389, %v3389
        %v3422 = vmul.f32 %v3390, %v3390
        %v3423 = vmul.f32 %v3391, %v3391
        %v3424 = vmul.f32 %v3392, %v3392
        %v3425 = vmul.f32 %v3393, %v3393
        %v3426 = vmul.f32 %v3394, %v3394
        %v3427 = vmul.f32 %v3395, %v3395
        %v3428 = vmul.f32 %v3396, %v3396
        %v3429 = vmul.f32 %v3397, %v3397
        %v3430 = vmul.f32 %v3398, %v3398
        %v3431 = vmul.f32 %v3399, %v3399
        %v3432 = vmul.f32 %v3400, %v3400
        %v3433 = vmul.f32 %v3401, %v3401
        %v3434 = vmul.f32 %v3402, %v3402
        %v3435 = vadd.f32 %v3403, %v3404
        %v3436 = vadd.f32 %v3435, %v3405
        %v3437 = vadd.f32 %v3436, %v3406
        %v3438 = vadd.f32 %v3437, %v3407
        %v3439 = vadd.f32 %v3438, %v3408
        %v3440 = vadd.f32 %v3439, %v3409
        %v3441 = vadd.f32 %v3440, %v3410
        %v3442 = vadd.f32 %v3441, %v3411
        %v3443 = vadd.f32 %v3442, %v3412
        %v3444 = vadd.f32 %v3443, %v3413
        %v3445 = vadd.f32 %v3444, %v3414
        %v3446 = vadd.f32 %v3445, %v3415
        %v3447 = vadd.f32 %v3446, %v3416
        %v3448 = vadd.f32 %v3447, %v3417
        %v3449 = vadd.f32 %v3448, %v3418
        %v3450 = vadd.f32 %v3449, %v3419
        %v3451 = vadd.f32 %v3450, %v3420
        %v3452 = vadd.f32 %v3451, %v3421
        %v3453 = vadd.f32 %v3452, %v3422
        %v3454 = vadd.f32 %v3453, %v3423
        %v3455 = vadd.f32 %v3454, %v3424
        %v3456 = vadd.f32 %v3455, %v3425
        %v3457 = vadd.f32 %v3456, %v3426
        %v3458 = vadd.f32 %v3457, %v3427
        %v3459 = vadd.f32 %v3458, %v3428
        %v3460 = vadd.f32 %v3459, %v3429
        %v3461 = vadd.f32 %v3460, %v3430
        %v3462 = vadd.f32 %v3461, %v3431
        %v3463 = vadd.f32 %v3462, %v3432
        %v3464 = vadd.f32 %v3463, %v3433
        %v3465 = vadd.f32 %v3464, %v3434
        %v3466 = vrot.slane %v3465, 4
        %v3467 = vadd.f32 %v3465, %v3466
        %v3468 = vrot.slane %v3467, 2
        %v3469 = vadd.f32 %v3467, %v3468
        %v3470 = vrot.slane %v3469, 1
        %v3471 = vadd.f32 %v3469, %v3470
        %v3472 = vadd.f32 %v3207, %v3210
        %v3473 = vadd.f32 %v3472, %v3215
        %v3474 = vadd.f32 %v3473, %v3218
        %v3475 = vadd.f32 %v3474, %v3223
        %v3476 = vadd.f32 %v3475, %v3226
        %v3477 = vadd.f32 %v3476, %v3231
        %v3478 = vadd.f32 %v3477, %v3234
        %v3479 = vadd.f32 %v3478, %v3239
        %v3480 = vadd.f32 %v3479, %v3242
        %v3481 = vadd.f32 %v3480, %v3247
        %v3482 = vadd.f32 %v3481, %v3250
        %v3483 = vadd.f32 %v3482, %v3255
        %v3484 = vadd.f32 %v3483, %v3258
        %v3485 = vadd.f32 %v3484, %v3263
        %v3486 = vadd.f32 %v3485, %v3266
        %v3487 = vadd.f32 %v3486, %v3271
        %v3488 = vadd.f32 %v3487, %v3274
        %v3489 = vadd.f32 %v3488, %v3279
        %v3490 = vadd.f32 %v3489, %v3282
        %v3491 = vadd.f32 %v3490, %v3287
        %v3492 = vadd.f32 %v3491, %v3290
        %v3493 = vadd.f32 %v3492, %v3295
        %v3494 = vadd.f32 %v3493, %v3298
        %v3495 = vadd.f32 %v3494, %v3303
        %v3496 = vadd.f32 %v3495, %v3306
        %v3497 = vadd.f32 %v3496, %v3311
        %v3498 = vadd.f32 %v3497, %v3314
        %v3499 = vadd.f32 %v3498, %v3319
        %v3500 = vadd.f32 %v3499, %v3322
        %v3501 = vadd.f32 %v3500, %v3327
        %v3502 = vadd.f32 %v3501, %v3330
        %v3503 = vrot.slane %v3502, 4
        %v3504 = vadd.f32 %v3502, %v3503
        %v3505 = vrot.slane %v3504, 2
        %v3506 = vadd.f32 %v3504, %v3505
        %v3507 = vrot.slane %v3506, 1
        %v3508 = vadd.f32 %v3506, %v3507
        %v3509 = vmul.f32 %v3508, 0.00390625
        %v3510 = vsub.f32 %v3207, %v3509
        %v3511 = vsub.f32 %v3210, %v3509
        %v3512 = vsub.f32 %v3215, %v3509
        %v3513 = vsub.f32 %v3218, %v3509
        %v3514 = vsub.f32 %v3223, %v3509
        %v3515 = vsub.f32 %v3226, %v3509
        %v3516 = vsub.f32 %v3231, %v3509
        %v3517 = vsub.f32 %v3234, %v3509
        %v3518 = vsub.f32 %v3239, %v3509
        %v3519 = vsub.f32 %v3242, %v3509
        %v3520 = vsub.f32 %v3247, %v3509
        %v3521 = vsub.f32 %v3250, %v3509
        %v3522 = vsub.f32 %v3255, %v3509
        %v3523 = vsub.f32 %v3258, %v3509
        %v3524 = vsub.f32 %v3263, %v3509
        %v3525 = vsub.f32 %v3266, %v3509
        %v3526 = vsub.f32 %v3271, %v3509
        %v3527 = vsub.f32 %v3274, %v3509
        %v3528 = vsub.f32 %v3279, %v3509
        %v3529 = vsub.f32 %v3282, %v3509
        %v3530 = vsub.f32 %v3287, %v3509
        %v3531 = vsub.f32 %v3290, %v3509
        %v3532 = vsub.f32 %v3295, %v3509
        %v3533 = vsub.f32 %v3298, %v3509
        %v3534 = vsub.f32 %v3303, %v3509
        %v3535 = vsub.f32 %v3306, %v3509
        %v3536 = vsub.f32 %v3311, %v3509
        %v3537 = vsub.f32 %v3314, %v3509
        %v3538 = vsub.f32 %v3319, %v3509
        %v3539 = vsub.f32 %v3322, %v3509
        %v3540 = vsub.f32 %v3327, %v3509
        %v3541 = vsub.f32 %v3330, %v3509
        %v3542 = vmul.f32 %v3510, %v3510
        %v3543 = vmul.f32 %v3511, %v3511
        %v3544 = vmul.f32 %v3512, %v3512
        %v3545 = vmul.f32 %v3513, %v3513
        %v3546 = vmul.f32 %v3514, %v3514
        %v3547 = vmul.f32 %v3515, %v3515
        %v3548 = vmul.f32 %v3516, %v3516
        %v3549 = vmul.f32 %v3517, %v3517
        %v3550 = vmul.f32 %v3518, %v3518
        %v3551 = vmul.f32 %v3519, %v3519
        %v3552 = vmul.f32 %v3520, %v3520
        %v3553 = vmul.f32 %v3521, %v3521
        %v3554 = vmul.f32 %v3522, %v3522
        %v3555 = vmul.f32 %v3523, %v3523
        %v3556 = vmul.f32 %v3524, %v3524
        %v3557 = vmul.f32 %v3525, %v3525
        %v3558 = vmul.f32 %v3526, %v3526
        %v3559 = vmul.f32 %v3527, %v3527
        %v3560 = vmul.f32 %v3528, %v3528
        %v3561 = vmul.f32 %v3529, %v3529
        %v3562 = vmul.f32 %v3530, %v3530
        %v3563 = vmul.f32 %v3531, %v3531
        %v3564 = vmul.f32 %v3532, %v3532
        %v3565 = vmul.f32 %v3533, %v3533
        %v3566 = vmul.f32 %v3534, %v3534
        %v3567 = vmul.f32 %v3535, %v3535
        %v3568 = vmul.f32 %v3536, %v3536
        %v3569 = vmul.f32 %v3537, %v3537
        %v3570 = vmul.f32 %v3538, %v3538
        %v3571 = vmul.f32 %v3539, %v3539
        %v3572 = vmul.f32 %v3540, %v3540
        %v3573 = vmul.f32 %v3541, %v3541
        %v3574 = vadd.f32 %v3542, %v3543
        %v3575 = vadd.f32 %v3574, %v3544
        %v3576 = vadd.f32 %v3575, %v3545
        %v3577 = vadd.f32 %v3576, %v3546
        %v3578 = vadd.f32 %v3577, %v3547
        %v3579 = vadd.f32 %v3578, %v3548
        %v3580 = vadd.f32 %v3579, %v3549
        %v3581 = vadd.f32 %v3580, %v3550
        %v3582 = vadd.f32 %v3581, %v3551
        %v3583 = vadd.f32 %v3582, %v3552
        %v3584 = vadd.f32 %v3583, %v3553
        %v3585 = vadd.f32 %v3584, %v3554
        %v3586 = vadd.f32 %v3585, %v3555
        %v3587 = vadd.f32 %v3586, %v3556
        %v3588 = vadd.f32 %v3587, %v3557
        %v3589 = vadd.f32 %v3588, %v3558
        %v3590 = vadd.f32 %v3589, %v3559
        %v3591 = vadd.f32 %v3590, %v3560
        %v3592 = vadd.f32 %v3591, %v3561
        %v3593 = vadd.f32 %v3592, %v3562
        %v3594 = vadd.f32 %v3593, %v3563
        %v3595 = vadd.f32 %v3594, %v3564
        %v3596 = vadd.f32 %v3595, %v3565
        %v3597 = vadd.f32 %v3596, %v3566
        %v3598 = vadd.f32 %v3597, %v3567
        %v3599 = vadd.f32 %v3598, %v3568
        %v3600 = vadd.f32 %v3599, %v3569
        %v3601 = vadd.f32 %v3600, %v3570
        %v3602 = vadd.f32 %v3601, %v3571
        %v3603 = vadd.f32 %v3602, %v3572
        %v3604 = vadd.f32 %v3603, %v3573
        %v3605 = vrot.slane %v3604, 4
        %v3606 = vadd.f32 %v3604, %v3605
        %v3607 = vrot.slane %v3606, 2
        %v3608 = vadd.f32 %v3606, %v3607
        %v3609 = vrot.slane %v3608, 1
        %v3610 = vadd.f32 %v3608, %v3609
        %vm3611 = vcmask 1040384
        %v3612 = vsel %vm3611, %v3370, %v3471
        %v3613 = vsel %vm1783, %v3612, %v3509
        %vm3614 = vcmask 1042432
        %v3615 = vsel %vm3614, %v3613, %v3610
        %3616 = vst [vmem:[%s408] sm:$0xf] %v3615
        %3617 = vst [vmem:[%s394] sm:$0xff] %v1822
        %3618 = vst [vmem:[%s394 + $0x8] sm:$0xff] %v1825
        %3619 = vst [vmem:[%s394 + $0x10] sm:$0xff] %v1830
        %3620 = vst [vmem:[%s394 + $0x18] sm:$0xff] %v1833
        %3621 = vst [vmem:[%s394 + $0x20] sm:$0xff] %v1838
        %3622 = vst [vmem:[%s394 + $0x28] sm:$0xff] %v1841
        %3623 = vst [vmem:[%s394 + $0x30] sm:$0xff] %v1846
        %3624 = vst [vmem:[%s394 + $0x38] sm:$0xff] %v1849
        %3625 = vst [vmem:[%s394 + $0x40] sm:$0xff] %v1854
        %3626 = vst [vmem:[%s394 + $0x48] sm:$0xff] %v1857
        %3627 = vst [vmem:[%s394 + $0x50] sm:$0xff] %v1862
        %3628 = vst [vmem:[%s394 + $0x58] sm:$0xff] %v1865
        %3629 = vst [vmem:[%s394 + $0x60] sm:$0xff] %v1870
        %3630 = vst [vmem:[%s394 + $0x68] sm:$0xff] %v1873
        %3631 = vst [vmem:[%s394 + $0x70] sm:$0xff] %v1878
        %3632 = vst [vmem:[%s394 + $0x78] sm:$0xff] %v1881
        %3633 = vst [vmem:[%s394 + $0x80] sm:$0xff] %v1886
        %3634 = vst [vmem:[%s394 + $0x88] sm:$0xff] %v1889
        %3635 = vst [vmem:[%s394 + $0x90] sm:$0xff] %v1894
        %3636 = vst [vmem:[%s394 + $0x98] sm:$0xff] %v1897
        %3637 = vst [vmem:[%s394 + $0xa0] sm:$0xff] %v1902
        %3638 = vst [vmem:[%s394 + $0xa8] sm:$0xff] %v1905
        %3639 = vst [vmem:[%s394 + $0xb0] sm:$0xff] %v1910
        %3640 = vst [vmem:[%s394 + $0xb8] sm:$0xff] %v1913
        %3641 = vst [vmem:[%s394 + $0xc0] sm:$0xff] %v1918
        %3642 = vst [vmem:[%s394 + $0xc8] sm:$0xff] %v1921
        %3643 = vst [vmem:[%s394 + $0xd0] sm:$0xff] %v1926
        %3644 = vst [vmem:[%s394 + $0xd8] sm:$0xff] %v1929
        %3645 = vst [vmem:[%s394 + $0xe0] sm:$0xff] %v1934
        %3646 = vst [vmem:[%s394 + $0xe8] sm:$0xff] %v1937
        %3647 = vst [vmem:[%s394 + $0xf0] sm:$0xff] %v1942
        %3648 = vst [vmem:[%s394 + $0xf8] sm:$0xff] %v1945
        %3649 = vst [vmem:[%s401] sm:$0xff] %v3207
        %3650 = vst [vmem:[%s401 + $0x8] sm:$0xff] %v3210
        %3651 = vst [vmem:[%s401 + $0x10] sm:$0xff] %v3215
        %3652 = vst [vmem:[%s401 + $0x18] sm:$0xff] %v3218
        %3653 = vst [vmem:[%s401 + $0x20] sm:$0xff] %v3223
        %3654 = vst [vmem:[%s401 + $0x28] sm:$0xff] %v3226
        %3655 = vst [vmem:[%s401 + $0x30] sm:$0xff] %v3231
        %3656 = vst [vmem:[%s401 + $0x38] sm:$0xff] %v3234
        %3657 = vst [vmem:[%s401 + $0x40] sm:$0xff] %v3239
        %3658 = vst [vmem:[%s401 + $0x48] sm:$0xff] %v3242
        %3659 = vst [vmem:[%s401 + $0x50] sm:$0xff] %v3247
        %3660 = vst [vmem:[%s401 + $0x58] sm:$0xff] %v3250
        %3661 = vst [vmem:[%s401 + $0x60] sm:$0xff] %v3255
        %3662 = vst [vmem:[%s401 + $0x68] sm:$0xff] %v3258
        %3663 = vst [vmem:[%s401 + $0x70] sm:$0xff] %v3263
        %3664 = vst [vmem:[%s401 + $0x78] sm:$0xff] %v3266
        %3665 = vst [vmem:[%s401 + $0x80] sm:$0xff] %v3271
        %3666 = vst [vmem:[%s401 + $0x88] sm:$0xff] %v3274
        %3667 = vst [vmem:[%s401 + $0x90] sm:$0xff] %v3279
        %3668 = vst [vmem:[%s401 + $0x98] sm:$0xff] %v3282
        %3669 = vst [vmem:[%s401 + $0xa0] sm:$0xff] %v3287
        %3670 = vst [vmem:[%s401 + $0xa8] sm:$0xff] %v3290
        %3671 = vst [vmem:[%s401 + $0xb0] sm:$0xff] %v3295
        %3672 = vst [vmem:[%s401 + $0xb8] sm:$0xff] %v3298
        %3673 = vst [vmem:[%s401 + $0xc0] sm:$0xff] %v3303
        %3674 = vst [vmem:[%s401 + $0xc8] sm:$0xff] %v3306
        %3675 = vst [vmem:[%s401 + $0xd0] sm:$0xff] %v3311
        %3676 = vst [vmem:[%s401 + $0xd8] sm:$0xff] %v3314
        %3677 = vst [vmem:[%s401 + $0xe0] sm:$0xff] %v3319
        %3678 = vst [vmem:[%s401 + $0xe8] sm:$0xff] %v3322
        %3679 = vst [vmem:[%s401 + $0xf0] sm:$0xff] %v3327
        %3680 = vst [vmem:[%s401 + $0xf8] sm:$0xff] %v3330
        %s3681 = sand.u32 %s171, 1
        %s3682 = scalar_lea.sflag [#allocation5], %s3681
        %s3683 = sand.u32 %s171, 1
        %s3684 = smul.addr %s3683, 256
        %s3685 = scalar_lea.vmem [#allocation14], %s3684
        %s3686 = sand.u32 %s32, 1
        %s3687 = scalar_lea.sflag [#allocation16], %s3686
        %s3688 = sand.u32 %s197, 1
        %s3689 = smul.addr %s3688, 256
        %s3690 = scalar_lea.vmem [#allocation15], %s3689
        %s3691 = sand.u32 %s32, 1
        %s3692 = scalar_lea.sflag [#allocation16], %s3691
        %s3693 = sand.u32 %s223, 1
        %s3694 = smul.addr %s3693, 4
        %s3695 = scalar_lea.vmem [#allocation17], %s3694
        // Predicated region
        $region69: #{tpu_custom_call.1} parent=43 // pred_check
          %p3696 = pneg %p181
        $region70: #{tpu_custom_call.1} parent=43 // pred_check_branch
          %3698 = sbr.rel (%p3696) target = $region72
        $region71: #{tpu_custom_call.1} parent=43 // pred_region
          %s3700 = ssub.s32 4096, 4096
          %3701 = vsyncadd %s3682, %s3700
          %s3702 = smul.addr %s32, 32
          %s3703 = smul.addr %s3702, 128
          %s3704 = scalar_lea.hbm %s6, %s3703
          %s3705 = sshll.u32 %s3685, 4
          %s3706 = int_to_ptr.vmem [resolvable:$true] %s3705
          %3711 = dma.vmem_to_hbm [thread:$0]  %s3706, 4096, %s3704, %s3682, 128, 128, 8
        $region72: #{tpu_custom_call.1} parent=43 // pred_fallthru
          _
        // Predicated region
        $region73: #{tpu_custom_call.1} parent=43 // pred_check
          %p3712 = pneg %p207
        $region74: #{tpu_custom_call.1} parent=43 // pred_check_branch
          %3714 = sbr.rel (%p3712) target = $region76
        $region75: #{tpu_custom_call.1} parent=43 // pred_region
          %s3716 = ssub.s32 4096, 4096
          %3717 = vsyncadd %s3687, %s3716
          %s3718 = smul.addr %s32, 32
          %s3719 = smul.addr %s3718, 128
          %s3720 = scalar_lea.hbm %s7, %s3719
          %s3721 = sshll.u32 %s3690, 4
          %s3722 = int_to_ptr.vmem [resolvable:$true] %s3721
          %3727 = dma.vmem_to_hbm [thread:$0]  %s3722, 4096, %s3720, %s3687, 128, 128, 8
        $region76: #{tpu_custom_call.1} parent=43 // pred_fallthru
          _
        // Predicated region
        $region77: #{tpu_custom_call.1} parent=43 // pred_check
          %p3728 = pneg %p233
        $region78: #{tpu_custom_call.1} parent=43 // pred_check_branch
          %3730 = sbr.rel (%p3728) target = $region80
        $region79: #{tpu_custom_call.1} parent=43 // pred_region
          %s3732 = ssub.s32 64, 64
          %3733 = vsyncadd %s3692, %s3732
          %s3734 = smul.addr %s32, 64
          %s3735 = scalar_lea.hbm %s8, %s3734
          %s3737 = sshll.u32 %s3695, 4
          %s3738 = int_to_ptr.vmem [resolvable:$true] %s3737
          %3740 = dma.vmem_to_hbm [thread:$0]  %s3738, 64, %s3735, %s3692
        $region80: #{tpu_custom_call.1} parent=43 // pred_fallthru
          _
      $region44: #{tpu_custom_call.1} parent=5 // pred_fallthru
        _
      %p3741 = scmp.le.s32.totalorder 2, %s27
      // Predicated region
      $region81: #{tpu_custom_call.1} parent=5 // pred_check
        %p3742 = pneg %p3741
      $region82: #{tpu_custom_call.1} parent=5 // pred_check_branch
        %3744 = sbr.rel (%p3742) target = $region84
      $region83: #{tpu_custom_call.1} parent=5 // pred_region
        %s3745 = ssub.s32 %s27, 2
        // Predicated region
        $region85: #{tpu_custom_call.1} parent=83 // pred_check
          %p3746 = pneg %p187
        $region86: #{tpu_custom_call.1} parent=83 // pred_check_branch
          %3748 = sbr.rel (%p3746) target = $region88
        $region87: #{tpu_custom_call.1} parent=83 // pred_region
          %s3749 = sand.u32 %s172, 1
          %s3750 = scalar_lea.sflag [#allocation5], %s3749
          %s3751 = sand.u32 %s172, 1
          %s3752 = smul.addr %s3751, 256
          %s3753 = scalar_lea.vmem [#allocation14], %s3752
          %3754 = dma.done %s3750, 4096
        $region88: #{tpu_custom_call.1} parent=83 // pred_fallthru
          _
        // Predicated region
        $region89: #{tpu_custom_call.1} parent=83 // pred_check
          %p3755 = pneg %p213
        $region90: #{tpu_custom_call.1} parent=83 // pred_check_branch
          %3757 = sbr.rel (%p3755) target = $region92
        $region91: #{tpu_custom_call.1} parent=83 // pred_region
          %s3758 = sand.u32 %s33, 1
          %s3759 = scalar_lea.sflag [#allocation16], %s3758
          %s3760 = sand.u32 %s198, 1
          %s3761 = smul.addr %s3760, 256
          %s3762 = scalar_lea.vmem [#allocation15], %s3761
          %3763 = dma.done %s3759, 4096
        $region92: #{tpu_custom_call.1} parent=83 // pred_fallthru
          _
        // Predicated region
        $region93: #{tpu_custom_call.1} parent=83 // pred_check
          %p3764 = pneg %p239
        $region94: #{tpu_custom_call.1} parent=83 // pred_check_branch
          %3766 = sbr.rel (%p3764) target = $region96
        $region95: #{tpu_custom_call.1} parent=83 // pred_region
          %s3767 = sand.u32 %s33, 1
          %s3768 = scalar_lea.sflag [#allocation16], %s3767
          %s3769 = sand.u32 %s224, 1
          %s3770 = smul.addr %s3769, 4
          %s3771 = scalar_lea.vmem [#allocation17], %s3770
          %3772 = dma.done %s3768, 64
        $region96: #{tpu_custom_call.1} parent=83 // pred_fallthru
          _
      $region84: #{tpu_custom_call.1} parent=5 // pred_fallthru
        _
    $region6: #{tpu_custom_call.1} parent=1 // loop_footer
      %s31 = sadd.s32 1, %s27
    $region7: #{tpu_custom_call.1} parent=1 // loop_footer_branch
      %26 = sbr.rel target = $region3
    $region8: #{tpu_custom_call.1} parent=1 // loop_exit
      _
    %3773 = vsyncpa [#allocation4], 1
    %s3774 = scalar_lea.sflag [#allocation4], 1
    %3775 = vsyncpa %s3774, 1
    %3776 = vsyncpa [#allocation7], 1
    %3777 = vsyncpa [#allocation10], 1
    %3778 = vsyncpa [#allocation13], 1
    %3779 = vsyncpa [#allocation5], 1
    %s3780 = scalar_lea.sflag [#allocation5], 1
    %3781 = vsyncpa %s3780, 1
    %3782 = vsyncpa [#allocation16], 1
    %s3783 = scalar_lea.sflag [#allocation16], 1
    %3784 = vsyncpa %s3783, 1

</llo_original>
